<compile_context>
chip_gen: v7x
topology: tpu7x:2x2x1
jax: 0.10.0
libtpu: 0.0.40
codegen_flags: <defaults>
</compile_context>

<pallas_src>
import functools
import math

import numpy as np

import jax
import jax.numpy as jnp
from jax.experimental import pallas as pl
from jax.experimental.pallas import tpu as pltpu


# ----------------------------------------------------------------------------
# Encoder configuration: (type, activation, in_ch, out_ch, kernel, padding, stride)
# (mirrors `config.encoder` consumed by Encoder.__init__)
# ----------------------------------------------------------------------------
ENCODER_CONFIG = [
    ("conv",     "leaky", 2,  8,  3, 1, 1),
    ("convlstm", None,    8,  8,  3, 1, 1),
    ("conv",     "leaky", 8,  16, 3, 1, 2),
    ("convlstm", None,    16, 16, 3, 1, 1),
]

BN_EPS = 1e-5
LEAKY_SLOPE = 0.01          # nn.LeakyReLU default
LANE = 128
MAX_TILE_N = 1024           # lane tile for the big x-projection matmul


def _round_up(x, m):
    return (x + m - 1) // m * m


# ----------------------------------------------------------------------------
# JAX glue: channels-first im2col (pixels on lanes)
# TODO(synk): build im2col patches in-kernel (roll+mask DMA) to avoid the 9x
#             HBM expansion; left as XLA glue here.
# ----------------------------------------------------------------------------
def _im2col_cf(x_cf, k, pad, stride):
    """x: (C, F, H, W) -> (k*k*C, F*Ho*Wo); rows ordered (kh, kw, c)."""
    C, F, H, W = x_cf.shape
    xp = jnp.pad(x_cf, ((0, 0), (0, 0), (pad, pad), (pad, pad)))
    Ho = (H + 2 * pad - k) // stride + 1
    Wo = (W + 2 * pad - k) // stride + 1
    taps = []
    for kh in range(k):
        for kw in range(k):
            taps.append(xp[:, :, kh:kh + stride * Ho:stride, kw:kw + stride * Wo:stride])
    pat = jnp.concatenate(taps, axis=0)                 # (k*k*C, F, Ho, Wo)
    return pat.reshape(k * k * C, F * Ho * Wo), Ho, Wo


def _im2col_lstm(x_csbhw, k, pad, npad):
    """x: (C, S, B, H, W), stride 1 / same padding -> (k*k*C, S*npad) bf16.

    Columns are (timestep, pixel)-ordered; the pixel axis is zero-padded to
    `npad` (multiple of 128) so downstream stores are lane-dense.
    """
    C, S, B, H, W = x_csbhw.shape
    npix = B * H * W
    xp = jnp.pad(x_csbhw, ((0, 0), (0, 0), (0, 0), (pad, pad), (pad, pad)))
    taps = []
    for kh in range(k):
        for kw in range(k):
            taps.append(xp[:, :, :, kh:kh + H, kw:kw + W].reshape(C, S, npix))
    pat = jnp.concatenate(taps, axis=0)                 # (k*k*C, S, npix), rows (kh,kw,c)
    if npad > npix:
        pat = jnp.pad(pat, ((0, 0), (0, 0), (0, npad - npix)))
    return pat.reshape(k * k * C, S * npad).astype(jnp.bfloat16)


# ----------------------------------------------------------------------------
# Kernel 1 (fused): conv matmul (bf16 -> f32) + BatchNorm (training-mode batch
# stats, mean-subtracted variance) + Leaky/ReLU.  z never leaves VMEM.
# ----------------------------------------------------------------------------
def _conv_bn_act_kernel(p_ref, w_ref, gamma_ref, beta_ref, y_ref, *, m_valid, slope):
    z = jnp.dot(w_ref[...], p_ref[...], preferred_element_type=jnp.float32)  # (Cout, Mp)
    inv_m = 1.0 / m_valid
    mean = jnp.sum(z, axis=1, keepdims=True) * inv_m           # pad cols are exact zeros
    if m_valid != z.shape[1]:
        col = jax.lax.broadcasted_iota(jnp.int32, z.shape, 1)
        centered = (z - mean) * (col < m_valid).astype(jnp.float32)
    else:
        centered = z - mean
    var = jnp.sum(centered * centered, axis=1, keepdims=True) * inv_m
    scale = gamma_ref[...] * jax.lax.rsqrt(var + BN_EPS)
    zn = centered * scale + beta_ref[...]
    y_ref[...] = jnp.where(zn >= 0, zn, slope * zn)


def conv_bn_act(x_cf, w, gamma, beta, k, pad, stride, activation):
    """x_cf: (Cin, F, H, W) -> (Cout, F, Ho, Wo); Conv2d(bias=False)+BN(train)+act."""
    Cin, F, H, W = x_cf.shape
    Cout = w.shape[0]
    patches, Ho, Wo = _im2col_cf(x_cf, k, pad, stride)          # (K, M) f32
    K, M = patches.shape
    Mp = _round_up(M, LANE)
    patches = jnp.pad(patches, ((0, 0), (0, Mp - M))).astype(jnp.bfloat16)
    wmat = w.transpose(0, 2, 3, 1).reshape(Cout, K).astype(jnp.bfloat16)
    slope = {"leaky": LEAKY_SLOPE, "relu": 0.0}.get(activation, 1.0)

    y = pl.pallas_call(
        functools.partial(_conv_bn_act_kernel, m_valid=M, slope=slope),
        out_shape=jax.ShapeDtypeStruct((Cout, Mp), jnp.float32),
        grid_spec=pltpu.PrefetchScalarGridSpec(
            num_scalar_prefetch=0, grid=(1,),
            in_specs=[pl.BlockSpec((K, Mp), lambda i: (0, 0)),
                      pl.BlockSpec((Cout, K), lambda i: (0, 0)),
                      pl.BlockSpec((Cout, 1), lambda i: (0, 0)),
                      pl.BlockSpec((Cout, 1), lambda i: (0, 0))],
            out_specs=pl.BlockSpec((Cout, Mp), lambda i: (0, 0))),
        compiler_params=pltpu.CompilerParams(dimension_semantics=("arbitrary",)),
    )(patches, wmat, gamma.reshape(Cout, 1), beta.reshape(Cout, 1))

    return y[:, :M].reshape(Cout, F, Ho, Wo)


# ----------------------------------------------------------------------------
# Kernel 2: ConvLSTM x-projection for ALL timesteps as one lane-dense matmul
#           (S folded into the lane axis), bf16 output.
# ----------------------------------------------------------------------------
def _xproj_kernel(p_ref, w_ref, o_ref):
    o_ref[...] = jnp.dot(w_ref[...], p_ref[...],
                         preferred_element_type=jnp.float32).astype(o_ref.dtype)


def lstm_x_projection(patches, wx):
    """patches: (Kx, S*Npad) bf16, wx: (G, Kx) bf16 -> (G, S*Npad) bf16."""
    Kx, SN = patches.shape
    G = wx.shape[0]
    tile = LANE * math.gcd(SN // LANE, max(1, MAX_TILE_N // LANE))
    return pl.pallas_call(
        _xproj_kernel,
        out_shape=jax.ShapeDtypeStruct((G, SN), jnp.bfloat16),
        grid_spec=pltpu.PrefetchScalarGridSpec(
            num_scalar_prefetch=0, grid=(SN // tile,),
            in_specs=[pl.BlockSpec((Kx, tile), lambda j: (0, j)),
                      pl.BlockSpec((G, Kx), lambda j: (0, 0))],
            out_specs=pl.BlockSpec((G, tile), lambda j: (0, j))),
        compiler_params=pltpu.CompilerParams(dimension_semantics=("parallel",)),
    )(patches, wx)


# ----------------------------------------------------------------------------
# Kernel 3: fused recurrent ConvLSTM loop, grid=(S,), h/c resident in VMEM.
#   conv over h = 9 lane-rolls * zero-pad mask stacked along sublanes and fed
#   to ONE (G, 9*hid) @ (9*hid, Npad) matmul per timestep.
# ----------------------------------------------------------------------------
def _lane_shift(x, shift, n):
    """out[:, q] = x[:, (q - shift) % n]  (static shift)."""
    shift = shift % n
    if shift == 0:
        return x
    if n % LANE == 0:
        return pltpu.roll(x, shift, 1)            # XLU lane rotation (always hit: n padded)
    return jnp.concatenate([x[:, n - shift:], x[:, :n - shift]], axis=1)


def _convlstm_seq_kernel(xproj_ref, wh_ref, mask_ref, bias_ref, o_ref, h_scr, c_scr,
                         *, hid, npix, taps):
    @pl.when(pl.program_id(0) == 0)
    def _():
        h_scr[...] = jnp.zeros_like(h_scr)
        c_scr[...] = jnp.zeros_like(c_scr)

    # stack the 9 shifted+masked h taps along sublanes; single bf16 cast + one matmul
    h = h_scr[...]
    shifted = [_lane_shift(h, -d, npix) * mask_ref[t:t + 1, :]
               for t, d in enumerate(taps)]                       # 9 x (hid, npix) f32
    stacked = jnp.concatenate(shifted, axis=0).astype(jnp.bfloat16)  # (9*hid, npix)

    z = xproj_ref[...].astype(jnp.float32) + bias_ref[...]        # (4*hid, npix)
    z = z + jnp.dot(wh_ref[...], stacked, preferred_element_type=jnp.float32)

    # gate order [i | f | o | g] on the sublane (row) axis — no lane slicing
    i = jax.nn.sigmoid(z[0 * hid:1 * hid])
    f = jax.nn.sigmoid(z[1 * hid:2 * hid])
    o = jax.nn.sigmoid(z[2 * hid:3 * hid])
    g = jnp.tanh(z[3 * hid:4 * hid])
    c_next = f * c_scr[...] + i * g
    h_next = o * jnp.tanh(c_next)
    c_scr[...] = c_next
    h_scr[...] = h_next
    o_ref[0] = h_next


def convlstm_layer(x_cs, w, bias, k, pad, stride):
    """x_cs: (Cin, S, B, H, W) -> h_seq (S, hid, B*H*W).  Single-layer ConvLSTM."""
    assert stride == 1 and 2 * pad == k - 1, "ConvLSTM recurrence needs 'same' conv"
    Cin, S, B, H, W = x_cs.shape
    hid = w.shape[0] // 4
    G = 4 * hid
    Npix = B * H * W
    Npad = _round_up(Npix, LANE)          # lane-dense pixel axis (padded cols are masked)

    # split conv weight into x- and h- parts (gate order [i|f|o|g] preserved).
    # wh is flattened tap-major / hidden-minor to match the stacked-tap operand.
    wx = w[:, :Cin].transpose(0, 2, 3, 1).reshape(G, k * k * Cin).astype(jnp.bfloat16)
    wh = w[:, Cin:].transpose(0, 2, 3, 1).reshape(G, k * k * hid).astype(jnp.bfloat16)

    # 1) non-recurrent x-projection for all timesteps: one lane-dense matmul
    patches = _im2col_lstm(x_cs, k, pad, Npad)          # (k*k*Cin, S*Npad) bf16
    xproj = lstm_x_projection(patches, wx)              # (G, S*Npad) bf16

    # 2) static tap offsets + zero-padding masks (also zero the padded lane columns)
    taps = []
    masks = np.zeros((k * k, Npad), np.float32)
    q = np.arange(Npix)
    ys = (q // W) % H
    xs = q % W
    for kh in range(k):
        for kw in range(k):
            dy, dx = kh - pad, kw - pad
            taps.append(dy * W + dx)
            ok = (ys + dy >= 0) & (ys + dy < H) & (xs + dx >= 0) & (xs + dx < W)
            masks[kh * k + kw, :Npix] = ok.astype(np.float32)
    masks = jnp.asarray(masks)

    # 3) fused recurrent loop: grid=(S,), h/c live in VMEM scratch across steps
    kern = functools.partial(_convlstm_seq_kernel, hid=hid, npix=Npad, taps=tuple(taps))
    h_seq = pl.pallas_call(
        kern,
        out_shape=jax.ShapeDtypeStruct((S, hid, Npad), jnp.float32),
        grid_spec=pltpu.PrefetchScalarGridSpec(
            num_scalar_prefetch=0, grid=(S,),
            in_specs=[pl.BlockSpec((G, Npad), lambda t: (0, t)),       # xproj, step t
                      pl.BlockSpec((G, k * k * hid), lambda t: (0, 0)),
                      pl.BlockSpec((k * k, Npad), lambda t: (0, 0)),
                      pl.BlockSpec((G, 1), lambda t: (0, 0))],
            out_specs=pl.BlockSpec((1, hid, Npad), lambda t: (t, 0, 0)),
            scratch_shapes=[pltpu.VMEM((hid, Npad), jnp.float32),
                            pltpu.VMEM((hid, Npad), jnp.float32)]),
        compiler_params=pltpu.CompilerParams(dimension_semantics=("arbitrary",)),
    )(xproj, wh, masks, bias.reshape(G, 1).astype(jnp.float32))
    return h_seq[:, :, :Npix]


# ----------------------------------------------------------------------------
# Encoder forward (PyTorch Encoder.forward semantics; outputs are NCHW)
# ----------------------------------------------------------------------------
def encoder_forward(x, params):
    """x: (B, S, C, H, W) float32. Returns [x, convlstm_out_1, convlstm_out_2, ...]."""
    B, S = x.shape[0], x.shape[1]
    outputs = [x]
    cur = x.transpose(2, 1, 0, 3, 4)              # internal layout (C, S, B, H, W)
    for (typ, act, in_ch, out_ch, k, pad, stride), p in zip(ENCODER_CONFIG, params):
        C, _, _, H, W = cur.shape
        if typ == "conv":
            y = conv_bn_act(cur.reshape(C, S * B, H, W), p["w"], p["gamma"], p["beta"],
                            k, pad, stride, act)
            Cout, _, Ho, Wo = y.shape
            cur = y.reshape(Cout, S, B, Ho, Wo)
        else:  # convlstm (num_layers=1, batch_first=True, return_all_layers=False)
            hid = out_ch
            h_seq = convlstm_layer(cur, p["w"], p["b"], k, pad, stride)  # (S, hid, B*H*W)
            h_sbhw = h_seq.reshape(S, hid, B, H, W)
            outputs.append(h_sbhw.transpose(2, 0, 1, 3, 4))              # (B, S, hid, H, W)
            cur = h_sbhw.transpose(1, 0, 2, 3, 4)                        # (hid, S, B, H, W)
    return outputs


# ----------------------------------------------------------------------------
# Deterministic parameter init (synthetic; shapes follow the PyTorch module)
# ----------------------------------------------------------------------------
def init_params(key):
    params = []
    for (typ, act, in_ch, out_ch, k, pad, stride) in ENCODER_CONFIG:
        if typ == "conv":
            key, kw = jax.random.split(key)
            params.append(dict(
                w=jax.random.normal(kw, (out_ch, in_ch, k, k), jnp.float32) * 0.1,
                gamma=jnp.ones((out_ch,), jnp.float32),
                beta=jnp.zeros((out_ch,), jnp.float32),
            ))
        else:  # convlstm: conv over concat(x, h) -> 4*hidden channels, with bias
            key, kw, kb = jax.random.split(key, 3)
            params.append(dict(
                w=jax.random.normal(kw, (4 * out_ch, in_ch + out_ch, k, k), jnp.float32) * 0.1,
                b=jax.random.normal(kb, (4 * out_ch,), jnp.float32) * 0.1,
            ))
    return params


if __name__ == "__main__":
    key = jax.random.PRNGKey(0)
    kx, kp = jax.random.split(key)

    B, S, C, H, W = 2, 4, 2, 8, 8
    x = jax.random.normal(kx, (B, S, C, H, W), jnp.float32)
    params = init_params(kp)

    outs = jax.jit(encoder_forward)(x, params)
    for o in outs:
        jax.block_until_ready(o)

    # Expected: [input (2,4,2,8,8), lstm1 (2,4,8,8,8), lstm2 (2,4,16,4,4)]
    assert outs[0].shape == (B, S, C, H, W)
    assert outs[1].shape == (B, S, 8, 8, 8)
    assert outs[2].shape == (B, S, 16, 4, 4)
    assert all(bool(jnp.all(jnp.isfinite(o))) for o in outs)
    print("KERNEL_OK")
</pallas_src>

<mosaic_0001>
module attributes {stable_mosaic.version = 11 : i64} {
  func.func @_conv_bn_act_kernel(%arg0: i32, %arg1: memref<18x512xbf16, #tpu.memory_space<vmem>>, %arg2: memref<8x18xbf16, #tpu.memory_space<vmem>>, %arg3: memref<8x1xf32, #tpu.memory_space<vmem>>, %arg4: memref<8x1xf32, #tpu.memory_space<vmem>>, %arg5: memref<8x512xf32, #tpu.memory_space<vmem>>) attributes {dimension_semantics = [#tpu.dimension_semantics<arbitrary>], iteration_bounds = array<i64: 1>, scalar_prefetch = 0 : i64, scratch_operands = 0 : i64, tpu.core_type = #tpu.core_type<tc>, window_params = [{pipeline_mode = #tpu.pipeline_mode<synchronous>, transform_indices = @transform_0, window_bounds = array<i64: 18, 512>}, {pipeline_mode = #tpu.pipeline_mode<synchronous>, transform_indices = @transform_1, window_bounds = array<i64: 8, 18>}, {pipeline_mode = #tpu.pipeline_mode<synchronous>, transform_indices = @transform_2, window_bounds = array<i64: 8, 1>}, {pipeline_mode = #tpu.pipeline_mode<synchronous>, transform_indices = @transform_3, window_bounds = array<i64: 8, 1>}, {pipeline_mode = #tpu.pipeline_mode<synchronous>, transform_indices = @transform_4, window_bounds = array<i64: 8, 512>}]} {
    %c0 = arith.constant 0 : index
    %c0_0 = arith.constant 0 : index
    %0 = vector.load %arg2[%c0, %c0_0] : memref<8x18xbf16, #tpu.memory_space<vmem>>, vector<8x18xbf16>
    %c0_1 = arith.constant 0 : index
    %c0_2 = arith.constant 0 : index
    %1 = vector.load %arg1[%c0_1, %c0_2] : memref<18x512xbf16, #tpu.memory_space<vmem>>, vector<18x512xbf16>
    %cst = arith.constant dense<0.000000e+00> : vector<8x512xf32>
    %2 = tpu.matmul %0, %1, %cst {dimension_numbers = #tpu.dot_dimension_numbers<[1], [0], [0], [1], [0, 0, 1, 1], [], []>} : vector<8x18xbf16>, vector<18x512xbf16>, vector<8x512xf32> -> vector<8x512xf32>
    %cst_3 = arith.constant dense<0.000000e+00> : vector<8xf32>
    %3 = vector.multi_reduction <add>, %2, %cst_3 [1] : vector<8x512xf32> to vector<8xf32>
    %4 = vector.shape_cast %3 : vector<8xf32> to vector<8x1xf32>
    %cst_4 = arith.constant 0.001953125 : f32
    %5 = vector.broadcast %cst_4 : f32 to vector<8x1xf32>
    %6 = arith.mulf %4, %5 : vector<8x1xf32>
    %7 = vector.broadcast %6 : vector<8x1xf32> to vector<8x512xf32>
    %8 = arith.subf %2, %7 : vector<8x512xf32>
    %9 = arith.mulf %8, %8 : vector<8x512xf32>
    %cst_5 = arith.constant dense<0.000000e+00> : vector<8xf32>
    %10 = vector.multi_reduction <add>, %9, %cst_5 [1] : vector<8x512xf32> to vector<8xf32>
    %11 = vector.shape_cast %10 : vector<8xf32> to vector<8x1xf32>
    %cst_6 = arith.constant 0.001953125 : f32
    %12 = vector.broadcast %cst_6 : f32 to vector<8x1xf32>
    %13 = arith.mulf %11, %12 : vector<8x1xf32>
    %c0_7 = arith.constant 0 : index
    %c0_8 = arith.constant 0 : index
    %14 = vector.load %arg3[%c0_7, %c0_8] : memref<8x1xf32, #tpu.memory_space<vmem>>, vector<8x1xf32>
    %cst_9 = arith.constant 9.99999974E-6 : f32
    %15 = vector.broadcast %cst_9 : f32 to vector<8x1xf32>
    %16 = arith.addf %13, %15 : vector<8x1xf32>
    %17 = math.rsqrt %16 : vector<8x1xf32>
    %18 = arith.mulf %14, %17 : vector<8x1xf32>
    %19 = vector.broadcast %18 : vector<8x1xf32> to vector<8x512xf32>
    %20 = arith.mulf %8, %19 : vector<8x512xf32>
    %c0_10 = arith.constant 0 : index
    %c0_11 = arith.constant 0 : index
    %21 = vector.load %arg4[%c0_10, %c0_11] : memref<8x1xf32, #tpu.memory_space<vmem>>, vector<8x1xf32>
    %22 = vector.broadcast %21 : vector<8x1xf32> to vector<8x512xf32>
    %23 = arith.addf %20, %22 : vector<8x512xf32>
    %cst_12 = arith.constant 0.000000e+00 : f32
    %24 = vector.broadcast %cst_12 : f32 to vector<8x512xf32>
    %25 = arith.cmpf oge, %23, %24 : vector<8x512xf32>
    %cst_13 = arith.constant 0.00999999977 : f32
    %26 = vector.broadcast %cst_13 : f32 to vector<8x512xf32>
    %27 = arith.mulf %26, %23 : vector<8x512xf32>
    %28 = arith.select %25, %23, %27 : vector<8x512xi1>, vector<8x512xf32>
    %c0_14 = arith.constant 0 : index
    %c0_15 = arith.constant 0 : index
    %29 = vector.load %arg5[%c0_14, %c0_15] : memref<8x512xf32, #tpu.memory_space<vmem>>, vector<8x512xf32>
    tpu.vector_store %arg5[%c0_14, %c0_15], %28 {strides = array<i32>} : memref<8x512xf32, #tpu.memory_space<vmem>>, vector<8x512xf32>,
    return
  }
  func.func @transform_0(%arg0: i32) -> (i32, i32) {
    %c0_i32 = arith.constant 0 : i32
    %c0_i32_0 = arith.constant 0 : i32
    %c0_i32_1 = arith.constant 0 : i32
    return %c0_i32, %c0_i32_0 : i32, i32
  }
  func.func @transform_1(%arg0: i32) -> (i32, i32) {
    %c0_i32 = arith.constant 0 : i32
    %c0_i32_0 = arith.constant 0 : i32
    %c0_i32_1 = arith.constant 0 : i32
    return %c0_i32, %c0_i32_0 : i32, i32
  }
  func.func @transform_2(%arg0: i32) -> (i32, i32) {
    %c0_i32 = arith.constant 0 : i32
    %c0_i32_0 = arith.constant 0 : i32
    %c0_i32_1 = arith.constant 0 : i32
    return %c0_i32, %c0_i32_0 : i32, i32
  }
  func.func @transform_3(%arg0: i32) -> (i32, i32) {
    %c0_i32 = arith.constant 0 : i32
    %c0_i32_0 = arith.constant 0 : i32
    %c0_i32_1 = arith.constant 0 : i32
    return %c0_i32, %c0_i32_0 : i32, i32
  }
  func.func @transform_4(%arg0: i32) -> (i32, i32) {
    %c0_i32 = arith.constant 0 : i32
    %c0_i32_0 = arith.constant 0 : i32
    %c0_i32_1 = arith.constant 0 : i32
    return %c0_i32, %c0_i32_0 : i32, i32
  }
}

module attributes {stable_mosaic.version = 11 : i64} {
  func.func @_xproj_kernel(%arg0: i32, %arg1: memref<72x512xbf16, #tpu.memory_space<vmem>>, %arg2: memref<32x72xbf16, #tpu.memory_space<vmem>>, %arg3: memref<32x512xbf16, #tpu.memory_space<vmem>>) attributes {dimension_semantics = [#tpu.dimension_semantics<parallel>], iteration_bounds = array<i64: 1>, scalar_prefetch = 0 : i64, scratch_operands = 0 : i64, tpu.core_type = #tpu.core_type<tc>, window_params = [{transform_indices = @transform_0, window_bounds = array<i64: 72, 512>}, {pipeline_mode = #tpu.pipeline_mode<synchronous>, transform_indices = @transform_1, window_bounds = array<i64: 32, 72>}, {transform_indices = @transform_2, window_bounds = array<i64: 32, 512>}]} {
    %c0 = arith.constant 0 : index
    %c0_0 = arith.constant 0 : index
    %0 = vector.load %arg2[%c0, %c0_0] : memref<32x72xbf16, #tpu.memory_space<vmem>>, vector<32x72xbf16>
    %c0_1 = arith.constant 0 : index
    %c0_2 = arith.constant 0 : index
    %1 = vector.load %arg1[%c0_1, %c0_2] : memref<72x512xbf16, #tpu.memory_space<vmem>>, vector<72x512xbf16>
    %cst = arith.constant dense<0.000000e+00> : vector<32x512xf32>
    %2 = tpu.matmul %0, %1, %cst {dimension_numbers = #tpu.dot_dimension_numbers<[1], [0], [0], [1], [0, 0, 1, 1], [], []>} : vector<32x72xbf16>, vector<72x512xbf16>, vector<32x512xf32> -> vector<32x512xf32>
    %3 = arith.truncf %2 : vector<32x512xf32> to vector<32x512xbf16>
    %c0_3 = arith.constant 0 : index
    %c0_4 = arith.constant 0 : index
    %4 = vector.load %arg3[%c0_3, %c0_4] : memref<32x512xbf16, #tpu.memory_space<vmem>>, vector<32x512xbf16>
    tpu.vector_store %arg3[%c0_3, %c0_4], %3 {strides = array<i32>} : memref<32x512xbf16, #tpu.memory_space<vmem>>, vector<32x512xbf16>,
    return
  }
  func.func @transform_0(%arg0: i32) -> (i32, i32) {
    %c0_i32 = arith.constant 0 : i32
    %c0_i32_0 = arith.constant 0 : i32
    return %c0_i32, %arg0 : i32, i32
  }
  func.func @transform_1(%arg0: i32) -> (i32, i32) {
    %c0_i32 = arith.constant 0 : i32
    %c0_i32_0 = arith.constant 0 : i32
    %c0_i32_1 = arith.constant 0 : i32
    return %c0_i32, %c0_i32_0 : i32, i32
  }
  func.func @transform_2(%arg0: i32) -> (i32, i32) {
    %c0_i32 = arith.constant 0 : i32
    %c0_i32_0 = arith.constant 0 : i32
    return %c0_i32, %arg0 : i32, i32
  }
}

module attributes {stable_mosaic.version = 11 : i64} {
  func.func @_convlstm_seq_kernel(%arg0: i32, %arg1: memref<32x128xbf16, #tpu.memory_space<vmem>>, %arg2: memref<32x72xbf16, #tpu.memory_space<vmem>>, %arg3: memref<9x128xf32, #tpu.memory_space<vmem>>, %arg4: memref<32x1xf32, #tpu.memory_space<vmem>>, %arg5: memref<1x8x128xf32, #tpu.memory_space<vmem>>, %arg6: memref<8x128xf32, #tpu.memory_space<vmem>>, %arg7: memref<8x128xf32, #tpu.memory_space<vmem>>) attributes {dimension_semantics = [#tpu.dimension_semantics<arbitrary>], iteration_bounds = array<i64: 4>, scalar_prefetch = 0 : i64, scratch_operands = 2 : i64, tpu.core_type = #tpu.core_type<tc>, window_params = [{transform_indices = @transform_0, window_bounds = array<i64: 32, 128>}, {pipeline_mode = #tpu.pipeline_mode<synchronous>, transform_indices = @transform_1, window_bounds = array<i64: 32, 72>}, {pipeline_mode = #tpu.pipeline_mode<synchronous>, transform_indices = @transform_2, window_bounds = array<i64: 9, 128>}, {pipeline_mode = #tpu.pipeline_mode<synchronous>, transform_indices = @transform_3, window_bounds = array<i64: 32, 1>}, {transform_indices = @transform_4, window_bounds = array<i64: 1, 8, 128>}]} {
    %c0_i32 = arith.constant 0 : i32
    %0 = arith.cmpi eq, %arg0, %c0_i32 : i32
    %1 = arith.extui %0 : i1 to i32
    %c0_i32_0 = arith.constant 0 : i32
    %2 = arith.cmpi ne, %1, %c0_i32_0 : i32
    scf.if %2 {
      %cst_30 = arith.constant 0.000000e+00 : f32
      %80 = vector.broadcast %cst_30 : f32 to vector<8x128xf32>
      %c0_31 = arith.constant 0 : index
      %c0_32 = arith.constant 0 : index
      %81 = vector.load %arg6[%c0_31, %c0_32] : memref<8x128xf32, #tpu.memory_space<vmem>>, vector<8x128xf32>
      tpu.vector_store %arg6[%c0_31, %c0_32], %80 {strides = array<i32>} : memref<8x128xf32, #tpu.memory_space<vmem>>, vector<8x128xf32>,
      %cst_33 = arith.constant 0.000000e+00 : f32
      %82 = vector.broadcast %cst_33 : f32 to vector<8x128xf32>
      %c0_34 = arith.constant 0 : index
      %c0_35 = arith.constant 0 : index
      %83 = vector.load %arg7[%c0_34, %c0_35] : memref<8x128xf32, #tpu.memory_space<vmem>>, vector<8x128xf32>
      tpu.vector_store %arg7[%c0_34, %c0_35], %82 {strides = array<i32>} : memref<8x128xf32, #tpu.memory_space<vmem>>, vector<8x128xf32>,
    } else {
    }
    %c0 = arith.constant 0 : index
    %c0_1 = arith.constant 0 : index
    %3 = vector.load %arg6[%c0, %c0_1] : memref<8x128xf32, #tpu.memory_space<vmem>>, vector<8x128xf32>
    %c9_i32 = arith.constant 9 : i32
    %4 = tpu.dynamic_rotate %3 by %c9_i32 dim 1 : vector<8x128xf32>, i32 -> vector<8x128xf32>
    %c0_2 = arith.constant 0 : index
    %c0_3 = arith.constant 0 : index
    %5 = vector.load %arg3[%c0_2, %c0_3] : memref<9x128xf32, #tpu.memory_space<vmem>>, vector<1x128xf32>
    %6 = vector.broadcast %5 : vector<1x128xf32> to vector<8x128xf32>
    %7 = arith.mulf %4, %6 : vector<8x128xf32>
    %c8_i32 = arith.constant 8 : i32
    %8 = tpu.dynamic_rotate %3 by %c8_i32 dim 1 : vector<8x128xf32>, i32 -> vector<8x128xf32>
    %c1 = arith.constant 1 : index
    %c0_4 = arith.constant 0 : index
    %9 = vector.load %arg3[%c1, %c0_4] : memref<9x128xf32, #tpu.memory_space<vmem>>, vector<1x128xf32>
    %10 = vector.broadcast %9 : vector<1x128xf32> to vector<8x128xf32>
    %11 = arith.mulf %8, %10 : vector<8x128xf32>
    %c7_i32 = arith.constant 7 : i32
    %12 = tpu.dynamic_rotate %3 by %c7_i32 dim 1 : vector<8x128xf32>, i32 -> vector<8x128xf32>
    %c2 = arith.constant 2 : index
    %c0_5 = arith.constant 0 : index
    %13 = vector.load %arg3[%c2, %c0_5] : memref<9x128xf32, #tpu.memory_space<vmem>>, vector<1x128xf32>
    %14 = vector.broadcast %13 : vector<1x128xf32> to vector<8x128xf32>
    %15 = arith.mulf %12, %14 : vector<8x128xf32>
    %c1_i32 = arith.constant 1 : i32
    %16 = tpu.dynamic_rotate %3 by %c1_i32 dim 1 : vector<8x128xf32>, i32 -> vector<8x128xf32>
    %c3 = arith.constant 3 : index
    %c0_6 = arith.constant 0 : index
    %17 = vector.load %arg3[%c3, %c0_6] : memref<9x128xf32, #tpu.memory_space<vmem>>, vector<1x128xf32>
    %18 = vector.broadcast %17 : vector<1x128xf32> to vector<8x128xf32>
    %19 = arith.mulf %16, %18 : vector<8x128xf32>
    %c4 = arith.constant 4 : index
    %c0_7 = arith.constant 0 : index
    %20 = vector.load %arg3[%c4, %c0_7] : memref<9x128xf32, #tpu.memory_space<vmem>>, vector<1x128xf32>
    %21 = vector.broadcast %20 : vector<1x128xf32> to vector<8x128xf32>
    %22 = arith.mulf %3, %21 : vector<8x128xf32>
    %c127_i32 = arith.constant 127 : i32
    %23 = tpu.dynamic_rotate %3 by %c127_i32 dim 1 : vector<8x128xf32>, i32 -> vector<8x128xf32>
    %c5 = arith.constant 5 : index
    %c0_8 = arith.constant 0 : index
    %24 = vector.load %arg3[%c5, %c0_8] : memref<9x128xf32, #tpu.memory_space<vmem>>, vector<1x128xf32>
    %25 = vector.broadcast %24 : vector<1x128xf32> to vector<8x128xf32>
    %26 = arith.mulf %23, %25 : vector<8x128xf32>
    %c121_i32 = arith.constant 121 : i32
    %27 = tpu.dynamic_rotate %3 by %c121_i32 dim 1 : vector<8x128xf32>, i32 -> vector<8x128xf32>
    %c6 = arith.constant 6 : index
    %c0_9 = arith.constant 0 : index
    %28 = vector.load %arg3[%c6, %c0_9] : memref<9x128xf32, #tpu.memory_space<vmem>>, vector<1x128xf32>
    %29 = vector.broadcast %28 : vector<1x128xf32> to vector<8x128xf32>
    %30 = arith.mulf %27, %29 : vector<8x128xf32>
    %c120_i32 = arith.constant 120 : i32
    %31 = tpu.dynamic_rotate %3 by %c120_i32 dim 1 : vector<8x128xf32>, i32 -> vector<8x128xf32>
    %c7 = arith.constant 7 : index
    %c0_10 = arith.constant 0 : index
    %32 = vector.load %arg3[%c7, %c0_10] : memref<9x128xf32, #tpu.memory_space<vmem>>, vector<1x128xf32>
    %33 = vector.broadcast %32 : vector<1x128xf32> to vector<8x128xf32>
    %34 = arith.mulf %31, %33 : vector<8x128xf32>
    %c119_i32 = arith.constant 119 : i32
    %35 = tpu.dynamic_rotate %3 by %c119_i32 dim 1 : vector<8x128xf32>, i32 -> vector<8x128xf32>
    %c8 = arith.constant 8 : index
    %c0_11 = arith.constant 0 : index
    %36 = vector.load %arg3[%c8, %c0_11] : memref<9x128xf32, #tpu.memory_space<vmem>>, vector<1x128xf32>
    %37 = vector.broadcast %36 : vector<1x128xf32> to vector<8x128xf32>
    %38 = arith.mulf %35, %37 : vector<8x128xf32>
    %39 = tpu.concatenate %7, %11, %15, %19, %22, %26, %30, %34, %38 in 0 : vector<8x128xf32>, vector<8x128xf32>, vector<8x128xf32>, vector<8x128xf32>, vector<8x128xf32>, vector<8x128xf32>, vector<8x128xf32>, vector<8x128xf32>, vector<8x128xf32> -> vector<72x128xf32>
    %40 = arith.truncf %39 : vector<72x128xf32> to vector<72x128xbf16>
    %c0_12 = arith.constant 0 : index
    %c0_13 = arith.constant 0 : index
    %41 = vector.load %arg1[%c0_12, %c0_13] : memref<32x128xbf16, #tpu.memory_space<vmem>>, vector<32x128xbf16>
    %42 = arith.extf %41 : vector<32x128xbf16> to vector<32x128xf32>
    %c0_14 = arith.constant 0 : index
    %c0_15 = arith.constant 0 : index
    %43 = vector.load %arg4[%c0_14, %c0_15] : memref<32x1xf32, #tpu.memory_space<vmem>>, vector<32x1xf32>
    %44 = vector.broadcast %43 : vector<32x1xf32> to vector<32x128xf32>
    %45 = arith.addf %42, %44 : vector<32x128xf32>
    %c0_16 = arith.constant 0 : index
    %c0_17 = arith.constant 0 : index
    %46 = vector.load %arg2[%c0_16, %c0_17] : memref<32x72xbf16, #tpu.memory_space<vmem>>, vector<32x72xbf16>
    %cst = arith.constant dense<0.000000e+00> : vector<32x128xf32>
    %47 = tpu.matmul %46, %40, %cst {dimension_numbers = #tpu.dot_dimension_numbers<[1], [0], [0], [1], [0, 0, 1, 1], [], []>} : vector<32x72xbf16>, vector<72x128xbf16>, vector<32x128xf32> -> vector<32x128xf32>
    %48 = arith.addf %45, %47 : vector<32x128xf32>
    %49 = vector.extract_strided_slice %48 {offsets = [0, 0], sizes = [8, 128], strides = [1, 1]} : vector<32x128xf32> to vector<8x128xf32>
    %50 = arith.negf %49 : vector<8x128xf32>
    %51 = math.exp %50 : vector<8x128xf32>
    %cst_18 = arith.constant 1.000000e+00 : f32
    %52 = vector.broadcast %cst_18 : f32 to vector<8x128xf32>
    %53 = arith.addf %52, %51 : vector<8x128xf32>
    %54 = arith.divf %52, %53 : vector<8x128xf32>
    %55 = vector.extract_strided_slice %48 {offsets = [8, 0], sizes = [8, 128], strides = [1, 1]} : vector<32x128xf32> to vector<8x128xf32>
    %56 = arith.negf %55 : vector<8x128xf32>
    %57 = math.exp %56 : vector<8x128xf32>
    %cst_19 = arith.constant 1.000000e+00 : f32
    %58 = vector.broadcast %cst_19 : f32 to vector<8x128xf32>
    %59 = arith.addf %58, %57 : vector<8x128xf32>
    %60 = arith.divf %58, %59 : vector<8x128xf32>
    %61 = vector.extract_strided_slice %48 {offsets = [16, 0], sizes = [8, 128], strides = [1, 1]} : vector<32x128xf32> to vector<8x128xf32>
    %62 = arith.negf %61 : vector<8x128xf32>
    %63 = math.exp %62 : vector<8x128xf32>
    %cst_20 = arith.constant 1.000000e+00 : f32
    %64 = vector.broadcast %cst_20 : f32 to vector<8x128xf32>
    %65 = arith.addf %64, %63 : vector<8x128xf32>
    %66 = arith.divf %64, %65 : vector<8x128xf32>
    %67 = vector.extract_strided_slice %48 {offsets = [24, 0], sizes = [8, 128], strides = [1, 1]} : vector<32x128xf32> to vector<8x128xf32>
    %68 = math.tanh %67 : vector<8x128xf32>
    %c0_21 = arith.constant 0 : index
    %c0_22 = arith.constant 0 : index
    %69 = vector.load %arg7[%c0_21, %c0_22] : memref<8x128xf32, #tpu.memory_space<vmem>>, vector<8x128xf32>
    %70 = arith.mulf %60, %69 : vector<8x128xf32>
    %71 = arith.mulf %54, %68 : vector<8x128xf32>
    %72 = arith.addf %70, %71 : vector<8x128xf32>
    %73 = math.tanh %72 : vector<8x128xf32>
    %74 = arith.mulf %66, %73 : vector<8x128xf32>
    %c0_23 = arith.constant 0 : index
    %c0_24 = arith.constant 0 : index
    %75 = vector.load %arg7[%c0_23, %c0_24] : memref<8x128xf32, #tpu.memory_space<vmem>>, vector<8x128xf32>
    tpu.vector_store %arg7[%c0_23, %c0_24], %72 {strides = array<i32>} : memref<8x128xf32, #tpu.memory_space<vmem>>, vector<8x128xf32>,
    %c0_25 = arith.constant 0 : index
    %c0_26 = arith.constant 0 : index
    %76 = vector.load %arg6[%c0_25, %c0_26] : memref<8x128xf32, #tpu.memory_space<vmem>>, vector<8x128xf32>
    tpu.vector_store %arg6[%c0_25, %c0_26], %74 {strides = array<i32>} : memref<8x128xf32, #tpu.memory_space<vmem>>, vector<8x128xf32>,
    %c0_27 = arith.constant 0 : index
    %c0_28 = arith.constant 0 : index
    %c0_29 = arith.constant 0 : index
    %77 = vector.load %arg5[%c0_27, %c0_28, %c0_29] : memref<1x8x128xf32, #tpu.memory_space<vmem>>, vector<1x8x128xf32>
    %78 = vector.shape_cast %77 : vector<1x8x128xf32> to vector<8x128xf32>
    %79 = vector.shape_cast %74 : vector<8x128xf32> to vector<1x8x128xf32>
    tpu.vector_store %arg5[%c0_27, %c0_28, %c0_29], %79 {strides = array<i32>} : memref<1x8x128xf32, #tpu.memory_space<vmem>>, vector<1x8x128xf32>,
    return
  }
  func.func @transform_0(%arg0: i32) -> (i32, i32) {
    %c0_i32 = arith.constant 0 : i32
    %c0_i32_0 = arith.constant 0 : i32
    return %c0_i32, %arg0 : i32, i32
  }
  func.func @transform_1(%arg0: i32) -> (i32, i32) {
    %c0_i32 = arith.constant 0 : i32
    %c0_i32_0 = arith.constant 0 : i32
    %c0_i32_1 = arith.constant 0 : i32
    return %c0_i32, %c0_i32_0 : i32, i32
  }
  func.func @transform_2(%arg0: i32) -> (i32, i32) {
    %c0_i32 = arith.constant 0 : i32
    %c0_i32_0 = arith.constant 0 : i32
    %c0_i32_1 = arith.constant 0 : i32
    return %c0_i32, %c0_i32_0 : i32, i32
  }
  func.func @transform_3(%arg0: i32) -> (i32, i32) {
    %c0_i32 = arith.constant 0 : i32
    %c0_i32_0 = arith.constant 0 : i32
    %c0_i32_1 = arith.constant 0 : i32
    return %c0_i32, %c0_i32_0 : i32, i32
  }
  func.func @transform_4(%arg0: i32) -> (i32, i32, i32) {
    %c0_i32 = arith.constant 0 : i32
    %c0_i32_0 = arith.constant 0 : i32
    %c0_i32_1 = arith.constant 0 : i32
    return %arg0, %c0_i32, %c0_i32_0 : i32, i32, i32
  }
}

module attributes {stable_mosaic.version = 11 : i64} {
  func.func @_conv_bn_act_kernel(%arg0: i32, %arg1: memref<72x128xbf16, #tpu.memory_space<vmem>>, %arg2: memref<16x72xbf16, #tpu.memory_space<vmem>>, %arg3: memref<16x1xf32, #tpu.memory_space<vmem>>, %arg4: memref<16x1xf32, #tpu.memory_space<vmem>>, %arg5: memref<16x128xf32, #tpu.memory_space<vmem>>) attributes {dimension_semantics = [#tpu.dimension_semantics<arbitrary>], iteration_bounds = array<i64: 1>, scalar_prefetch = 0 : i64, scratch_operands = 0 : i64, tpu.core_type = #tpu.core_type<tc>, window_params = [{pipeline_mode = #tpu.pipeline_mode<synchronous>, transform_indices = @transform_0, window_bounds = array<i64: 72, 128>}, {pipeline_mode = #tpu.pipeline_mode<synchronous>, transform_indices = @transform_1, window_bounds = array<i64: 16, 72>}, {pipeline_mode = #tpu.pipeline_mode<synchronous>, transform_indices = @transform_2, window_bounds = array<i64: 16, 1>}, {pipeline_mode = #tpu.pipeline_mode<synchronous>, transform_indices = @transform_3, window_bounds = array<i64: 16, 1>}, {pipeline_mode = #tpu.pipeline_mode<synchronous>, transform_indices = @transform_4, window_bounds = array<i64: 16, 128>}]} {
    %c0 = arith.constant 0 : index
    %c0_0 = arith.constant 0 : index
    %0 = vector.load %arg2[%c0, %c0_0] : memref<16x72xbf16, #tpu.memory_space<vmem>>, vector<16x72xbf16>
    %c0_1 = arith.constant 0 : index
    %c0_2 = arith.constant 0 : index
    %1 = vector.load %arg1[%c0_1, %c0_2] : memref<72x128xbf16, #tpu.memory_space<vmem>>, vector<72x128xbf16>
    %cst = arith.constant dense<0.000000e+00> : vector<16x128xf32>
    %2 = tpu.matmul %0, %1, %cst {dimension_numbers = #tpu.dot_dimension_numbers<[1], [0], [0], [1], [0, 0, 1, 1], [], []>} : vector<16x72xbf16>, vector<72x128xbf16>, vector<16x128xf32> -> vector<16x128xf32>
    %cst_3 = arith.constant dense<0.000000e+00> : vector<16xf32>
    %3 = vector.multi_reduction <add>, %2, %cst_3 [1] : vector<16x128xf32> to vector<16xf32>
    %4 = vector.shape_cast %3 : vector<16xf32> to vector<16x1xf32>
    %cst_4 = arith.constant 7.812500e-03 : f32
    %5 = vector.broadcast %cst_4 : f32 to vector<16x1xf32>
    %6 = arith.mulf %4, %5 : vector<16x1xf32>
    %7 = vector.broadcast %6 : vector<16x1xf32> to vector<16x128xf32>
    %8 = arith.subf %2, %7 : vector<16x128xf32>
    %9 = arith.mulf %8, %8 : vector<16x128xf32>
    %cst_5 = arith.constant dense<0.000000e+00> : vector<16xf32>
    %10 = vector.multi_reduction <add>, %9, %cst_5 [1] : vector<16x128xf32> to vector<16xf32>
    %11 = vector.shape_cast %10 : vector<16xf32> to vector<16x1xf32>
    %cst_6 = arith.constant 7.812500e-03 : f32
    %12 = vector.broadcast %cst_6 : f32 to vector<16x1xf32>
    %13 = arith.mulf %11, %12 : vector<16x1xf32>
    %c0_7 = arith.constant 0 : index
    %c0_8 = arith.constant 0 : index
    %14 = vector.load %arg3[%c0_7, %c0_8] : memref<16x1xf32, #tpu.memory_space<vmem>>, vector<16x1xf32>
    %cst_9 = arith.constant 9.99999974E-6 : f32
    %15 = vector.broadcast %cst_9 : f32 to vector<16x1xf32>
    %16 = arith.addf %13, %15 : vector<16x1xf32>
    %17 = math.rsqrt %16 : vector<16x1xf32>
    %18 = arith.mulf %14, %17 : vector<16x1xf32>
    %19 = vector.broadcast %18 : vector<16x1xf32> to vector<16x128xf32>
    %20 = arith.mulf %8, %19 : vector<16x128xf32>
    %c0_10 = arith.constant 0 : index
    %c0_11 = arith.constant 0 : index
    %21 = vector.load %arg4[%c0_10, %c0_11] : memref<16x1xf32, #tpu.memory_space<vmem>>, vector<16x1xf32>
    %22 = vector.broadcast %21 : vector<16x1xf32> to vector<16x128xf32>
    %23 = arith.addf %20, %22 : vector<16x128xf32>
    %cst_12 = arith.constant 0.000000e+00 : f32
    %24 = vector.broadcast %cst_12 : f32 to vector<16x128xf32>
    %25 = arith.cmpf oge, %23, %24 : vector<16x128xf32>
    %cst_13 = arith.constant 0.00999999977 : f32
    %26 = vector.broadcast %cst_13 : f32 to vector<16x128xf32>
    %27 = arith.mulf %26, %23 : vector<16x128xf32>
    %28 = arith.select %25, %23, %27 : vector<16x128xi1>, vector<16x128xf32>
    %c0_14 = arith.constant 0 : index
    %c0_15 = arith.constant 0 : index
    %29 = vector.load %arg5[%c0_14, %c0_15] : memref<16x128xf32, #tpu.memory_space<vmem>>, vector<16x128xf32>
    tpu.vector_store %arg5[%c0_14, %c0_15], %28 {strides = array<i32>} : memref<16x128xf32, #tpu.memory_space<vmem>>, vector<16x128xf32>,
    return
  }
  func.func @transform_0(%arg0: i32) -> (i32, i32) {
    %c0_i32 = arith.constant 0 : i32
    %c0_i32_0 = arith.constant 0 : i32
    %c0_i32_1 = arith.constant 0 : i32
    return %c0_i32, %c0_i32_0 : i32, i32
  }
  func.func @transform_1(%arg0: i32) -> (i32, i32) {
    %c0_i32 = arith.constant 0 : i32
    %c0_i32_0 = arith.constant 0 : i32
    %c0_i32_1 = arith.constant 0 : i32
    return %c0_i32, %c0_i32_0 : i32, i32
  }
  func.func @transform_2(%arg0: i32) -> (i32, i32) {
    %c0_i32 = arith.constant 0 : i32
    %c0_i32_0 = arith.constant 0 : i32
    %c0_i32_1 = arith.constant 0 : i32
    return %c0_i32, %c0_i32_0 : i32, i32
  }
  func.func @transform_3(%arg0: i32) -> (i32, i32) {
    %c0_i32 = arith.constant 0 : i32
    %c0_i32_0 = arith.constant 0 : i32
    %c0_i32_1 = arith.constant 0 : i32
    return %c0_i32, %c0_i32_0 : i32, i32
  }
  func.func @transform_4(%arg0: i32) -> (i32, i32) {
    %c0_i32 = arith.constant 0 : i32
    %c0_i32_0 = arith.constant 0 : i32
    %c0_i32_1 = arith.constant 0 : i32
    return %c0_i32, %c0_i32_0 : i32, i32
  }
}

module attributes {stable_mosaic.version = 11 : i64} {
  func.func @_xproj_kernel(%arg0: i32, %arg1: memref<144x512xbf16, #tpu.memory_space<vmem>>, %arg2: memref<64x144xbf16, #tpu.memory_space<vmem>>, %arg3: memref<64x512xbf16, #tpu.memory_space<vmem>>) attributes {dimension_semantics = [#tpu.dimension_semantics<parallel>], iteration_bounds = array<i64: 1>, scalar_prefetch = 0 : i64, scratch_operands = 0 : i64, tpu.core_type = #tpu.core_type<tc>, window_params = [{transform_indices = @transform_0, window_bounds = array<i64: 144, 512>}, {pipeline_mode = #tpu.pipeline_mode<synchronous>, transform_indices = @transform_1, window_bounds = array<i64: 64, 144>}, {transform_indices = @transform_2, window_bounds = array<i64: 64, 512>}]} {
    %c0 = arith.constant 0 : index
    %c0_0 = arith.constant 0 : index
    %0 = vector.load %arg2[%c0, %c0_0] : memref<64x144xbf16, #tpu.memory_space<vmem>>, vector<64x144xbf16>
    %c0_1 = arith.constant 0 : index
    %c0_2 = arith.constant 0 : index
    %1 = vector.load %arg1[%c0_1, %c0_2] : memref<144x512xbf16, #tpu.memory_space<vmem>>, vector<144x512xbf16>
    %cst = arith.constant dense<0.000000e+00> : vector<64x512xf32>
    %2 = tpu.matmul %0, %1, %cst {dimension_numbers = #tpu.dot_dimension_numbers<[1], [0], [0], [1], [0, 0, 1, 1], [], []>} : vector<64x144xbf16>, vector<144x512xbf16>, vector<64x512xf32> -> vector<64x512xf32>
    %3 = arith.truncf %2 : vector<64x512xf32> to vector<64x512xbf16>
    %c0_3 = arith.constant 0 : index
    %c0_4 = arith.constant 0 : index
    %4 = vector.load %arg3[%c0_3, %c0_4] : memref<64x512xbf16, #tpu.memory_space<vmem>>, vector<64x512xbf16>
    tpu.vector_store %arg3[%c0_3, %c0_4], %3 {strides = array<i32>} : memref<64x512xbf16, #tpu.memory_space<vmem>>, vector<64x512xbf16>,
    return
  }
  func.func @transform_0(%arg0: i32) -> (i32, i32) {
    %c0_i32 = arith.constant 0 : i32
    %c0_i32_0 = arith.constant 0 : i32
    return %c0_i32, %arg0 : i32, i32
  }
  func.func @transform_1(%arg0: i32) -> (i32, i32) {
    %c0_i32 = arith.constant 0 : i32
    %c0_i32_0 = arith.constant 0 : i32
    %c0_i32_1 = arith.constant 0 : i32
    return %c0_i32, %c0_i32_0 : i32, i32
  }
  func.func @transform_2(%arg0: i32) -> (i32, i32) {
    %c0_i32 = arith.constant 0 : i32
    %c0_i32_0 = arith.constant 0 : i32
    return %c0_i32, %arg0 : i32, i32
  }
}

module attributes {stable_mosaic.version = 11 : i64} {
  func.func @_convlstm_seq_kernel(%arg0: i32, %arg1: memref<64x128xbf16, #tpu.memory_space<vmem>>, %arg2: memref<64x144xbf16, #tpu.memory_space<vmem>>, %arg3: memref<9x128xf32, #tpu.memory_space<vmem>>, %arg4: memref<64x1xf32, #tpu.memory_space<vmem>>, %arg5: memref<1x16x128xf32, #tpu.memory_space<vmem>>, %arg6: memref<16x128xf32, #tpu.memory_space<vmem>>, %arg7: memref<16x128xf32, #tpu.memory_space<vmem>>) attributes {dimension_semantics = [#tpu.dimension_semantics<arbitrary>], iteration_bounds = array<i64: 4>, scalar_prefetch = 0 : i64, scratch_operands = 2 : i64, tpu.core_type = #tpu.core_type<tc>, window_params = [{transform_indices = @transform_0, window_bounds = array<i64: 64, 128>}, {pipeline_mode = #tpu.pipeline_mode<synchronous>, transform_indices = @transform_1, window_bounds = array<i64: 64, 144>}, {pipeline_mode = #tpu.pipeline_mode<synchronous>, transform_indices = @transform_2, window_bounds = array<i64: 9, 128>}, {pipeline_mode = #tpu.pipeline_mode<synchronous>, transform_indices = @transform_3, window_bounds = array<i64: 64, 1>}, {transform_indices = @transform_4, window_bounds = array<i64: 1, 16, 128>}]} {
    %c0_i32 = arith.constant 0 : i32
    %0 = arith.cmpi eq, %arg0, %c0_i32 : i32
    %1 = arith.extui %0 : i1 to i32
    %c0_i32_0 = arith.constant 0 : i32
    %2 = arith.cmpi ne, %1, %c0_i32_0 : i32
    scf.if %2 {
      %cst_30 = arith.constant 0.000000e+00 : f32
      %80 = vector.broadcast %cst_30 : f32 to vector<16x128xf32>
      %c0_31 = arith.constant 0 : index
      %c0_32 = arith.constant 0 : index
      %81 = vector.load %arg6[%c0_31, %c0_32] : memref<16x128xf32, #tpu.memory_space<vmem>>, vector<16x128xf32>
      tpu.vector_store %arg6[%c0_31, %c0_32], %80 {strides = array<i32>} : memref<16x128xf32, #tpu.memory_space<vmem>>, vector<16x128xf32>,
      %cst_33 = arith.constant 0.000000e+00 : f32
      %82 = vector.broadcast %cst_33 : f32 to vector<16x128xf32>
      %c0_34 = arith.constant 0 : index
      %c0_35 = arith.constant 0 : index
      %83 = vector.load %arg7[%c0_34, %c0_35] : memref<16x128xf32, #tpu.memory_space<vmem>>, vector<16x128xf32>
      tpu.vector_store %arg7[%c0_34, %c0_35], %82 {strides = array<i32>} : memref<16x128xf32, #tpu.memory_space<vmem>>, vector<16x128xf32>,
    } else {
    }
    %c0 = arith.constant 0 : index
    %c0_1 = arith.constant 0 : index
    %3 = vector.load %arg6[%c0, %c0_1] : memref<16x128xf32, #tpu.memory_space<vmem>>, vector<16x128xf32>
    %c5_i32 = arith.constant 5 : i32
    %4 = tpu.dynamic_rotate %3 by %c5_i32 dim 1 : vector<16x128xf32>, i32 -> vector<16x128xf32>
    %c0_2 = arith.constant 0 : index
    %c0_3 = arith.constant 0 : index
    %5 = vector.load %arg3[%c0_2, %c0_3] : memref<9x128xf32, #tpu.memory_space<vmem>>, vector<1x128xf32>
    %6 = vector.broadcast %5 : vector<1x128xf32> to vector<16x128xf32>
    %7 = arith.mulf %4, %6 : vector<16x128xf32>
    %c4_i32 = arith.constant 4 : i32
    %8 = tpu.dynamic_rotate %3 by %c4_i32 dim 1 : vector<16x128xf32>, i32 -> vector<16x128xf32>
    %c1 = arith.constant 1 : index
    %c0_4 = arith.constant 0 : index
    %9 = vector.load %arg3[%c1, %c0_4] : memref<9x128xf32, #tpu.memory_space<vmem>>, vector<1x128xf32>
    %10 = vector.broadcast %9 : vector<1x128xf32> to vector<16x128xf32>
    %11 = arith.mulf %8, %10 : vector<16x128xf32>
    %c3_i32 = arith.constant 3 : i32
    %12 = tpu.dynamic_rotate %3 by %c3_i32 dim 1 : vector<16x128xf32>, i32 -> vector<16x128xf32>
    %c2 = arith.constant 2 : index
    %c0_5 = arith.constant 0 : index
    %13 = vector.load %arg3[%c2, %c0_5] : memref<9x128xf32, #tpu.memory_space<vmem>>, vector<1x128xf32>
    %14 = vector.broadcast %13 : vector<1x128xf32> to vector<16x128xf32>
    %15 = arith.mulf %12, %14 : vector<16x128xf32>
    %c1_i32 = arith.constant 1 : i32
    %16 = tpu.dynamic_rotate %3 by %c1_i32 dim 1 : vector<16x128xf32>, i32 -> vector<16x128xf32>
    %c3 = arith.constant 3 : index
    %c0_6 = arith.constant 0 : index
    %17 = vector.load %arg3[%c3, %c0_6] : memref<9x128xf32, #tpu.memory_space<vmem>>, vector<1x128xf32>
    %18 = vector.broadcast %17 : vector<1x128xf32> to vector<16x128xf32>
    %19 = arith.mulf %16, %18 : vector<16x128xf32>
    %c4 = arith.constant 4 : index
    %c0_7 = arith.constant 0 : index
    %20 = vector.load %arg3[%c4, %c0_7] : memref<9x128xf32, #tpu.memory_space<vmem>>, vector<1x128xf32>
    %21 = vector.broadcast %20 : vector<1x128xf32> to vector<16x128xf32>
    %22 = arith.mulf %3, %21 : vector<16x128xf32>
    %c127_i32 = arith.constant 127 : i32
    %23 = tpu.dynamic_rotate %3 by %c127_i32 dim 1 : vector<16x128xf32>, i32 -> vector<16x128xf32>
    %c5 = arith.constant 5 : index
    %c0_8 = arith.constant 0 : index
    %24 = vector.load %arg3[%c5, %c0_8] : memref<9x128xf32, #tpu.memory_space<vmem>>, vector<1x128xf32>
    %25 = vector.broadcast %24 : vector<1x128xf32> to vector<16x128xf32>
    %26 = arith.mulf %23, %25 : vector<16x128xf32>
    %c125_i32 = arith.constant 125 : i32
    %27 = tpu.dynamic_rotate %3 by %c125_i32 dim 1 : vector<16x128xf32>, i32 -> vector<16x128xf32>
    %c6 = arith.constant 6 : index
    %c0_9 = arith.constant 0 : index
    %28 = vector.load %arg3[%c6, %c0_9] : memref<9x128xf32, #tpu.memory_space<vmem>>, vector<1x128xf32>
    %29 = vector.broadcast %28 : vector<1x128xf32> to vector<16x128xf32>
    %30 = arith.mulf %27, %29 : vector<16x128xf32>
    %c124_i32 = arith.constant 124 : i32
    %31 = tpu.dynamic_rotate %3 by %c124_i32 dim 1 : vector<16x128xf32>, i32 -> vector<16x128xf32>
    %c7 = arith.constant 7 : index
    %c0_10 = arith.constant 0 : index
    %32 = vector.load %arg3[%c7, %c0_10] : memref<9x128xf32, #tpu.memory_space<vmem>>, vector<1x128xf32>
    %33 = vector.broadcast %32 : vector<1x128xf32> to vector<16x128xf32>
    %34 = arith.mulf %31, %33 : vector<16x128xf32>
    %c123_i32 = arith.constant 123 : i32
    %35 = tpu.dynamic_rotate %3 by %c123_i32 dim 1 : vector<16x128xf32>, i32 -> vector<16x128xf32>
    %c8 = arith.constant 8 : index
    %c0_11 = arith.constant 0 : index
    %36 = vector.load %arg3[%c8, %c0_11] : memref<9x128xf32, #tpu.memory_space<vmem>>, vector<1x128xf32>
    %37 = vector.broadcast %36 : vector<1x128xf32> to vector<16x128xf32>
    %38 = arith.mulf %35, %37 : vector<16x128xf32>
    %39 = tpu.concatenate %7, %11, %15, %19, %22, %26, %30, %34, %38 in 0 : vector<16x128xf32>, vector<16x128xf32>, vector<16x128xf32>, vector<16x128xf32>, vector<16x128xf32>, vector<16x128xf32>, vector<16x128xf32>, vector<16x128xf32>, vector<16x128xf32> -> vector<144x128xf32>
    %40 = arith.truncf %39 : vector<144x128xf32> to vector<144x128xbf16>
    %c0_12 = arith.constant 0 : index
    %c0_13 = arith.constant 0 : index
    %41 = vector.load %arg1[%c0_12, %c0_13] : memref<64x128xbf16, #tpu.memory_space<vmem>>, vector<64x128xbf16>
    %42 = arith.extf %41 : vector<64x128xbf16> to vector<64x128xf32>
    %c0_14 = arith.constant 0 : index
    %c0_15 = arith.constant 0 : index
    %43 = vector.load %arg4[%c0_14, %c0_15] : memref<64x1xf32, #tpu.memory_space<vmem>>, vector<64x1xf32>
    %44 = vector.broadcast %43 : vector<64x1xf32> to vector<64x128xf32>
    %45 = arith.addf %42, %44 : vector<64x128xf32>
    %c0_16 = arith.constant 0 : index
    %c0_17 = arith.constant 0 : index
    %46 = vector.load %arg2[%c0_16, %c0_17] : memref<64x144xbf16, #tpu.memory_space<vmem>>, vector<64x144xbf16>
    %cst = arith.constant dense<0.000000e+00> : vector<64x128xf32>
    %47 = tpu.matmul %46, %40, %cst {dimension_numbers = #tpu.dot_dimension_numbers<[1], [0], [0], [1], [0, 0, 1, 1], [], []>} : vector<64x144xbf16>, vector<144x128xbf16>, vector<64x128xf32> -> vector<64x128xf32>
    %48 = arith.addf %45, %47 : vector<64x128xf32>
    %49 = vector.extract_strided_slice %48 {offsets = [0, 0], sizes = [16, 128], strides = [1, 1]} : vector<64x128xf32> to vector<16x128xf32>
    %50 = arith.negf %49 : vector<16x128xf32>
    %51 = math.exp %50 : vector<16x128xf32>
    %cst_18 = arith.constant 1.000000e+00 : f32
    %52 = vector.broadcast %cst_18 : f32 to vector<16x128xf32>
    %53 = arith.addf %52, %51 : vector<16x128xf32>
    %54 = arith.divf %52, %53 : vector<16x128xf32>
    %55 = vector.extract_strided_slice %48 {offsets = [16, 0], sizes = [16, 128], strides = [1, 1]} : vector<64x128xf32> to vector<16x128xf32>
    %56 = arith.negf %55 : vector<16x128xf32>
    %57 = math.exp %56 : vector<16x128xf32>
    %cst_19 = arith.constant 1.000000e+00 : f32
    %58 = vector.broadcast %cst_19 : f32 to vector<16x128xf32>
    %59 = arith.addf %58, %57 : vector<16x128xf32>
    %60 = arith.divf %58, %59 : vector<16x128xf32>
    %61 = vector.extract_strided_slice %48 {offsets = [32, 0], sizes = [16, 128], strides = [1, 1]} : vector<64x128xf32> to vector<16x128xf32>
    %62 = arith.negf %61 : vector<16x128xf32>
    %63 = math.exp %62 : vector<16x128xf32>
    %cst_20 = arith.constant 1.000000e+00 : f32
    %64 = vector.broadcast %cst_20 : f32 to vector<16x128xf32>
    %65 = arith.addf %64, %63 : vector<16x128xf32>
    %66 = arith.divf %64, %65 : vector<16x128xf32>
    %67 = vector.extract_strided_slice %48 {offsets = [48, 0], sizes = [16, 128], strides = [1, 1]} : vector<64x128xf32> to vector<16x128xf32>
    %68 = math.tanh %67 : vector<16x128xf32>
    %c0_21 = arith.constant 0 : index
    %c0_22 = arith.constant 0 : index
    %69 = vector.load %arg7[%c0_21, %c0_22] : memref<16x128xf32, #tpu.memory_space<vmem>>, vector<16x128xf32>
    %70 = arith.mulf %60, %69 : vector<16x128xf32>
    %71 = arith.mulf %54, %68 : vector<16x128xf32>
    %72 = arith.addf %70, %71 : vector<16x128xf32>
    %73 = math.tanh %72 : vector<16x128xf32>
    %74 = arith.mulf %66, %73 : vector<16x128xf32>
    %c0_23 = arith.constant 0 : index
    %c0_24 = arith.constant 0 : index
    %75 = vector.load %arg7[%c0_23, %c0_24] : memref<16x128xf32, #tpu.memory_space<vmem>>, vector<16x128xf32>
    tpu.vector_store %arg7[%c0_23, %c0_24], %72 {strides = array<i32>} : memref<16x128xf32, #tpu.memory_space<vmem>>, vector<16x128xf32>,
    %c0_25 = arith.constant 0 : index
    %c0_26 = arith.constant 0 : index
    %76 = vector.load %arg6[%c0_25, %c0_26] : memref<16x128xf32, #tpu.memory_space<vmem>>, vector<16x128xf32>
    tpu.vector_store %arg6[%c0_25, %c0_26], %74 {strides = array<i32>} : memref<16x128xf32, #tpu.memory_space<vmem>>, vector<16x128xf32>,
    %c0_27 = arith.constant 0 : index
    %c0_28 = arith.constant 0 : index
    %c0_29 = arith.constant 0 : index
    %77 = vector.load %arg5[%c0_27, %c0_28, %c0_29] : memref<1x16x128xf32, #tpu.memory_space<vmem>>, vector<1x16x128xf32>
    %78 = vector.shape_cast %77 : vector<1x16x128xf32> to vector<16x128xf32>
    %79 = vector.shape_cast %74 : vector<16x128xf32> to vector<1x16x128xf32>
    tpu.vector_store %arg5[%c0_27, %c0_28, %c0_29], %79 {strides = array<i32>} : memref<1x16x128xf32, #tpu.memory_space<vmem>>, vector<1x16x128xf32>,
    return
  }
  func.func @transform_0(%arg0: i32) -> (i32, i32) {
    %c0_i32 = arith.constant 0 : i32
    %c0_i32_0 = arith.constant 0 : i32
    return %c0_i32, %arg0 : i32, i32
  }
  func.func @transform_1(%arg0: i32) -> (i32, i32) {
    %c0_i32 = arith.constant 0 : i32
    %c0_i32_0 = arith.constant 0 : i32
    %c0_i32_1 = arith.constant 0 : i32
    return %c0_i32, %c0_i32_0 : i32, i32
  }
  func.func @transform_2(%arg0: i32) -> (i32, i32) {
    %c0_i32 = arith.constant 0 : i32
    %c0_i32_0 = arith.constant 0 : i32
    %c0_i32_1 = arith.constant 0 : i32
    return %c0_i32, %c0_i32_0 : i32, i32
  }
  func.func @transform_3(%arg0: i32) -> (i32, i32) {
    %c0_i32 = arith.constant 0 : i32
    %c0_i32_0 = arith.constant 0 : i32
    %c0_i32_1 = arith.constant 0 : i32
    return %c0_i32, %c0_i32_0 : i32, i32
  }
  func.func @transform_4(%arg0: i32) -> (i32, i32, i32) {
    %c0_i32 = arith.constant 0 : i32
    %c0_i32_0 = arith.constant 0 : i32
    %c0_i32_1 = arith.constant 0 : i32
    return %arg0, %c0_i32, %c0_i32_0 : i32, i32, i32
  }
}

</mosaic_0001>

<llo_original>
// kernel: encoder_forward.6
$region0: #{encoder_forward.6}
  #allocation0 [shape = 'u32[]', space=smem, size = 0x4, offset = 0x4, fixed_abs, tag = 'smem constant byte address 0x4 - core index']
  #allocation1 [shape = 'u32[144,128]{1,0:T(1,128)}', space=vmem, size = 0x12000, scoped, tag = 'internal scratch']
  %s0 = inlined_call_operand.vmem [shape: bf16[18,512], index: 0, kind: input, shape index: {}]
  %s1 = inlined_call_operand.vmem [shape: bf16[8,18], index: 1, kind: input, shape index: {}]
  %s2 = inlined_call_operand.vmem [shape: f32[8,1], index: 2, kind: input, shape index: {}]
  %s3 = inlined_call_operand.vmem [shape: f32[8,1], index: 3, kind: input, shape index: {}]
  %s4 = inlined_call_operand.vmem [shape: f32[8,512], index: 4, kind: output, shape index: {}]
  %s5 = sld [smem:[#allocation0]]
  $region26: #{encoder_forward.6} parent=0
    _
  %s7 = ssub.s32 1, %s5
  %s8 = scalar_select 0, %s7, %s5
  // Predicated region
  $region2: #{encoder_forward.6} parent=0 // pred_check
    _
  $region3: #{encoder_forward.6} parent=0 // pred_check_branch
    %10 = sbr.rel (0) target = $region5
  $region4: #{encoder_forward.6} parent=0 // pred_region
    _
  $region5: #{encoder_forward.6} parent=0 // pred_fallthru
    _
  // Predicated region
  $region6: #{encoder_forward.6} parent=0 // pred_check
    _
  $region7: #{encoder_forward.6} parent=0 // pred_check_branch
    %12 = sbr.rel (0) target = $region9
  $region8: #{encoder_forward.6} parent=0 // pred_region
    _
  $region9: #{encoder_forward.6} parent=0 // pred_fallthru
    _
  // Predicated region
  $region10: #{encoder_forward.6} parent=0 // pred_check
    _
  $region11: #{encoder_forward.6} parent=0 // pred_check_branch
    %14 = sbr.rel (0) target = $region13
  $region12: #{encoder_forward.6} parent=0 // pred_region
    _
  $region13: #{encoder_forward.6} parent=0 // pred_fallthru
    _
  // Predicated region
  $region14: #{encoder_forward.6} parent=0 // pred_check
    _
  $region15: #{encoder_forward.6} parent=0 // pred_check_branch
    %16 = sbr.rel (0) target = $region17
  $region16: #{encoder_forward.6} parent=0 // pred_region
    _
  $region17: #{encoder_forward.6} parent=0 // pred_fallthru
    _
  %v18 = vld [vmem:[%s1] sm:$0xf]
  %v19 = vld [vmem:[%s0] sm:$0xff]
  %v20 = vld [vmem:[%s0 + $0x8] sm:$0xff]
  %v21 = vld [vmem:[%s0 + $0x10] sm:$0xff]
  %v22 = vld [vmem:[%s0 + $0x18] sm:$0xff]
  %v23 = vld [vmem:[%s0 + $0x20] sm:$0x11]
  %v24 = vld [vmem:[%s0 + $0x28] sm:$0x11]
  %v31 = vunpack.c.l.b16 %v19
  %v32 = vunpack.c.h.b16 %v19
  %v33 = vunpack.c.l.b16 %v20
  %v34 = vunpack.c.h.b16 %v20
  %v35 = vunpack.c.l.b16 %v21
  %v36 = vunpack.c.h.b16 %v21
  %v37 = vunpack.c.l.b16 %v22
  %v38 = vunpack.c.h.b16 %v22
  %v39 = vunpack.c.l.b16 %v23
  %v40 = vunpack.c.h.b16 %v23
  %v41 = vunpack.c.l.b16 %v24
  %v42 = vunpack.c.h.b16 %v24
  %v43 = vpack.c.b16 %v35, %v31
  %v44 = vpack.c.b16 %v36, %v32
  %v45 = vpack.c.b16 %v37, %v33
  %v46 = vpack.c.b16 %v38, %v34
  %v47 = vpack.c.b16 %v39, %v39
  %v48 = vpack.c.b16 %v40, %v40
  %v49 = vpack.c.b16 %v41, %v41
  %v50 = vpack.c.b16 %v42, %v42
  %vm55 = vcmask 146432
  %v57 = vsel %vm55, %v18, 0
  %vm59 = vcmask 1040384
  %v61 = vsel %vm59, %v47, 0
  %v64 = vsel %vm59, %v48, 0
  %v67 = vsel %vm59, %v49, 0
  %v70 = vsel %vm59, %v50, 0
  %72 = vmatprep.subr.bf16.mxu0 %v44
  %73 = vmatpush1.bf16.msra.mxu0 %v43
  %74 = vmatprep.subr.bf16.mxu0 %v64
  %75 = vmatpush1.bf16.msra.mxu0 %v61
  %76 = vmatprep.subr.bf16.mxu0 0
  %77 = vmatpush1.bf16.msra.mxu0 0
  %78 = vmatprep.subr.bf16.mxu0 0
  %79 = vmatpush1.bf16.msra.mxu0 0
  %80 = vmatprep.subr.bf16.mxu0 0
  %81 = vmatpush1.bf16.msra.mxu0 0
  %82 = vmatprep.subr.bf16.mxu0 0
  %83 = vmatpush1.bf16.msra.mxu0 0
  %84 = vmatprep.subr.bf16.mxu0 0
  %85 = vmatpush1.bf16.msra.mxu0 0
  %86 = vmatprep.subr.bf16.mxu0 0
  %87 = vmatpush1.bf16.msra.mxu0 0
  %88 = vmatprep.subr.bf16.mxu0 0
  %89 = vmatpush1.bf16.msra.mxu0 0
  %90 = vmatprep.subr.bf16.mxu0 0
  %91 = vmatpush1.bf16.msra.mxu0 0
  %92 = vmatprep.subr.bf16.mxu0 0
  %93 = vmatpush1.bf16.msra.mxu0 0
  %94 = vmatprep.subr.bf16.mxu0 0
  %95 = vmatpush1.bf16.msra.mxu0 0
  %96 = vmatprep.subr.bf16.mxu0 0
  %97 = vmatpush1.bf16.msra.mxu0 0
  %98 = vmatprep.subr.bf16.mxu0 0
  %99 = vmatpush1.bf16.msra.mxu0 0
  %100 = vmatprep.subr.bf16.mxu0 0
  %101 = vmatpush1.bf16.msra.mxu0 0
  %102 = vmatprep.subr.bf16.mxu0 0
  %103 = vmatpush1.bf16.msra.mxu0 0
  %104 = vmatprep.mubr.bf16.mxu0 0
  %105 = vmatmul.mubr.bf16.gmra.mrb[0].mxu0 %v57
  %v106 = vpop.f32.mrb[0].mxu0
  %v107 = vadd.f32 0.0, %v106
  %v108 = vpop.f32.mrb[0].mxu0
  %v109 = vadd.f32 0.0, %v108
  %v110 = vpop.f32.mrb[0].mxu0
  %v111 = vpop.f32.mrb[0].mxu0
  %112 = vdwg.mxu0
  %113 = vmatprep.subr.bf16.mxu0 %v46
  %114 = vmatpush1.bf16.msra.mxu0 %v45
  %115 = vmatprep.subr.bf16.mxu0 %v70
  %116 = vmatpush1.bf16.msra.mxu0 %v67
  %117 = vmatprep.subr.bf16.mxu0 0
  %118 = vmatpush1.bf16.msra.mxu0 0
  %119 = vmatprep.subr.bf16.mxu0 0
  %120 = vmatpush1.bf16.msra.mxu0 0
  %121 = vmatprep.subr.bf16.mxu0 0
  %122 = vmatpush1.bf16.msra.mxu0 0
  %123 = vmatprep.subr.bf16.mxu0 0
  %124 = vmatpush1.bf16.msra.mxu0 0
  %125 = vmatprep.subr.bf16.mxu0 0
  %126 = vmatpush1.bf16.msra.mxu0 0
  %127 = vmatprep.subr.bf16.mxu0 0
  %128 = vmatpush1.bf16.msra.mxu0 0
  %129 = vmatprep.subr.bf16.mxu0 0
  %130 = vmatpush1.bf16.msra.mxu0 0
  %131 = vmatprep.subr.bf16.mxu0 0
  %132 = vmatpush1.bf16.msra.mxu0 0
  %133 = vmatprep.subr.bf16.mxu0 0
  %134 = vmatpush1.bf16.msra.mxu0 0
  %135 = vmatprep.subr.bf16.mxu0 0
  %136 = vmatpush1.bf16.msra.mxu0 0
  %137 = vmatprep.subr.bf16.mxu0 0
  %138 = vmatpush1.bf16.msra.mxu0 0
  %139 = vmatprep.subr.bf16.mxu0 0
  %140 = vmatpush1.bf16.msra.mxu0 0
  %141 = vmatprep.subr.bf16.mxu0 0
  %142 = vmatpush1.bf16.msra.mxu0 0
  %143 = vmatprep.subr.bf16.mxu0 0
  %144 = vmatpush1.bf16.msra.mxu0 0
  %145 = vmatprep.mubr.bf16.mxu0 0
  %146 = vmatmul.mubr.bf16.gmra.mrb[0].mxu0 %v57
  %v147 = vpop.f32.mrb[0].mxu0
  %v148 = vadd.f32 0.0, %v147
  %v149 = vpop.f32.mrb[0].mxu0
  %v150 = vadd.f32 0.0, %v149
  %v151 = vpop.f32.mrb[0].mxu0
  %v152 = vpop.f32.mrb[0].mxu0
  %153 = vdwg.mxu0
  %v154 = vadd.f32 %v107, %v109
  %v155 = vadd.f32 %v154, %v148
  %v156 = vadd.f32 %v155, %v150
  %157 = vadd.xlane.f32.xlu0 %v156
  %v158 = vpop.xlane.xlu0 %157
  %v159 = vmul.f32 %v158, 0.001953125
  %v160 = vsub.f32 %v107, %v159
  %v161 = vsub.f32 %v109, %v159
  %v162 = vsub.f32 %v148, %v159
  %v163 = vsub.f32 %v150, %v159
  %v164 = vmul.f32 %v160, %v160
  %v165 = vmul.f32 %v161, %v161
  %v166 = vmul.f32 %v162, %v162
  %v167 = vmul.f32 %v163, %v163
  %v168 = vadd.f32 %v164, %v165
  %v169 = vadd.f32 %v168, %v166
  %v170 = vadd.f32 %v169, %v167
  %171 = vadd.xlane.f32.xlu0 %v170
  %v172 = vpop.xlane.xlu0 %171
  %v173 = vmul.f32 %v172, 0.001953125
  %v174 = vld [vmem:[%s2] sm:$0xff]
  %v175 = vadd.f32 %v173, 1e-05
  %v176 = vrsqrt.pop %v175
  %v177 = vmul.f32 %v174, %v176
  %179 = vset.pattern.permute.xlu0 0
  %180 = vperm.xlu0 %179, %v177
  %v181 = vpop.permute.xlu0 %180
  %v183 = vmul.f32 %v160, %v181
  %v184 = vmul.f32 %v161, %v181
  %v185 = vmul.f32 %v162, %v181
  %v186 = vmul.f32 %v163, %v181
  %v187 = vld [vmem:[%s3] sm:$0xff]
  %189 = vset.pattern.permute.xlu0 0
  %190 = vperm.xlu0 %189, %v187
  %v191 = vpop.permute.xlu0 %190
  %v193 = vadd.f32 %v183, %v191
  %v194 = vadd.f32 %v184, %v191
  %v195 = vadd.f32 %v185, %v191
  %v196 = vadd.f32 %v186, %v191
  %vm197 = vcmp.ge.f32.partialorder %v193, 0.0
  %vm198 = vcmp.ge.f32.partialorder %v194, 0.0
  %vm199 = vcmp.ge.f32.partialorder %v195, 0.0
  %vm200 = vcmp.ge.f32.partialorder %v196, 0.0
  %v201 = vmul.f32 %v193, 0.01
  %v202 = vmul.f32 %v194, 0.01
  %v203 = vmul.f32 %v195, 0.01
  %v204 = vmul.f32 %v196, 0.01
  %v205 = vsel %vm197, %v193, %v201
  %v206 = vsel %vm198, %v194, %v202
  %v207 = vsel %vm199, %v195, %v203
  %v208 = vsel %vm200, %v196, %v204
  %209 = vst [vmem:[%s4] sm:$0xff] %v205
  %210 = vst [vmem:[%s4 + $0x8] sm:$0xff] %v206
  %211 = vst [vmem:[%s4 + $0x10] sm:$0xff] %v207
  %212 = vst [vmem:[%s4 + $0x18] sm:$0xff] %v208
  // Predicated region
  $region18: #{encoder_forward.6} parent=0 // pred_check
    _
  $region19: #{encoder_forward.6} parent=0 // pred_check_branch
    %214 = sbr.rel (0) target = $region21
  $region20: #{encoder_forward.6} parent=0 // pred_region
    _
  $region21: #{encoder_forward.6} parent=0 // pred_fallthru
    _
  // Predicated region
  $region22: #{encoder_forward.6} parent=0 // pred_check
    _
  $region23: #{encoder_forward.6} parent=0 // pred_check_branch
    %216 = sbr.rel (0) target = $region25
  $region24: #{encoder_forward.6} parent=0 // pred_region
    _
  $region25: #{encoder_forward.6} parent=0 // pred_fallthru
    _

// kernel: encoder_forward.7
$region0: #{encoder_forward.7}
  #allocation0 [shape = 'u32[]', space=smem, size = 0x4, offset = 0x4, fixed_abs, tag = 'smem constant byte address 0x4 - core index']
  #allocation1 [shape = 'u32[144,128]{1,0:T(1,128)}', space=vmem, size = 0x12000, scoped, tag = 'internal scratch']
  %s0 = inlined_call_operand.vmem [shape: bf16[72,512], index: 0, kind: input, shape index: {}]
  %s1 = inlined_call_operand.vmem [shape: bf16[32,72], index: 1, kind: input, shape index: {}]
  %s2 = inlined_call_operand.vmem [shape: bf16[32,512], index: 2, kind: output, shape index: {}]
  %s3 = sld [smem:[#allocation0]]
  $region18: #{encoder_forward.7} parent=0
    _
  %s5 = ssub.s32 1, %s3
  %s6 = scalar_select 0, %s5, %s3
  // Predicated region
  $region2: #{encoder_forward.7} parent=0 // pred_check
    _
  $region3: #{encoder_forward.7} parent=0 // pred_check_branch
    %8 = sbr.rel (0) target = $region5
  $region4: #{encoder_forward.7} parent=0 // pred_region
    _
  $region5: #{encoder_forward.7} parent=0 // pred_fallthru
    _
  // Predicated region
  $region6: #{encoder_forward.7} parent=0 // pred_check
    _
  $region7: #{encoder_forward.7} parent=0 // pred_check_branch
    %10 = sbr.rel (0) target = $region9
  $region8: #{encoder_forward.7} parent=0 // pred_region
    _
  $region9: #{encoder_forward.7} parent=0 // pred_fallthru
    _
  %v12 = vld [vmem:[%s1] sm:$0xf]
  %v13 = vld [vmem:[%s1 + $0x4] sm:$0xf]
  %v14 = vld [vmem:[%s1 + $0x8] sm:$0xf]
  %v15 = vld [vmem:[%s1 + $0xc] sm:$0xf]
  %v16 = vld [vmem:[%s0] sm:$0xff]
  %v17 = vld [vmem:[%s0 + $0x8] sm:$0xff]
  %v18 = vld [vmem:[%s0 + $0x10] sm:$0xff]
  %v19 = vld [vmem:[%s0 + $0x18] sm:$0xff]
  %v20 = vld [vmem:[%s0 + $0x20] sm:$0xff]
  %v21 = vld [vmem:[%s0 + $0x28] sm:$0xff]
  %v22 = vld [vmem:[%s0 + $0x30] sm:$0xff]
  %v23 = vld [vmem:[%s0 + $0x38] sm:$0xff]
  %v24 = vld [vmem:[%s0 + $0x40] sm:$0xff]
  %v25 = vld [vmem:[%s0 + $0x48] sm:$0xff]
  %v26 = vld [vmem:[%s0 + $0x50] sm:$0xff]
  %v27 = vld [vmem:[%s0 + $0x58] sm:$0xff]
  %v28 = vld [vmem:[%s0 + $0x60] sm:$0xff]
  %v29 = vld [vmem:[%s0 + $0x68] sm:$0xff]
  %v30 = vld [vmem:[%s0 + $0x70] sm:$0xff]
  %v31 = vld [vmem:[%s0 + $0x78] sm:$0xff]
  %v32 = vld [vmem:[%s0 + $0x80] sm:$0xff]
  %v33 = vld [vmem:[%s0 + $0x88] sm:$0xff]
  %v38 = vunpack.c.l.b16 %v12
  %v39 = vunpack.c.l.b16 %v13
  %v40 = vunpack.c.l.b16 %v14
  %v41 = vunpack.c.l.b16 %v15
  %v42 = vpack.c.b16 %v39, %v38
  %v43 = vpack.c.b16 %v41, %v40
  %v62 = vunpack.c.l.b16 %v16
  %v63 = vunpack.c.h.b16 %v16
  %v64 = vunpack.c.l.b16 %v17
  %v65 = vunpack.c.h.b16 %v17
  %v66 = vunpack.c.l.b16 %v18
  %v67 = vunpack.c.h.b16 %v18
  %v68 = vunpack.c.l.b16 %v19
  %v69 = vunpack.c.h.b16 %v19
  %v70 = vunpack.c.l.b16 %v20
  %v71 = vunpack.c.h.b16 %v20
  %v72 = vunpack.c.l.b16 %v21
  %v73 = vunpack.c.h.b16 %v21
  %v74 = vunpack.c.l.b16 %v22
  %v75 = vunpack.c.h.b16 %v22
  %v76 = vunpack.c.l.b16 %v23
  %v77 = vunpack.c.h.b16 %v23
  %v78 = vunpack.c.l.b16 %v24
  %v79 = vunpack.c.h.b16 %v24
  %v80 = vunpack.c.l.b16 %v25
  %v81 = vunpack.c.h.b16 %v25
  %v82 = vunpack.c.l.b16 %v26
  %v83 = vunpack.c.h.b16 %v26
  %v84 = vunpack.c.l.b16 %v27
  %v85 = vunpack.c.h.b16 %v27
  %v86 = vunpack.c.l.b16 %v28
  %v87 = vunpack.c.h.b16 %v28
  %v88 = vunpack.c.l.b16 %v29
  %v89 = vunpack.c.h.b16 %v29
  %v90 = vunpack.c.l.b16 %v30
  %v91 = vunpack.c.h.b16 %v30
  %v92 = vunpack.c.l.b16 %v31
  %v93 = vunpack.c.h.b16 %v31
  %v94 = vunpack.c.l.b16 %v32
  %v95 = vunpack.c.h.b16 %v32
  %v96 = vunpack.c.l.b16 %v33
  %v97 = vunpack.c.h.b16 %v33
  %v98 = vpack.c.b16 %v66, %v62
  %v99 = vpack.c.b16 %v67, %v63
  %v100 = vpack.c.b16 %v68, %v64
  %v101 = vpack.c.b16 %v69, %v65
  %v102 = vpack.c.b16 %v74, %v70
  %v103 = vpack.c.b16 %v75, %v71
  %v104 = vpack.c.b16 %v76, %v72
  %v105 = vpack.c.b16 %v77, %v73
  %v106 = vpack.c.b16 %v82, %v78
  %v107 = vpack.c.b16 %v83, %v79
  %v108 = vpack.c.b16 %v84, %v80
  %v109 = vpack.c.b16 %v85, %v81
  %v110 = vpack.c.b16 %v90, %v86
  %v111 = vpack.c.b16 %v91, %v87
  %v112 = vpack.c.b16 %v92, %v88
  %v113 = vpack.c.b16 %v93, %v89
  %v114 = vpack.c.b16 %v94, %v94
  %v115 = vpack.c.b16 %v95, %v95
  %v116 = vpack.c.b16 %v96, %v96
  %v117 = vpack.c.b16 %v97, %v97
  %vm134 = vcmask 588800
  %v136 = vsel %vm134, %v42, 0
  %v139 = vsel %vm134, %v43, 0
  %vm141 = vcmask 1043456
  %v143 = vsel %vm141, %v114, 0
  %v146 = vsel %vm141, %v115, 0
  %v149 = vsel %vm141, %v116, 0
  %v152 = vsel %vm141, %v117, 0
  %154 = vmatprep.subr.bf16.mxu0 %v99
  %155 = vmatpush1.bf16.msra.mxu0 %v98
  %156 = vmatprep.subr.bf16.mxu0 %v103
  %157 = vmatpush1.bf16.msra.mxu0 %v102
  %158 = vmatprep.subr.bf16.mxu0 %v107
  %159 = vmatpush1.bf16.msra.mxu0 %v106
  %160 = vmatprep.subr.bf16.mxu0 %v111
  %161 = vmatpush1.bf16.msra.mxu0 %v110
  %162 = vmatprep.subr.bf16.mxu0 %v146
  %163 = vmatpush1.bf16.msra.mxu0 %v143
  %164 = vmatprep.subr.bf16.mxu0 0
  %165 = vmatpush1.bf16.msra.mxu0 0
  %166 = vmatprep.subr.bf16.mxu0 0
  %167 = vmatpush1.bf16.msra.mxu0 0
  %168 = vmatprep.subr.bf16.mxu0 0
  %169 = vmatpush1.bf16.msra.mxu0 0
  %170 = vmatprep.subr.bf16.mxu0 0
  %171 = vmatpush1.bf16.msra.mxu0 0
  %172 = vmatprep.subr.bf16.mxu0 0
  %173 = vmatpush1.bf16.msra.mxu0 0
  %174 = vmatprep.subr.bf16.mxu0 0
  %175 = vmatpush1.bf16.msra.mxu0 0
  %176 = vmatprep.subr.bf16.mxu0 0
  %177 = vmatpush1.bf16.msra.mxu0 0
  %178 = vmatprep.subr.bf16.mxu0 0
  %179 = vmatpush1.bf16.msra.mxu0 0
  %180 = vmatprep.subr.bf16.mxu0 0
  %181 = vmatpush1.bf16.msra.mxu0 0
  %182 = vmatprep.subr.bf16.mxu0 0
  %183 = vmatpush1.bf16.msra.mxu0 0
  %184 = vmatprep.subr.bf16.mxu0 0
  %185 = vmatpush1.bf16.msra.mxu0 0
  %186 = vmatprep.mubr.bf16.mxu0 0
  %187 = vmatmul.mubr.bf16.gmra.mrb[0].mxu0 %v136
  %v188 = vpop.f32.mrb[0].mxu0
  %v189 = vadd.f32 0.0, %v188
  %v190 = vpop.f32.mrb[0].mxu0
  %v191 = vadd.f32 0.0, %v190
  %v192 = vpop.f32.mrb[0].mxu0
  %v193 = vadd.f32 0.0, %v192
  %v194 = vpop.f32.mrb[0].mxu0
  %v195 = vadd.f32 0.0, %v194
  %196 = vmatprep.mubr.bf16.mxu0 0
  %197 = vmatmul.mubr.bf16.gmra.mrb[0].mxu0 %v139
  %v198 = vpop.f32.mrb[0].mxu0
  %v199 = vadd.f32 0.0, %v198
  %v200 = vpop.f32.mrb[0].mxu0
  %v201 = vadd.f32 0.0, %v200
  %v202 = vpop.f32.mrb[0].mxu0
  %v203 = vadd.f32 0.0, %v202
  %v204 = vpop.f32.mrb[0].mxu0
  %v205 = vadd.f32 0.0, %v204
  %206 = vdwg.mxu0
  %207 = vmatprep.subr.bf16.mxu0 %v101
  %208 = vmatpush1.bf16.msra.mxu0 %v100
  %209 = vmatprep.subr.bf16.mxu0 %v105
  %210 = vmatpush1.bf16.msra.mxu0 %v104
  %211 = vmatprep.subr.bf16.mxu0 %v109
  %212 = vmatpush1.bf16.msra.mxu0 %v108
  %213 = vmatprep.subr.bf16.mxu0 %v113
  %214 = vmatpush1.bf16.msra.mxu0 %v112
  %215 = vmatprep.subr.bf16.mxu0 %v152
  %216 = vmatpush1.bf16.msra.mxu0 %v149
  %217 = vmatprep.subr.bf16.mxu0 0
  %218 = vmatpush1.bf16.msra.mxu0 0
  %219 = vmatprep.subr.bf16.mxu0 0
  %220 = vmatpush1.bf16.msra.mxu0 0
  %221 = vmatprep.subr.bf16.mxu0 0
  %222 = vmatpush1.bf16.msra.mxu0 0
  %223 = vmatprep.subr.bf16.mxu0 0
  %224 = vmatpush1.bf16.msra.mxu0 0
  %225 = vmatprep.subr.bf16.mxu0 0
  %226 = vmatpush1.bf16.msra.mxu0 0
  %227 = vmatprep.subr.bf16.mxu0 0
  %228 = vmatpush1.bf16.msra.mxu0 0
  %229 = vmatprep.subr.bf16.mxu0 0
  %230 = vmatpush1.bf16.msra.mxu0 0
  %231 = vmatprep.subr.bf16.mxu0 0
  %232 = vmatpush1.bf16.msra.mxu0 0
  %233 = vmatprep.subr.bf16.mxu0 0
  %234 = vmatpush1.bf16.msra.mxu0 0
  %235 = vmatprep.subr.bf16.mxu0 0
  %236 = vmatpush1.bf16.msra.mxu0 0
  %237 = vmatprep.subr.bf16.mxu0 0
  %238 = vmatpush1.bf16.msra.mxu0 0
  %239 = vmatprep.mubr.bf16.mxu0 0
  %240 = vmatmul.mubr.bf16.gmra.mrb[0].mxu0 %v136
  %v241 = vpop.f32.mrb[0].mxu0
  %v242 = vadd.f32 0.0, %v241
  %v243 = vpop.f32.mrb[0].mxu0
  %v244 = vadd.f32 0.0, %v243
  %v245 = vpop.f32.mrb[0].mxu0
  %v246 = vadd.f32 0.0, %v245
  %v247 = vpop.f32.mrb[0].mxu0
  %v248 = vadd.f32 0.0, %v247
  %249 = vmatprep.mubr.bf16.mxu0 0
  %250 = vmatmul.mubr.bf16.gmra.mrb[0].mxu0 %v139
  %v251 = vpop.f32.mrb[0].mxu0
  %v252 = vadd.f32 0.0, %v251
  %v253 = vpop.f32.mrb[0].mxu0
  %v254 = vadd.f32 0.0, %v253
  %v255 = vpop.f32.mrb[0].mxu0
  %v256 = vadd.f32 0.0, %v255
  %v257 = vpop.f32.mrb[0].mxu0
  %v258 = vadd.f32 0.0, %v257
  %259 = vdwg.mxu0
  %v260 = vpack.c.bf16 %v193, %v189
  %v261 = vpack.c.bf16 %v195, %v191
  %v262 = vpack.c.bf16 %v246, %v242
  %v263 = vpack.c.bf16 %v248, %v244
  %v264 = vpack.c.bf16 %v203, %v199
  %v265 = vpack.c.bf16 %v205, %v201
  %v266 = vpack.c.bf16 %v256, %v252
  %v267 = vpack.c.bf16 %v258, %v254
  %v276 = vunpack.c.l.b16 %v260
  %v277 = vunpack.c.l.b16 %v261
  %v278 = vunpack.c.l.b16 %v262
  %v279 = vunpack.c.l.b16 %v263
  %v280 = vunpack.c.h.b16 %v260
  %v281 = vunpack.c.h.b16 %v261
  %v282 = vunpack.c.h.b16 %v262
  %v283 = vunpack.c.h.b16 %v263
  %v284 = vunpack.c.l.b16 %v264
  %v285 = vunpack.c.l.b16 %v265
  %v286 = vunpack.c.l.b16 %v266
  %v287 = vunpack.c.l.b16 %v267
  %v288 = vunpack.c.h.b16 %v264
  %v289 = vunpack.c.h.b16 %v265
  %v290 = vunpack.c.h.b16 %v266
  %v291 = vunpack.c.h.b16 %v267
  %v292 = vpack.c.b16 %v277, %v276
  %v293 = vpack.c.b16 %v279, %v278
  %v294 = vpack.c.b16 %v281, %v280
  %v295 = vpack.c.b16 %v283, %v282
  %v296 = vpack.c.b16 %v285, %v284
  %v297 = vpack.c.b16 %v287, %v286
  %v298 = vpack.c.b16 %v289, %v288
  %v299 = vpack.c.b16 %v291, %v290
  %308 = vst [vmem:[%s2] sm:$0xff] %v292
  %309 = vst [vmem:[%s2 + $0x8] sm:$0xff] %v293
  %310 = vst [vmem:[%s2 + $0x10] sm:$0xff] %v294
  %311 = vst [vmem:[%s2 + $0x18] sm:$0xff] %v295
  %312 = vst [vmem:[%s2 + $0x20] sm:$0xff] %v296
  %313 = vst [vmem:[%s2 + $0x28] sm:$0xff] %v297
  %314 = vst [vmem:[%s2 + $0x30] sm:$0xff] %v298
  %315 = vst [vmem:[%s2 + $0x38] sm:$0xff] %v299
  // Predicated region
  $region10: #{encoder_forward.7} parent=0 // pred_check
    _
  $region11: #{encoder_forward.7} parent=0 // pred_check_branch
    %317 = sbr.rel (0) target = $region13
  $region12: #{encoder_forward.7} parent=0 // pred_region
    _
  $region13: #{encoder_forward.7} parent=0 // pred_fallthru
    _
  // Predicated region
  $region14: #{encoder_forward.7} parent=0 // pred_check
    _
  $region15: #{encoder_forward.7} parent=0 // pred_check_branch
    %319 = sbr.rel (0) target = $region17
  $region16: #{encoder_forward.7} parent=0 // pred_region
    _
  $region17: #{encoder_forward.7} parent=0 // pred_fallthru
    _

// kernel: encoder_forward.8
$region0: #{encoder_forward.8}
  #allocation0 [shape = 'u32[]', space=smem, size = 0x4, offset = 0x4, fixed_abs, tag = 'smem constant byte address 0x4 - core index']
  #allocation1 [shape = 'u32[144,128]{1,0:T(1,128)}', space=vmem, size = 0x12000, scoped, tag = 'internal scratch']
  #allocation2 [shape = 'f32[8,128]{1,0:T(8,128)}', space=vmem, size = 0x1000, scoped, tag = 'scratch operand']
  #allocation3 [shape = 'f32[8,128]{1,0:T(8,128)}', space=vmem, size = 0x1000, scoped, tag = 'scratch operand']
  %s0 = inlined_call_operand.vmem [shape: bf16[32,512], index: 0, kind: input, shape index: {}]
  %s1 = inlined_call_operand.vmem [shape: bf16[32,72], index: 1, kind: input, shape index: {}]
  %s2 = inlined_call_operand.vmem [shape: f32[9,128], index: 2, kind: input, shape index: {}]
  %s3 = inlined_call_operand.vmem [shape: f32[32,1], index: 3, kind: input, shape index: {}]
  %s4 = inlined_call_operand.vmem [shape: f32[4,8,128], index: 4, kind: output, shape index: {}]
  %s5 = sld [smem:[#allocation0]]
  $region94: #{encoder_forward.8} parent=0
    _
  %s7 = ssub.s32 1, %s5
  %s8 = scalar_select 0, %s7, %s5
  $region1: #{encoder_forward.8} parent=0
    #allocation4 [shape = 'u8[16384]{0}', space=vmem, size = 0x4000, scoped, tag = 'input window, operand 0']
    loop: start=0, step=1, limit=6
    $region2: #{encoder_forward.8} parent=1 // loop_pre_header
      _
    $region3: #{encoder_forward.8} parent=1 // loop_header
      %s10 = sphi 0, %s14
      %p11 = scmp.ge.s32.totalorder %s10, 6
      %s20 = sphi 0, %s22
      %s23 = sphi 0, %s20
      %s24 = sphi 0, %s23
      %s40 = sphi 0, %s24
      %s44 = sphi 0, %s44
      %s46 = sphi 0, %s44
      %s47 = sphi 0, %s46
      %s61 = sphi 0, %s47
      %s65 = sphi 0, %s65
      %s67 = sphi 0, %s65
      %s68 = sphi 0, %s67
      %s82 = sphi 0, %s68
      %s86 = sphi 0, %s86
      %s88 = sphi 0, %s86
      %s89 = sphi 0, %s88
      %s103 = sphi 0, %s89
      %s109 = sphi 0, %s111
      %s112 = sphi 0, %s109
      %s113 = sphi 0, %s112
      %s129 = sphi 0, %s113
    $region4: #{encoder_forward.8} parent=1 // loop_header_branch
      %13 = sbr.rel (%p11) target = $region8
    $region5: #{encoder_forward.8} parent=1 // loop_body
      %s15 = ssub.s32 %s10, 1
      %s16 = ssub.s32 %s10, 2
      %s17 = sadd.s32 %s10, 1
      %s18 = ssub.s32 %s10, %s17
      %p19 = scmp.eq.s32.totalorder %s18, 0
      %s21 = sadd.s32 %s20, 1
      %s22 = scalar_select %p19, %s20, %s21
      %p25 = pneg %p19
      %p26 = scmp.eq.s32.totalorder %s10, 3
      %p27 = por %p25, %p26
      %p28 = scmp.ne.s32.totalorder %s20, %s23
      %p29 = scmp.eq.s32.totalorder %s10, 0
      %p30 = por %p28, %p29
      %p31 = scmp.ne.s32.totalorder %s20, %s23
      %p32 = scmp.eq.s32.totalorder %s15, 3
      %p33 = por %p31, %p32
      %p34 = scmp.ne.s32.totalorder %s23, %s24
      %p35 = scmp.eq.s32.totalorder %s15, 0
      %p36 = por %p34, %p35
      %p37 = scmp.ne.s32.totalorder %s23, %s24
      %p38 = scmp.eq.s32.totalorder %s16, 3
      %p39 = por %p37, %p38
      %p41 = scmp.ne.s32.totalorder %s24, %s40
      %p42 = scmp.eq.s32.totalorder %s16, 0
      %p43 = por %p41, %p42
      %s45 = sadd.s32 %s44, 1
      %p48 = scmp.eq.s32.totalorder %s10, 3
      %p49 = scmp.ne.s32.totalorder %s44, %s46
      %p50 = scmp.eq.s32.totalorder %s10, 0
      %p51 = por %p49, %p50
      %p52 = scmp.ne.s32.totalorder %s44, %s46
      %p53 = scmp.eq.s32.totalorder %s15, 3
      %p54 = por %p52, %p53
      %p55 = scmp.ne.s32.totalorder %s46, %s47
      %p56 = scmp.eq.s32.totalorder %s15, 0
      %p57 = por %p55, %p56
      %p58 = scmp.ne.s32.totalorder %s46, %s47
      %p59 = scmp.eq.s32.totalorder %s16, 3
      %p60 = por %p58, %p59
      %p62 = scmp.ne.s32.totalorder %s47, %s61
      %p63 = scmp.eq.s32.totalorder %s16, 0
      %p64 = por %p62, %p63
      %s66 = sadd.s32 %s65, 1
      %p69 = scmp.eq.s32.totalorder %s10, 3
      %p70 = scmp.ne.s32.totalorder %s65, %s67
      %p71 = scmp.eq.s32.totalorder %s10, 0
      %p72 = por %p70, %p71
      %p73 = scmp.ne.s32.totalorder %s65, %s67
      %p74 = scmp.eq.s32.totalorder %s15, 3
      %p75 = por %p73, %p74
      %p76 = scmp.ne.s32.totalorder %s67, %s68
      %p77 = scmp.eq.s32.totalorder %s15, 0
      %p78 = por %p76, %p77
      %p79 = scmp.ne.s32.totalorder %s67, %s68
      %p80 = scmp.eq.s32.totalorder %s16, 3
      %p81 = por %p79, %p80
      %p83 = scmp.ne.s32.totalorder %s68, %s82
      %p84 = scmp.eq.s32.totalorder %s16, 0
      %p85 = por %p83, %p84
      %s87 = sadd.s32 %s86, 1
      %p90 = scmp.eq.s32.totalorder %s10, 3
      %p91 = scmp.ne.s32.totalorder %s86, %s88
      %p92 = scmp.eq.s32.totalorder %s10, 0
      %p93 = por %p91, %p92
      %p94 = scmp.ne.s32.totalorder %s86, %s88
      %p95 = scmp.eq.s32.totalorder %s15, 3
      %p96 = por %p94, %p95
      %p97 = scmp.ne.s32.totalorder %s88, %s89
      %p98 = scmp.eq.s32.totalorder %s15, 0
      %p99 = por %p97, %p98
      %p100 = scmp.ne.s32.totalorder %s88, %s89
      %p101 = scmp.eq.s32.totalorder %s16, 3
      %p102 = por %p100, %p101
      %p104 = scmp.ne.s32.totalorder %s89, %s103
      %p105 = scmp.eq.s32.totalorder %s16, 0
      %p106 = por %p104, %p105
      %s107 = ssub.s32 %s10, %s17
      %p108 = scmp.eq.s32.totalorder %s107, 0
      %s110 = sadd.s32 %s109, 1
      %s111 = scalar_select %p108, %s109, %s110
      %p114 = pneg %p108
      %p115 = scmp.eq.s32.totalorder %s10, 3
      %p116 = por %p114, %p115
      %p117 = scmp.ne.s32.totalorder %s109, %s112
      %p118 = scmp.eq.s32.totalorder %s10, 0
      %p119 = por %p117, %p118
      %p120 = scmp.ne.s32.totalorder %s109, %s112
      %p121 = scmp.eq.s32.totalorder %s15, 3
      %p122 = por %p120, %p121
      %p123 = scmp.ne.s32.totalorder %s112, %s113
      %p124 = scmp.eq.s32.totalorder %s15, 0
      %p125 = por %p123, %p124
      %p126 = scmp.ne.s32.totalorder %s112, %s113
      %p127 = scmp.eq.s32.totalorder %s16, 3
      %p128 = por %p126, %p127
      %p130 = scmp.ne.s32.totalorder %s113, %s129
      %p131 = scmp.eq.s32.totalorder %s16, 0
      %p132 = por %p130, %p131
      %p133 = scmp.le.s32.totalorder 1, %s10
      %p134 = scmp.lt.s32.totalorder %s10, 5
      %p135 = pnand %p133, %p134
      %p136 = pneg %p135
      // Predicated region
      $region9: #{encoder_forward.8} parent=5 // pred_check
        _
      $region10: #{encoder_forward.8} parent=5 // pred_check_branch
        %138 = sbr.rel (%p135) target = $region12
      $region11: #{encoder_forward.8} parent=5 // pred_region
        %s139 = ssub.s32 %s10, 1
        // Predicated region
        $region13: #{encoder_forward.8} parent=11 // pred_check
          %p140 = pneg %p57
        $region14: #{encoder_forward.8} parent=11 // pred_check_branch
          %142 = sbr.rel (%p140) target = $region16
        $region15: #{encoder_forward.8} parent=11 // pred_region
          _
        $region16: #{encoder_forward.8} parent=11 // pred_fallthru
          _
        // Predicated region
        $region17: #{encoder_forward.8} parent=11 // pred_check
          %p143 = pneg %p78
        $region18: #{encoder_forward.8} parent=11 // pred_check_branch
          %145 = sbr.rel (%p143) target = $region20
        $region19: #{encoder_forward.8} parent=11 // pred_region
          _
        $region20: #{encoder_forward.8} parent=11 // pred_fallthru
          _
        // Predicated region
        $region21: #{encoder_forward.8} parent=11 // pred_check
          %p146 = pneg %p99
        $region22: #{encoder_forward.8} parent=11 // pred_check_branch
          %148 = sbr.rel (%p146) target = $region24
        $region23: #{encoder_forward.8} parent=11 // pred_region
          _
        $region24: #{encoder_forward.8} parent=11 // pred_fallthru
          _
      $region12: #{encoder_forward.8} parent=5 // pred_fallthru
        _
      %p149 = scmp.lt.s32.totalorder %s10, 4
      // Predicated region
      $region25: #{encoder_forward.8} parent=5 // pred_check
        %p150 = pneg %p149
      $region26: #{encoder_forward.8} parent=5 // pred_check_branch
        %152 = sbr.rel (%p150) target = $region28
      $region27: #{encoder_forward.8} parent=5 // pred_region
        // Predicated region
        $region29: #{encoder_forward.8} parent=27 // pred_check
          %p153 = pneg %p30
        $region30: #{encoder_forward.8} parent=27 // pred_check_branch
          %155 = sbr.rel (%p153) target = $region32
        $region31: #{encoder_forward.8} parent=27 // pred_region
          %s156 = sand.u32 %s20, 1
          %s157 = sand.u32 %s20, 1
          %s158 = smul.addr %s157, 16
          %s159 = scalar_lea.vmem [#allocation4], %s158
          %s160 = smul.addr %s10, 4
          %s161 = scalar_lea.vmem %s0, %s160
          // Predicated region
          $region33: #{encoder_forward.8} parent=31 // pred_check
            _
          $region34: #{encoder_forward.8} parent=31 // pred_check_branch
            %163 = sbr.rel (0) target = $region36
          $region35: #{encoder_forward.8} parent=31 // pred_region
            // Predicated region
            $region37: #{encoder_forward.8} parent=35 // pred_check
              _
            $region38: #{encoder_forward.8} parent=35 // pred_check_branch
              %165 = sbr.rel target = $region40
            $region39: #{encoder_forward.8} parent=35 // pred_region
              // Predicated region
              $region52: #{encoder_forward.8} parent=39 // pred_check
                _
              $region53: #{encoder_forward.8} parent=39 // pred_check_branch
                %186 = sbr.rel (0) target = $region55
              $region54: #{encoder_forward.8} parent=39 // pred_region
                loop: start=0, step=1, limit=1
                $region56: #{encoder_forward.8} parent=54 // loop_pre_header
                  _
                $region57: #{encoder_forward.8} parent=54 // loop_header
                  %s188 = sphi 0, %s192
                  %p189 = scmp.ge.s32.totalorder %s188, 1
                  %s193 = sphi %s161, %s161
                  %s194 = sphi %s159, %s159
                $region58: #{encoder_forward.8} parent=54 // loop_header_branch
                  %191 = sbr.rel (%p189) target = $region62
                $region59: #{encoder_forward.8} parent=54 // loop_body
                  _
                $region60: #{encoder_forward.8} parent=54 // loop_footer
                  %s192 = sadd.s32 1, %s188
                $region61: #{encoder_forward.8} parent=54 // loop_footer_branch
                  %187 = sbr.rel target = $region57
                $region62: #{encoder_forward.8} parent=54 // loop_exit
                  _
                loop: start=0, step=1, limit=1
                $region63: #{encoder_forward.8} parent=54 // loop_pre_header
                  _
                $region64: #{encoder_forward.8} parent=54 // loop_header
                  %s197 = sphi 0, %s201
                  %p198 = scmp.ge.s32.totalorder %s197, 1
                  %s202 = sphi %s161, %s161
                  %s203 = sphi %s159, %s159
                $region65: #{encoder_forward.8} parent=54 // loop_header_branch
                  %200 = sbr.rel (%p198) target = $region69
                $region66: #{encoder_forward.8} parent=54 // loop_body
                  %v204 = vld [vmem:[%s202] sm:$0xf]
                  %205 = vst [vmem:[%s203] sm:$0xf] %v204
                  %v206 = vld [vmem:[%s202 + $0x10] sm:$0xf]
                  %207 = vst [vmem:[%s203 + $0x4] sm:$0xf] %v206
                  %v208 = vld [vmem:[%s202 + $0x20] sm:$0xf]
                  %209 = vst [vmem:[%s203 + $0x8] sm:$0xf] %v208
                  %v210 = vld [vmem:[%s202 + $0x30] sm:$0xf]
                  %211 = vst [vmem:[%s203 + $0xc] sm:$0xf] %v210
                $region67: #{encoder_forward.8} parent=54 // loop_footer
                  %s201 = sadd.s32 1, %s197
                $region68: #{encoder_forward.8} parent=54 // loop_footer_branch
                  %196 = sbr.rel target = $region64
                $region69: #{encoder_forward.8} parent=54 // loop_exit
                  _
              $region55: #{encoder_forward.8} parent=39 // pred_fallthru
                _
            $region40: #{encoder_forward.8} parent=35 // pred_fallthru
              _
            // Predicated region
            $region41: #{encoder_forward.8} parent=35 // pred_check
              _
            $region42: #{encoder_forward.8} parent=35 // pred_check_branch
              %167 = sbr.rel (0) target = $region44
            $region43: #{encoder_forward.8} parent=35 // pred_region
              loop: start=0, step=1, limit=1
              $region45: #{encoder_forward.8} parent=43 // loop_pre_header
                _
              $region46: #{encoder_forward.8} parent=43 // loop_header
                %s170 = sphi 0, %s174
                %p171 = scmp.ge.s32.totalorder %s170, 1
                %s175 = sphi %s161, %s161
                %s176 = sphi %s159, %s159
              $region47: #{encoder_forward.8} parent=43 // loop_header_branch
                %173 = sbr.rel (%p171) target = $region51
              $region48: #{encoder_forward.8} parent=43 // loop_body
                %v177 = vld [vmem:[%s175] sm:$0xf]
                %178 = vst [vmem:[%s176] sm:$0xf] %v177
                %v179 = vld [vmem:[%s175 + $0x10] sm:$0xf]
                %180 = vst [vmem:[%s176 + $0x4] sm:$0xf] %v179
                %v181 = vld [vmem:[%s175 + $0x20] sm:$0xf]
                %182 = vst [vmem:[%s176 + $0x8] sm:$0xf] %v181
                %v183 = vld [vmem:[%s175 + $0x30] sm:$0xf]
                %184 = vst [vmem:[%s176 + $0xc] sm:$0xf] %v183
              $region49: #{encoder_forward.8} parent=43 // loop_footer
                %s174 = sadd.s32 1, %s170
              $region50: #{encoder_forward.8} parent=43 // loop_footer_branch
                %169 = sbr.rel target = $region46
              $region51: #{encoder_forward.8} parent=43 // loop_exit
                _
            $region44: #{encoder_forward.8} parent=35 // pred_fallthru
              _
          $region36: #{encoder_forward.8} parent=31 // pred_fallthru
            _
          %212 = vnop
        $region32: #{encoder_forward.8} parent=27 // pred_fallthru
          _
      $region28: #{encoder_forward.8} parent=5 // pred_fallthru
        _
      %p213 = scmp.le.s32.totalorder 1, %s10
      %p214 = scmp.lt.s32.totalorder %s10, 5
      %p215 = pnand %p213, %p214
      %p216 = pneg %p215
      // Predicated region
      $region70: #{encoder_forward.8} parent=5 // pred_check
        _
      $region71: #{encoder_forward.8} parent=5 // pred_check_branch
        %218 = sbr.rel (%p215) target = $region73
      $region72: #{encoder_forward.8} parent=5 // pred_region
        %s219 = ssub.s32 %s10, 1
        %s220 = sand.u32 %s23, 1
        %s221 = sand.u32 %s23, 1
        %s222 = smul.addr %s221, 16
        %s223 = scalar_lea.vmem [#allocation4], %s222
        // Predicated region
        $region74: #{encoder_forward.8} parent=72 // pred_check
          %p224 = pneg %p36
        $region75: #{encoder_forward.8} parent=72 // pred_check_branch
          %226 = sbr.rel (%p224) target = $region77
        $region76: #{encoder_forward.8} parent=72 // pred_region
          _
        $region77: #{encoder_forward.8} parent=72 // pred_fallthru
          _
        %s227 = sand.u32 %s23, 1
        %s228 = sand.u32 %s23, 1
        %s229 = smul.addr %s228, 16
        %s230 = scalar_lea.vmem [#allocation4], %s229
        %p231 = pneg %p36
        %p232 = pneg %p33
        %p233 = pneg %p57
        %p234 = pneg %p54
        %p235 = pneg %p78
        %p236 = pneg %p75
        %p237 = pneg %p99
        %p238 = pneg %p96
        %p239 = pneg %p125
        %p240 = pneg %p122
        %p241 = scmp.lt.s32.totalorder %s15, 3
        %s242 = scalar_select %p241, %s15, 3
        %s243 = smul.addr %s242, 8
        %s244 = scalar_lea.vmem %s4, %s243
        %p245 = scmp.lt.s32.totalorder %s15, 3
        %s246 = scalar_select %p245, %s15, 3
        %s247 = smul.addr %s246, 8
        %s248 = scalar_lea.vmem %s4, %s247
        %p250 = scmp.eq.s32.totalorder %s15, 0
        // Predicated region
        $region78: #{encoder_forward.8} parent=72 // pred_check
          %p251 = pneg %p250
        $region79: #{encoder_forward.8} parent=72 // pred_check_branch
          %253 = sbr.rel (%p251) target = $region81
        $region80: #{encoder_forward.8} parent=72 // pred_region
          %254 = vst [vmem:[#allocation2] sm:$0xff] 0.0
          %255 = vst [vmem:[#allocation3] sm:$0xff] 0.0
        $region81: #{encoder_forward.8} parent=72 // pred_fallthru
          _
        %v256 = vld [vmem:[#allocation2] sm:$0xff]
        %257 = vrot.lane.b32.xlu0 %v256, 9
        %v258 = vpop.permute.xlu0 %257
        %v259 = vld [vmem:[%s2] sm:$0x1]
        %v260 = vlaneseq
        %v261 = vshrl.u32 %v260, 7
        %v262 = vsub.s32 0, %v261
        %v263 = vrot.slane %v259, %v262
        %v264 = vmul.f32 %v258, %v263
        %265 = vrot.lane.b32.xlu0 %v256, 8
        %v266 = vpop.permute.xlu0 %265
        %v267 = vld [vmem:[%s2 + $0x1] sm:$0x1]
        %v268 = vlaneseq
        %v269 = vshrl.u32 %v268, 7
        %v270 = vsub.s32 0, %v269
        %v271 = vrot.slane %v267, %v270
        %v272 = vmul.f32 %v266, %v271
        %273 = vrot.lane.b32.xlu0 %v256, 7
        %v274 = vpop.permute.xlu0 %273
        %v275 = vld [vmem:[%s2 + $0x2] sm:$0x1]
        %v276 = vlaneseq
        %v277 = vshrl.u32 %v276, 7
        %v278 = vsub.s32 0, %v277
        %v279 = vrot.slane %v275, %v278
        %v280 = vmul.f32 %v274, %v279
        %281 = vrot.lane.b32.xlu0 %v256, 1
        %v282 = vpop.permute.xlu0 %281
        %v283 = vld [vmem:[%s2 + $0x3] sm:$0x1]
        %v284 = vlaneseq
        %v285 = vshrl.u32 %v284, 7
        %v286 = vsub.s32 0, %v285
        %v287 = vrot.slane %v283, %v286
        %v288 = vmul.f32 %v282, %v287
        %v289 = vld [vmem:[%s2 + $0x4] sm:$0x1]
        %v290 = vlaneseq
        %v291 = vshrl.u32 %v290, 7
        %v292 = vsub.s32 0, %v291
        %v293 = vrot.slane %v289, %v292
        %v294 = vmul.f32 %v256, %v293
        %295 = vrot.lane.b32.xlu0 %v256, 127
        %v296 = vpop.permute.xlu0 %295
        %v297 = vld [vmem:[%s2 + $0x5] sm:$0x1]
        %v298 = vlaneseq
        %v299 = vshrl.u32 %v298, 7
        %v300 = vsub.s32 0, %v299
        %v301 = vrot.slane %v297, %v300
        %v302 = vmul.f32 %v296, %v301
        %303 = vrot.lane.b32.xlu0 %v256, 121
        %v304 = vpop.permute.xlu0 %303
        %v305 = vld [vmem:[%s2 + $0x6] sm:$0x1]
        %v306 = vlaneseq
        %v307 = vshrl.u32 %v306, 7
        %v308 = vsub.s32 0, %v307
        %v309 = vrot.slane %v305, %v308
        %v310 = vmul.f32 %v304, %v309
        %311 = vrot.lane.b32.xlu0 %v256, 120
        %v312 = vpop.permute.xlu0 %311
        %v313 = vld [vmem:[%s2 + $0x7] sm:$0x1]
        %v314 = vlaneseq
        %v315 = vshrl.u32 %v314, 7
        %v316 = vsub.s32 0, %v315
        %v317 = vrot.slane %v313, %v316
        %v318 = vmul.f32 %v312, %v317
        %319 = vrot.lane.b32.xlu0 %v256, 119
        %v320 = vpop.permute.xlu0 %319
        %v321 = vld [vmem:[%s2 + $0x8] sm:$0x1]
        %v322 = vlaneseq
        %v323 = vshrl.u32 %v322, 7
        %v324 = vsub.s32 0, %v323
        %v325 = vrot.slane %v321, %v324
        %v326 = vmul.f32 %v320, %v325
        %v327 = vpack.c.bf16 %v272, %v264
        %v328 = vpack.c.bf16 %v288, %v280
        %v329 = vpack.c.bf16 %v302, %v294
        %v330 = vpack.c.bf16 %v318, %v310
        %v331 = vpack.c.bf16 %v326, %v326
        %v332 = vld [vmem:[%s223] sm:$0xf]
        %v333 = vld [vmem:[%s223 + $0x4] sm:$0xf]
        %v334 = vld [vmem:[%s223 + $0x8] sm:$0xf]
        %v335 = vld [vmem:[%s223 + $0xc] sm:$0xf]
        %v336 = vunpack.c.l.bf16 %v332
        %v337 = vunpack.c.l.bf16 %v333
        %v338 = vunpack.c.l.bf16 %v334
        %v339 = vunpack.c.l.bf16 %v335
        %v340 = vld [vmem:[%s3] sm:$0xff]
        %v341 = vld [vmem:[%s3 + $0x8] sm:$0xff]
        %v342 = vld [vmem:[%s3 + $0x10] sm:$0xff]
        %v343 = vld [vmem:[%s3 + $0x18] sm:$0xff]
        %345 = vset.pattern.permute.xlu0 0
        %346 = vperm.xlu0 %345, %v340
        %v347 = vpop.permute.xlu0 %346
        %350 = vset.pattern.permute.xlu0 0
        %351 = vperm.xlu0 %350, %v341
        %v352 = vpop.permute.xlu0 %351
        %355 = vset.pattern.permute.xlu0 0
        %356 = vperm.xlu0 %355, %v342
        %v357 = vpop.permute.xlu0 %356
        %360 = vset.pattern.permute.xlu0 0
        %361 = vperm.xlu0 %360, %v343
        %v362 = vpop.permute.xlu0 %361
        %v364 = vadd.f32 %v336, %v347
        %v365 = vadd.f32 %v337, %v352
        %v366 = vadd.f32 %v338, %v357
        %v367 = vadd.f32 %v339, %v362
        %v368 = vld [vmem:[%s1] sm:$0xf]
        %v369 = vld [vmem:[%s1 + $0x4] sm:$0xf]
        %v370 = vld [vmem:[%s1 + $0x8] sm:$0xf]
        %v371 = vld [vmem:[%s1 + $0xc] sm:$0xf]
        %v376 = vunpack.c.l.b16 %v368
        %v377 = vunpack.c.l.b16 %v369
        %v378 = vunpack.c.l.b16 %v370
        %v379 = vunpack.c.l.b16 %v371
        %v380 = vpack.c.b16 %v377, %v376
        %v381 = vpack.c.b16 %v379, %v378
        %vm382 = vcmask 588800
        %v384 = vsel %vm382, %v380, 0
        %v387 = vsel %vm382, %v381, 0
        %vm389 = vcmask 1043456
        %v391 = vsel %vm389, %v331, 0
        %393 = vmatprep.subr.bf16.mxu0 0
        %394 = vmatpush1.bf16.msra.mxu0 %v327
        %395 = vmatprep.subr.bf16.mxu0 0
        %396 = vmatpush1.bf16.msra.mxu0 %v328
        %397 = vmatprep.subr.bf16.mxu0 0
        %398 = vmatpush1.bf16.msra.mxu0 %v329
        %399 = vmatprep.subr.bf16.mxu0 0
        %400 = vmatpush1.bf16.msra.mxu0 %v330
        %401 = vmatprep.subr.bf16.mxu0 0
        %402 = vmatpush1.bf16.msra.mxu0 %v391
        %403 = vmatprep.subr.bf16.mxu0 0
        %404 = vmatpush1.bf16.msra.mxu0 0
        %405 = vmatprep.subr.bf16.mxu0 0
        %406 = vmatpush1.bf16.msra.mxu0 0
        %407 = vmatprep.subr.bf16.mxu0 0
        %408 = vmatpush1.bf16.msra.mxu0 0
        %409 = vmatprep.subr.bf16.mxu0 0
        %410 = vmatpush1.bf16.msra.mxu0 0
        %411 = vmatprep.subr.bf16.mxu0 0
        %412 = vmatpush1.bf16.msra.mxu0 0
        %413 = vmatprep.subr.bf16.mxu0 0
        %414 = vmatpush1.bf16.msra.mxu0 0
        %415 = vmatprep.subr.bf16.mxu0 0
        %416 = vmatpush1.bf16.msra.mxu0 0
        %417 = vmatprep.subr.bf16.mxu0 0
        %418 = vmatpush1.bf16.msra.mxu0 0
        %419 = vmatprep.subr.bf16.mxu0 0
        %420 = vmatpush1.bf16.msra.mxu0 0
        %421 = vmatprep.subr.bf16.mxu0 0
        %422 = vmatpush1.bf16.msra.mxu0 0
        %423 = vmatprep.subr.bf16.mxu0 0
        %424 = vmatpush1.bf16.msra.mxu0 0
        %425 = vmatprep.mubr.bf16.mxu0 0
        %426 = vmatmul.mubr.bf16.gmra.mrb[0].mxu0 %v384
        %v427 = vpop.f32.mrb[0].mxu0
        %v428 = vadd.f32 0.0, %v427
        %v429 = vpop.f32.mrb[0].mxu0
        %v430 = vpop.f32.mrb[0].mxu0
        %v431 = vadd.f32 0.0, %v430
        %v432 = vpop.f32.mrb[0].mxu0
        %433 = vmatprep.mubr.bf16.mxu0 0
        %434 = vmatmul.mubr.bf16.gmra.mrb[0].mxu0 %v387
        %v435 = vpop.f32.mrb[0].mxu0
        %v436 = vadd.f32 0.0, %v435
        %v437 = vpop.f32.mrb[0].mxu0
        %v438 = vpop.f32.mrb[0].mxu0
        %v439 = vadd.f32 0.0, %v438
        %v440 = vpop.f32.mrb[0].mxu0
        %441 = vdwg.mxu0
        %v442 = vadd.f32 %v364, %v428
        %v443 = vadd.f32 %v365, %v431
        %v444 = vadd.f32 %v366, %v436
        %v445 = vadd.f32 %v367, %v439
        %v446 = vxor.u32 %v442, 2147483648
        %v447 = vmul.f32 %v446, 1.442695
        %v448 = vpow.pop %v447
        %v449 = vadd.f32 %v448, 1.0
        %v450 = vrcp.pop %v449
        %v451 = vmul.f32 1.0, %v450
        %v452 = vxor.u32 %v443, 2147483648
        %v453 = vmul.f32 %v452, 1.442695
        %v454 = vpow.pop %v453
        %v455 = vadd.f32 %v454, 1.0
        %v456 = vrcp.pop %v455
        %v457 = vmul.f32 1.0, %v456
        %v458 = vxor.u32 %v444, 2147483648
        %v459 = vmul.f32 %v458, 1.442695
        %v460 = vpow.pop %v459
        %v461 = vadd.f32 %v460, 1.0
        %v462 = vrcp.pop %v461
        %v463 = vmul.f32 1.0, %v462
        %v464 = vtanh.pop %v445
        %v465 = vld [vmem:[#allocation3] sm:$0xff]
        %v466 = vmul.f32 %v457, %v465
        %v467 = vmul.f32 %v451, %v464
        %v468 = vadd.f32 %v466, %v467
        %v469 = vtanh.pop %v468
        %v470 = vmul.f32 %v463, %v469
        %471 = vst [vmem:[#allocation3] sm:$0xff] %v468
        %472 = vst [vmem:[#allocation2] sm:$0xff] %v470
        %473 = vst [vmem:[%s248] sm:$0xff] %v470
        %p474 = scmp.lt.s32.totalorder %s15, 3
        %s475 = scalar_select %p474, %s15, 3
        %s476 = smul.addr %s475, 8
        %s477 = scalar_lea.vmem %s4, %s476
        // Predicated region
        $region82: #{encoder_forward.8} parent=72 // pred_check
          %p478 = pneg %p122
        $region83: #{encoder_forward.8} parent=72 // pred_check_branch
          %480 = sbr.rel (%p478) target = $region85
        $region84: #{encoder_forward.8} parent=72 // pred_region
          _
        $region85: #{encoder_forward.8} parent=72 // pred_fallthru
          _
      $region73: #{encoder_forward.8} parent=5 // pred_fallthru
        _
      %p481 = scmp.le.s32.totalorder 2, %s10
      // Predicated region
      $region86: #{encoder_forward.8} parent=5 // pred_check
        %p482 = pneg %p481
      $region87: #{encoder_forward.8} parent=5 // pred_check_branch
        %484 = sbr.rel (%p482) target = $region89
      $region88: #{encoder_forward.8} parent=5 // pred_region
        %s485 = ssub.s32 %s10, 2
        // Predicated region
        $region90: #{encoder_forward.8} parent=88 // pred_check
          %p486 = pneg %p128
        $region91: #{encoder_forward.8} parent=88 // pred_check_branch
          %488 = sbr.rel (%p486) target = $region93
        $region92: #{encoder_forward.8} parent=88 // pred_region
          %p489 = scmp.lt.s32.totalorder %s16, 3
          %s490 = scalar_select %p489, %s16, 3
          %s491 = smul.addr %s490, 8
          %s492 = scalar_lea.vmem %s4, %s491
        $region93: #{encoder_forward.8} parent=88 // pred_fallthru
          _
      $region89: #{encoder_forward.8} parent=5 // pred_fallthru
        _
    $region6: #{encoder_forward.8} parent=1 // loop_footer
      %s14 = sadd.s32 1, %s10
    $region7: #{encoder_forward.8} parent=1 // loop_footer_branch
      %9 = sbr.rel target = $region3
    $region8: #{encoder_forward.8} parent=1 // loop_exit
      _

// kernel: encoder_forward.9
$region0: #{encoder_forward.9}
  #allocation0 [shape = 'u32[]', space=smem, size = 0x4, offset = 0x4, fixed_abs, tag = 'smem constant byte address 0x4 - core index']
  #allocation1 [shape = 'u32[144,128]{1,0:T(1,128)}', space=vmem, size = 0x12000, scoped, tag = 'internal scratch']
  %s0 = inlined_call_operand.vmem [shape: bf16[72,128], index: 0, kind: input, shape index: {}]
  %s1 = inlined_call_operand.vmem [shape: bf16[16,72], index: 1, kind: input, shape index: {}]
  %s2 = inlined_call_operand.vmem [shape: f32[16,1], index: 2, kind: input, shape index: {}]
  %s3 = inlined_call_operand.vmem [shape: f32[16,1], index: 3, kind: input, shape index: {}]
  %s4 = inlined_call_operand.vmem [shape: f32[16,128], index: 4, kind: output, shape index: {}]
  %s5 = sld [smem:[#allocation0]]
  $region26: #{encoder_forward.9} parent=0
    _
  %s7 = ssub.s32 1, %s5
  %s8 = scalar_select 0, %s7, %s5
  // Predicated region
  $region2: #{encoder_forward.9} parent=0 // pred_check
    _
  $region3: #{encoder_forward.9} parent=0 // pred_check_branch
    %10 = sbr.rel (0) target = $region5
  $region4: #{encoder_forward.9} parent=0 // pred_region
    _
  $region5: #{encoder_forward.9} parent=0 // pred_fallthru
    _
  // Predicated region
  $region6: #{encoder_forward.9} parent=0 // pred_check
    _
  $region7: #{encoder_forward.9} parent=0 // pred_check_branch
    %12 = sbr.rel (0) target = $region9
  $region8: #{encoder_forward.9} parent=0 // pred_region
    _
  $region9: #{encoder_forward.9} parent=0 // pred_fallthru
    _
  // Predicated region
  $region10: #{encoder_forward.9} parent=0 // pred_check
    _
  $region11: #{encoder_forward.9} parent=0 // pred_check_branch
    %14 = sbr.rel (0) target = $region13
  $region12: #{encoder_forward.9} parent=0 // pred_region
    _
  $region13: #{encoder_forward.9} parent=0 // pred_fallthru
    _
  // Predicated region
  $region14: #{encoder_forward.9} parent=0 // pred_check
    _
  $region15: #{encoder_forward.9} parent=0 // pred_check_branch
    %16 = sbr.rel (0) target = $region17
  $region16: #{encoder_forward.9} parent=0 // pred_region
    _
  $region17: #{encoder_forward.9} parent=0 // pred_fallthru
    _
  %v18 = vld [vmem:[%s1] sm:$0xf]
  %v19 = vld [vmem:[%s1 + $0x4] sm:$0xf]
  %v20 = vld [vmem:[%s0] sm:$0xf]
  %v21 = vld [vmem:[%s0 + $0x4] sm:$0xf]
  %v22 = vld [vmem:[%s0 + $0x8] sm:$0xf]
  %v23 = vld [vmem:[%s0 + $0xc] sm:$0xf]
  %v24 = vld [vmem:[%s0 + $0x10] sm:$0xf]
  %v25 = vld [vmem:[%s0 + $0x14] sm:$0xf]
  %v26 = vld [vmem:[%s0 + $0x18] sm:$0xf]
  %v27 = vld [vmem:[%s0 + $0x1c] sm:$0xf]
  %v28 = vld [vmem:[%s0 + $0x20] sm:$0xf]
  %v31 = vunpack.c.l.b16 %v18
  %v32 = vunpack.c.l.b16 %v19
  %v33 = vpack.c.b16 %v32, %v31
  %v43 = vunpack.c.l.b16 %v20
  %v44 = vunpack.c.l.b16 %v21
  %v45 = vunpack.c.l.b16 %v22
  %v46 = vunpack.c.l.b16 %v23
  %v47 = vunpack.c.l.b16 %v24
  %v48 = vunpack.c.l.b16 %v25
  %v49 = vunpack.c.l.b16 %v26
  %v50 = vunpack.c.l.b16 %v27
  %v51 = vunpack.c.l.b16 %v28
  %v52 = vpack.c.b16 %v44, %v43
  %v53 = vpack.c.b16 %v46, %v45
  %v54 = vpack.c.b16 %v48, %v47
  %v55 = vpack.c.b16 %v50, %v49
  %v56 = vpack.c.b16 %v51, %v51
  %vm61 = vcmask 588800
  %v63 = vsel %vm61, %v33, 0
  %vm65 = vcmask 1043456
  %v67 = vsel %vm65, %v56, 0
  %69 = vmatprep.subr.bf16.mxu0 0
  %70 = vmatpush1.bf16.msra.mxu0 %v52
  %71 = vmatprep.subr.bf16.mxu0 0
  %72 = vmatpush1.bf16.msra.mxu0 %v53
  %73 = vmatprep.subr.bf16.mxu0 0
  %74 = vmatpush1.bf16.msra.mxu0 %v54
  %75 = vmatprep.subr.bf16.mxu0 0
  %76 = vmatpush1.bf16.msra.mxu0 %v55
  %77 = vmatprep.subr.bf16.mxu0 0
  %78 = vmatpush1.bf16.msra.mxu0 %v67
  %79 = vmatprep.subr.bf16.mxu0 0
  %80 = vmatpush1.bf16.msra.mxu0 0
  %81 = vmatprep.subr.bf16.mxu0 0
  %82 = vmatpush1.bf16.msra.mxu0 0
  %83 = vmatprep.subr.bf16.mxu0 0
  %84 = vmatpush1.bf16.msra.mxu0 0
  %85 = vmatprep.subr.bf16.mxu0 0
  %86 = vmatpush1.bf16.msra.mxu0 0
  %87 = vmatprep.subr.bf16.mxu0 0
  %88 = vmatpush1.bf16.msra.mxu0 0
  %89 = vmatprep.subr.bf16.mxu0 0
  %90 = vmatpush1.bf16.msra.mxu0 0
  %91 = vmatprep.subr.bf16.mxu0 0
  %92 = vmatpush1.bf16.msra.mxu0 0
  %93 = vmatprep.subr.bf16.mxu0 0
  %94 = vmatpush1.bf16.msra.mxu0 0
  %95 = vmatprep.subr.bf16.mxu0 0
  %96 = vmatpush1.bf16.msra.mxu0 0
  %97 = vmatprep.subr.bf16.mxu0 0
  %98 = vmatpush1.bf16.msra.mxu0 0
  %99 = vmatprep.subr.bf16.mxu0 0
  %100 = vmatpush1.bf16.msra.mxu0 0
  %101 = vmatprep.mubr.bf16.mxu0 0
  %102 = vmatmul.mubr.bf16.gmra.mrb[0].mxu0 %v63
  %v103 = vpop.f32.mrb[0].mxu0
  %v104 = vadd.f32 0.0, %v103
  %v105 = vpop.f32.mrb[0].mxu0
  %v106 = vpop.f32.mrb[0].mxu0
  %v107 = vadd.f32 0.0, %v106
  %v108 = vpop.f32.mrb[0].mxu0
  %109 = vdwg.mxu0
  %110 = vadd.xlane.f32.xlu0 %v104
  %v111 = vpop.xlane.xlu0 %110
  %112 = vadd.xlane.f32.xlu0 %v107
  %v113 = vpop.xlane.xlu0 %112
  %v114 = vmul.f32 %v111, 0.0078125
  %v115 = vmul.f32 %v113, 0.0078125
  %v116 = vsub.f32 %v104, %v114
  %v117 = vsub.f32 %v107, %v115
  %v118 = vmul.f32 %v116, %v116
  %v119 = vmul.f32 %v117, %v117
  %120 = vadd.xlane.f32.xlu0 %v118
  %v121 = vpop.xlane.xlu0 %120
  %122 = vadd.xlane.f32.xlu0 %v119
  %v123 = vpop.xlane.xlu0 %122
  %v124 = vmul.f32 %v121, 0.0078125
  %v125 = vmul.f32 %v123, 0.0078125
  %v126 = vld [vmem:[%s2] sm:$0xff]
  %v127 = vld [vmem:[%s2 + $0x8] sm:$0xff]
  %v128 = vadd.f32 %v124, 1e-05
  %v129 = vadd.f32 %v125, 1e-05
  %v130 = vrsqrt.pop %v128
  %v131 = vrsqrt.pop %v129
  %v132 = vmul.f32 %v126, %v130
  %v133 = vmul.f32 %v127, %v131
  %135 = vset.pattern.permute.xlu0 0
  %136 = vperm.xlu0 %135, %v132
  %v137 = vpop.permute.xlu0 %136
  %140 = vset.pattern.permute.xlu0 0
  %141 = vperm.xlu0 %140, %v133
  %v142 = vpop.permute.xlu0 %141
  %v144 = vmul.f32 %v116, %v137
  %v145 = vmul.f32 %v117, %v142
  %v146 = vld [vmem:[%s3] sm:$0xff]
  %v147 = vld [vmem:[%s3 + $0x8] sm:$0xff]
  %149 = vset.pattern.permute.xlu0 0
  %150 = vperm.xlu0 %149, %v146
  %v151 = vpop.permute.xlu0 %150
  %154 = vset.pattern.permute.xlu0 0
  %155 = vperm.xlu0 %154, %v147
  %v156 = vpop.permute.xlu0 %155
  %v158 = vadd.f32 %v144, %v151
  %v159 = vadd.f32 %v145, %v156
  %vm160 = vcmp.ge.f32.partialorder %v158, 0.0
  %vm161 = vcmp.ge.f32.partialorder %v159, 0.0
  %v162 = vmul.f32 %v158, 0.01
  %v163 = vmul.f32 %v159, 0.01
  %v164 = vsel %vm160, %v158, %v162
  %v165 = vsel %vm161, %v159, %v163
  %166 = vst [vmem:[%s4] sm:$0xff] %v164
  %167 = vst [vmem:[%s4 + $0x8] sm:$0xff] %v165
  // Predicated region
  $region18: #{encoder_forward.9} parent=0 // pred_check
    _
  $region19: #{encoder_forward.9} parent=0 // pred_check_branch
    %169 = sbr.rel (0) target = $region21
  $region20: #{encoder_forward.9} parent=0 // pred_region
    _
  $region21: #{encoder_forward.9} parent=0 // pred_fallthru
    _
  // Predicated region
  $region22: #{encoder_forward.9} parent=0 // pred_check
    _
  $region23: #{encoder_forward.9} parent=0 // pred_check_branch
    %171 = sbr.rel (0) target = $region25
  $region24: #{encoder_forward.9} parent=0 // pred_region
    _
  $region25: #{encoder_forward.9} parent=0 // pred_fallthru
    _

// kernel: encoder_forward.10
$region0: #{encoder_forward.10}
  #allocation0 [shape = 'u32[]', space=smem, size = 0x4, offset = 0x4, fixed_abs, tag = 'smem constant byte address 0x4 - core index']
  #allocation1 [shape = 'u32[144,128]{1,0:T(1,128)}', space=vmem, size = 0x12000, scoped, tag = 'internal scratch']
  %s0 = inlined_call_operand.vmem [shape: bf16[144,512], index: 0, kind: input, shape index: {}]
  %s1 = inlined_call_operand.vmem [shape: bf16[64,144], index: 1, kind: input, shape index: {}]
  %s2 = inlined_call_operand.vmem [shape: bf16[64,512], index: 2, kind: output, shape index: {}]
  %s3 = sld [smem:[#allocation0]]
  $region18: #{encoder_forward.10} parent=0
    _
  %s5 = ssub.s32 1, %s3
  %s6 = scalar_select 0, %s5, %s3
  // Predicated region
  $region2: #{encoder_forward.10} parent=0 // pred_check
    _
  $region3: #{encoder_forward.10} parent=0 // pred_check_branch
    %8 = sbr.rel (0) target = $region5
  $region4: #{encoder_forward.10} parent=0 // pred_region
    _
  $region5: #{encoder_forward.10} parent=0 // pred_fallthru
    _
  // Predicated region
  $region6: #{encoder_forward.10} parent=0 // pred_check
    _
  $region7: #{encoder_forward.10} parent=0 // pred_check_branch
    %10 = sbr.rel (0) target = $region9
  $region8: #{encoder_forward.10} parent=0 // pred_region
    _
  $region9: #{encoder_forward.10} parent=0 // pred_fallthru
    _
  %v12 = vld [vmem:[%s1] sm:$0xff]
  %v13 = vld [vmem:[%s1 + $0x8] sm:$0xff]
  %v14 = vld [vmem:[%s1 + $0x10] sm:$0xff]
  %v15 = vld [vmem:[%s1 + $0x18] sm:$0xff]
  %v16 = vld [vmem:[%s1 + $0x20] sm:$0xff]
  %v17 = vld [vmem:[%s1 + $0x28] sm:$0xff]
  %v18 = vld [vmem:[%s1 + $0x30] sm:$0xff]
  %v19 = vld [vmem:[%s1 + $0x38] sm:$0xff]
  %v20 = vld [vmem:[%s0] sm:$0xff]
  %v21 = vld [vmem:[%s0 + $0x8] sm:$0xff]
  %v22 = vld [vmem:[%s0 + $0x10] sm:$0xff]
  %v23 = vld [vmem:[%s0 + $0x18] sm:$0xff]
  %v24 = vld [vmem:[%s0 + $0x20] sm:$0xff]
  %v25 = vld [vmem:[%s0 + $0x28] sm:$0xff]
  %v26 = vld [vmem:[%s0 + $0x30] sm:$0xff]
  %v27 = vld [vmem:[%s0 + $0x38] sm:$0xff]
  %v28 = vld [vmem:[%s0 + $0x40] sm:$0xff]
  %v29 = vld [vmem:[%s0 + $0x48] sm:$0xff]
  %v30 = vld [vmem:[%s0 + $0x50] sm:$0xff]
  %v31 = vld [vmem:[%s0 + $0x58] sm:$0xff]
  %v32 = vld [vmem:[%s0 + $0x60] sm:$0xff]
  %v33 = vld [vmem:[%s0 + $0x68] sm:$0xff]
  %v34 = vld [vmem:[%s0 + $0x70] sm:$0xff]
  %v35 = vld [vmem:[%s0 + $0x78] sm:$0xff]
  %v36 = vld [vmem:[%s0 + $0x80] sm:$0xff]
  %v37 = vld [vmem:[%s0 + $0x88] sm:$0xff]
  %v38 = vld [vmem:[%s0 + $0x90] sm:$0xff]
  %v39 = vld [vmem:[%s0 + $0x98] sm:$0xff]
  %v40 = vld [vmem:[%s0 + $0xa0] sm:$0xff]
  %v41 = vld [vmem:[%s0 + $0xa8] sm:$0xff]
  %v42 = vld [vmem:[%s0 + $0xb0] sm:$0xff]
  %v43 = vld [vmem:[%s0 + $0xb8] sm:$0xff]
  %v44 = vld [vmem:[%s0 + $0xc0] sm:$0xff]
  %v45 = vld [vmem:[%s0 + $0xc8] sm:$0xff]
  %v46 = vld [vmem:[%s0 + $0xd0] sm:$0xff]
  %v47 = vld [vmem:[%s0 + $0xd8] sm:$0xff]
  %v48 = vld [vmem:[%s0 + $0xe0] sm:$0xff]
  %v49 = vld [vmem:[%s0 + $0xe8] sm:$0xff]
  %v50 = vld [vmem:[%s0 + $0xf0] sm:$0xff]
  %v51 = vld [vmem:[%s0 + $0xf8] sm:$0xff]
  %v52 = vld [vmem:[%s0 + $0x100] sm:$0xff]
  %v53 = vld [vmem:[%s0 + $0x108] sm:$0xff]
  %v54 = vld [vmem:[%s0 + $0x110] sm:$0xff]
  %v55 = vld [vmem:[%s0 + $0x118] sm:$0xff]
  %v64 = vunpack.c.l.b16 %v12
  %v65 = vunpack.c.h.b16 %v12
  %v66 = vunpack.c.l.b16 %v13
  %v67 = vunpack.c.h.b16 %v13
  %v68 = vunpack.c.l.b16 %v14
  %v69 = vunpack.c.h.b16 %v14
  %v70 = vunpack.c.l.b16 %v15
  %v71 = vunpack.c.h.b16 %v15
  %v72 = vunpack.c.l.b16 %v16
  %v73 = vunpack.c.h.b16 %v16
  %v74 = vunpack.c.l.b16 %v17
  %v75 = vunpack.c.h.b16 %v17
  %v76 = vunpack.c.l.b16 %v18
  %v77 = vunpack.c.h.b16 %v18
  %v78 = vunpack.c.l.b16 %v19
  %v79 = vunpack.c.h.b16 %v19
  %v80 = vpack.c.b16 %v66, %v64
  %v81 = vpack.c.b16 %v67, %v65
  %v82 = vpack.c.b16 %v70, %v68
  %v83 = vpack.c.b16 %v71, %v69
  %v84 = vpack.c.b16 %v74, %v72
  %v85 = vpack.c.b16 %v75, %v73
  %v86 = vpack.c.b16 %v78, %v76
  %v87 = vpack.c.b16 %v79, %v77
  %v128 = vunpack.c.l.b16 %v20
  %v129 = vunpack.c.h.b16 %v20
  %v130 = vunpack.c.l.b16 %v21
  %v131 = vunpack.c.h.b16 %v21
  %v132 = vunpack.c.l.b16 %v22
  %v133 = vunpack.c.h.b16 %v22
  %v134 = vunpack.c.l.b16 %v23
  %v135 = vunpack.c.h.b16 %v23
  %v136 = vunpack.c.l.b16 %v24
  %v137 = vunpack.c.h.b16 %v24
  %v138 = vunpack.c.l.b16 %v25
  %v139 = vunpack.c.h.b16 %v25
  %v140 = vunpack.c.l.b16 %v26
  %v141 = vunpack.c.h.b16 %v26
  %v142 = vunpack.c.l.b16 %v27
  %v143 = vunpack.c.h.b16 %v27
  %v144 = vunpack.c.l.b16 %v28
  %v145 = vunpack.c.h.b16 %v28
  %v146 = vunpack.c.l.b16 %v29
  %v147 = vunpack.c.h.b16 %v29
  %v148 = vunpack.c.l.b16 %v30
  %v149 = vunpack.c.h.b16 %v30
  %v150 = vunpack.c.l.b16 %v31
  %v151 = vunpack.c.h.b16 %v31
  %v152 = vunpack.c.l.b16 %v32
  %v153 = vunpack.c.h.b16 %v32
  %v154 = vunpack.c.l.b16 %v33
  %v155 = vunpack.c.h.b16 %v33
  %v156 = vunpack.c.l.b16 %v34
  %v157 = vunpack.c.h.b16 %v34
  %v158 = vunpack.c.l.b16 %v35
  %v159 = vunpack.c.h.b16 %v35
  %v160 = vunpack.c.l.b16 %v36
  %v161 = vunpack.c.h.b16 %v36
  %v162 = vunpack.c.l.b16 %v37
  %v163 = vunpack.c.h.b16 %v37
  %v164 = vunpack.c.l.b16 %v38
  %v165 = vunpack.c.h.b16 %v38
  %v166 = vunpack.c.l.b16 %v39
  %v167 = vunpack.c.h.b16 %v39
  %v168 = vunpack.c.l.b16 %v40
  %v169 = vunpack.c.h.b16 %v40
  %v170 = vunpack.c.l.b16 %v41
  %v171 = vunpack.c.h.b16 %v41
  %v172 = vunpack.c.l.b16 %v42
  %v173 = vunpack.c.h.b16 %v42
  %v174 = vunpack.c.l.b16 %v43
  %v175 = vunpack.c.h.b16 %v43
  %v176 = vunpack.c.l.b16 %v44
  %v177 = vunpack.c.h.b16 %v44
  %v178 = vunpack.c.l.b16 %v45
  %v179 = vunpack.c.h.b16 %v45
  %v180 = vunpack.c.l.b16 %v46
  %v181 = vunpack.c.h.b16 %v46
  %v182 = vunpack.c.l.b16 %v47
  %v183 = vunpack.c.h.b16 %v47
  %v184 = vunpack.c.l.b16 %v48
  %v185 = vunpack.c.h.b16 %v48
  %v186 = vunpack.c.l.b16 %v49
  %v187 = vunpack.c.h.b16 %v49
  %v188 = vunpack.c.l.b16 %v50
  %v189 = vunpack.c.h.b16 %v50
  %v190 = vunpack.c.l.b16 %v51
  %v191 = vunpack.c.h.b16 %v51
  %v192 = vunpack.c.l.b16 %v52
  %v193 = vunpack.c.h.b16 %v52
  %v194 = vunpack.c.l.b16 %v53
  %v195 = vunpack.c.h.b16 %v53
  %v196 = vunpack.c.l.b16 %v54
  %v197 = vunpack.c.h.b16 %v54
  %v198 = vunpack.c.l.b16 %v55
  %v199 = vunpack.c.h.b16 %v55
  %v200 = vpack.c.b16 %v132, %v128
  %v201 = vpack.c.b16 %v133, %v129
  %v202 = vpack.c.b16 %v134, %v130
  %v203 = vpack.c.b16 %v135, %v131
  %v204 = vpack.c.b16 %v140, %v136
  %v205 = vpack.c.b16 %v141, %v137
  %v206 = vpack.c.b16 %v142, %v138
  %v207 = vpack.c.b16 %v143, %v139
  %v208 = vpack.c.b16 %v148, %v144
  %v209 = vpack.c.b16 %v149, %v145
  %v210 = vpack.c.b16 %v150, %v146
  %v211 = vpack.c.b16 %v151, %v147
  %v212 = vpack.c.b16 %v156, %v152
  %v213 = vpack.c.b16 %v157, %v153
  %v214 = vpack.c.b16 %v158, %v154
  %v215 = vpack.c.b16 %v159, %v155
  %v216 = vpack.c.b16 %v164, %v160
  %v217 = vpack.c.b16 %v165, %v161
  %v218 = vpack.c.b16 %v166, %v162
  %v219 = vpack.c.b16 %v167, %v163
  %v220 = vpack.c.b16 %v172, %v168
  %v221 = vpack.c.b16 %v173, %v169
  %v222 = vpack.c.b16 %v174, %v170
  %v223 = vpack.c.b16 %v175, %v171
  %v224 = vpack.c.b16 %v180, %v176
  %v225 = vpack.c.b16 %v181, %v177
  %v226 = vpack.c.b16 %v182, %v178
  %v227 = vpack.c.b16 %v183, %v179
  %v228 = vpack.c.b16 %v188, %v184
  %v229 = vpack.c.b16 %v189, %v185
  %v230 = vpack.c.b16 %v190, %v186
  %v231 = vpack.c.b16 %v191, %v187
  %v232 = vpack.c.b16 %v196, %v192
  %v233 = vpack.c.b16 %v197, %v193
  %v234 = vpack.c.b16 %v198, %v194
  %v235 = vpack.c.b16 %v199, %v195
  %vm272 = vcmask 130048
  %v274 = vsel %vm272, %v81, 0
  %v277 = vsel %vm272, %v83, 0
  %v280 = vsel %vm272, %v85, 0
  %v283 = vsel %vm272, %v87, 0
  %285 = vmatprep.subr.bf16.mxu0 %v201
  %286 = vmatpush1.bf16.msra.mxu0 %v200
  %287 = vmatprep.subr.bf16.mxu0 %v205
  %288 = vmatpush1.bf16.msra.mxu0 %v204
  %289 = vmatprep.subr.bf16.mxu0 %v209
  %290 = vmatpush1.bf16.msra.mxu0 %v208
  %291 = vmatprep.subr.bf16.mxu0 %v213
  %292 = vmatpush1.bf16.msra.mxu0 %v212
  %293 = vmatprep.subr.bf16.mxu0 %v217
  %294 = vmatpush1.bf16.msra.mxu0 %v216
  %295 = vmatprep.subr.bf16.mxu0 %v221
  %296 = vmatpush1.bf16.msra.mxu0 %v220
  %297 = vmatprep.subr.bf16.mxu0 %v225
  %298 = vmatpush1.bf16.msra.mxu0 %v224
  %299 = vmatprep.subr.bf16.mxu0 %v229
  %300 = vmatpush1.bf16.msra.mxu0 %v228
  %301 = vmatprep.subr.bf16.mxu0 %v233
  %302 = vmatpush1.bf16.msra.mxu0 %v232
  %303 = vmatprep.subr.bf16.mxu0 0
  %304 = vmatpush1.bf16.msra.mxu0 0
  %305 = vmatprep.subr.bf16.mxu0 0
  %306 = vmatpush1.bf16.msra.mxu0 0
  %307 = vmatprep.subr.bf16.mxu0 0
  %308 = vmatpush1.bf16.msra.mxu0 0
  %309 = vmatprep.subr.bf16.mxu0 0
  %310 = vmatpush1.bf16.msra.mxu0 0
  %311 = vmatprep.subr.bf16.mxu0 0
  %312 = vmatpush1.bf16.msra.mxu0 0
  %313 = vmatprep.subr.bf16.mxu0 0
  %314 = vmatpush1.bf16.msra.mxu0 0
  %315 = vmatprep.subr.bf16.mxu0 0
  %316 = vmatpush1.bf16.msra.mxu0 0
  %317 = vmatprep.mubr.bf16.mxu0 %v274
  %318 = vmatmul.mubr.bf16.gmra.mrb[0].mxu0 %v80
  %v319 = vpop.f32.mrb[0].mxu0
  %v320 = vadd.f32 0.0, %v319
  %v321 = vpop.f32.mrb[0].mxu0
  %v322 = vadd.f32 0.0, %v321
  %v323 = vpop.f32.mrb[0].mxu0
  %v324 = vadd.f32 0.0, %v323
  %v325 = vpop.f32.mrb[0].mxu0
  %v326 = vadd.f32 0.0, %v325
  %327 = vmatprep.mubr.bf16.mxu0 %v277
  %328 = vmatmul.mubr.bf16.gmra.mrb[0].mxu0 %v82
  %v329 = vpop.f32.mrb[0].mxu0
  %v330 = vadd.f32 0.0, %v329
  %v331 = vpop.f32.mrb[0].mxu0
  %v332 = vadd.f32 0.0, %v331
  %v333 = vpop.f32.mrb[0].mxu0
  %v334 = vadd.f32 0.0, %v333
  %v335 = vpop.f32.mrb[0].mxu0
  %v336 = vadd.f32 0.0, %v335
  %337 = vmatprep.mubr.bf16.mxu0 %v280
  %338 = vmatmul.mubr.bf16.gmra.mrb[0].mxu0 %v84
  %v339 = vpop.f32.mrb[0].mxu0
  %v340 = vadd.f32 0.0, %v339
  %v341 = vpop.f32.mrb[0].mxu0
  %v342 = vadd.f32 0.0, %v341
  %v343 = vpop.f32.mrb[0].mxu0
  %v344 = vadd.f32 0.0, %v343
  %v345 = vpop.f32.mrb[0].mxu0
  %v346 = vadd.f32 0.0, %v345
  %347 = vmatprep.mubr.bf16.mxu0 %v283
  %348 = vmatmul.mubr.bf16.gmra.mrb[0].mxu0 %v86
  %v349 = vpop.f32.mrb[0].mxu0
  %v350 = vadd.f32 0.0, %v349
  %v351 = vpop.f32.mrb[0].mxu0
  %v352 = vadd.f32 0.0, %v351
  %v353 = vpop.f32.mrb[0].mxu0
  %v354 = vadd.f32 0.0, %v353
  %v355 = vpop.f32.mrb[0].mxu0
  %v356 = vadd.f32 0.0, %v355
  %357 = vdwg.mxu0
  %358 = vmatprep.subr.bf16.mxu0 %v203
  %359 = vmatpush1.bf16.msra.mxu0 %v202
  %360 = vmatprep.subr.bf16.mxu0 %v207
  %361 = vmatpush1.bf16.msra.mxu0 %v206
  %362 = vmatprep.subr.bf16.mxu0 %v211
  %363 = vmatpush1.bf16.msra.mxu0 %v210
  %364 = vmatprep.subr.bf16.mxu0 %v215
  %365 = vmatpush1.bf16.msra.mxu0 %v214
  %366 = vmatprep.subr.bf16.mxu0 %v219
  %367 = vmatpush1.bf16.msra.mxu0 %v218
  %368 = vmatprep.subr.bf16.mxu0 %v223
  %369 = vmatpush1.bf16.msra.mxu0 %v222
  %370 = vmatprep.subr.bf16.mxu0 %v227
  %371 = vmatpush1.bf16.msra.mxu0 %v226
  %372 = vmatprep.subr.bf16.mxu0 %v231
  %373 = vmatpush1.bf16.msra.mxu0 %v230
  %374 = vmatprep.subr.bf16.mxu0 %v235
  %375 = vmatpush1.bf16.msra.mxu0 %v234
  %376 = vmatprep.subr.bf16.mxu0 0
  %377 = vmatpush1.bf16.msra.mxu0 0
  %378 = vmatprep.subr.bf16.mxu0 0
  %379 = vmatpush1.bf16.msra.mxu0 0
  %380 = vmatprep.subr.bf16.mxu0 0
  %381 = vmatpush1.bf16.msra.mxu0 0
  %382 = vmatprep.subr.bf16.mxu0 0
  %383 = vmatpush1.bf16.msra.mxu0 0
  %384 = vmatprep.subr.bf16.mxu0 0
  %385 = vmatpush1.bf16.msra.mxu0 0
  %386 = vmatprep.subr.bf16.mxu0 0
  %387 = vmatpush1.bf16.msra.mxu0 0
  %388 = vmatprep.subr.bf16.mxu0 0
  %389 = vmatpush1.bf16.msra.mxu0 0
  %390 = vmatprep.mubr.bf16.mxu0 %v274
  %391 = vmatmul.mubr.bf16.gmra.mrb[0].mxu0 %v80
  %v392 = vpop.f32.mrb[0].mxu0
  %v393 = vadd.f32 0.0, %v392
  %v394 = vpop.f32.mrb[0].mxu0
  %v395 = vadd.f32 0.0, %v394
  %v396 = vpop.f32.mrb[0].mxu0
  %v397 = vadd.f32 0.0, %v396
  %v398 = vpop.f32.mrb[0].mxu0
  %v399 = vadd.f32 0.0, %v398
  %400 = vmatprep.mubr.bf16.mxu0 %v277
  %401 = vmatmul.mubr.bf16.gmra.mrb[0].mxu0 %v82
  %v402 = vpop.f32.mrb[0].mxu0
  %v403 = vadd.f32 0.0, %v402
  %v404 = vpop.f32.mrb[0].mxu0
  %v405 = vadd.f32 0.0, %v404
  %v406 = vpop.f32.mrb[0].mxu0
  %v407 = vadd.f32 0.0, %v406
  %v408 = vpop.f32.mrb[0].mxu0
  %v409 = vadd.f32 0.0, %v408
  %410 = vmatprep.mubr.bf16.mxu0 %v280
  %411 = vmatmul.mubr.bf16.gmra.mrb[0].mxu0 %v84
  %v412 = vpop.f32.mrb[0].mxu0
  %v413 = vadd.f32 0.0, %v412
  %v414 = vpop.f32.mrb[0].mxu0
  %v415 = vadd.f32 0.0, %v414
  %v416 = vpop.f32.mrb[0].mxu0
  %v417 = vadd.f32 0.0, %v416
  %v418 = vpop.f32.mrb[0].mxu0
  %v419 = vadd.f32 0.0, %v418
  %420 = vmatprep.mubr.bf16.mxu0 %v283
  %421 = vmatmul.mubr.bf16.gmra.mrb[0].mxu0 %v86
  %v422 = vpop.f32.mrb[0].mxu0
  %v423 = vadd.f32 0.0, %v422
  %v424 = vpop.f32.mrb[0].mxu0
  %v425 = vadd.f32 0.0, %v424
  %v426 = vpop.f32.mrb[0].mxu0
  %v427 = vadd.f32 0.0, %v426
  %v428 = vpop.f32.mrb[0].mxu0
  %v429 = vadd.f32 0.0, %v428
  %430 = vdwg.mxu0
  %v431 = vpack.c.bf16 %v324, %v320
  %v432 = vpack.c.bf16 %v326, %v322
  %v433 = vpack.c.bf16 %v397, %v393
  %v434 = vpack.c.bf16 %v399, %v395
  %v435 = vpack.c.bf16 %v334, %v330
  %v436 = vpack.c.bf16 %v336, %v332
  %v437 = vpack.c.bf16 %v407, %v403
  %v438 = vpack.c.bf16 %v409, %v405
  %v439 = vpack.c.bf16 %v344, %v340
  %v440 = vpack.c.bf16 %v346, %v342
  %v441 = vpack.c.bf16 %v417, %v413
  %v442 = vpack.c.bf16 %v419, %v415
  %v443 = vpack.c.bf16 %v354, %v350
  %v444 = vpack.c.bf16 %v356, %v352
  %v445 = vpack.c.bf16 %v427, %v423
  %v446 = vpack.c.bf16 %v429, %v425
  %v463 = vunpack.c.l.b16 %v431
  %v464 = vunpack.c.l.b16 %v432
  %v465 = vunpack.c.l.b16 %v433
  %v466 = vunpack.c.l.b16 %v434
  %v467 = vunpack.c.h.b16 %v431
  %v468 = vunpack.c.h.b16 %v432
  %v469 = vunpack.c.h.b16 %v433
  %v470 = vunpack.c.h.b16 %v434
  %v471 = vunpack.c.l.b16 %v435
  %v472 = vunpack.c.l.b16 %v436
  %v473 = vunpack.c.l.b16 %v437
  %v474 = vunpack.c.l.b16 %v438
  %v475 = vunpack.c.h.b16 %v435
  %v476 = vunpack.c.h.b16 %v436
  %v477 = vunpack.c.h.b16 %v437
  %v478 = vunpack.c.h.b16 %v438
  %v479 = vunpack.c.l.b16 %v439
  %v480 = vunpack.c.l.b16 %v440
  %v481 = vunpack.c.l.b16 %v441
  %v482 = vunpack.c.l.b16 %v442
  %v483 = vunpack.c.h.b16 %v439
  %v484 = vunpack.c.h.b16 %v440
  %v485 = vunpack.c.h.b16 %v441
  %v486 = vunpack.c.h.b16 %v442
  %v487 = vunpack.c.l.b16 %v443
  %v488 = vunpack.c.l.b16 %v444
  %v489 = vunpack.c.l.b16 %v445
  %v490 = vunpack.c.l.b16 %v446
  %v491 = vunpack.c.h.b16 %v443
  %v492 = vunpack.c.h.b16 %v444
  %v493 = vunpack.c.h.b16 %v445
  %v494 = vunpack.c.h.b16 %v446
  %v495 = vpack.c.b16 %v464, %v463
  %v496 = vpack.c.b16 %v466, %v465
  %v497 = vpack.c.b16 %v468, %v467
  %v498 = vpack.c.b16 %v470, %v469
  %v499 = vpack.c.b16 %v472, %v471
  %v500 = vpack.c.b16 %v474, %v473
  %v501 = vpack.c.b16 %v476, %v475
  %v502 = vpack.c.b16 %v478, %v477
  %v503 = vpack.c.b16 %v480, %v479
  %v504 = vpack.c.b16 %v482, %v481
  %v505 = vpack.c.b16 %v484, %v483
  %v506 = vpack.c.b16 %v486, %v485
  %v507 = vpack.c.b16 %v488, %v487
  %v508 = vpack.c.b16 %v490, %v489
  %v509 = vpack.c.b16 %v492, %v491
  %v510 = vpack.c.b16 %v494, %v493
  %527 = vst [vmem:[%s2] sm:$0xff] %v495
  %528 = vst [vmem:[%s2 + $0x8] sm:$0xff] %v496
  %529 = vst [vmem:[%s2 + $0x10] sm:$0xff] %v497
  %530 = vst [vmem:[%s2 + $0x18] sm:$0xff] %v498
  %531 = vst [vmem:[%s2 + $0x20] sm:$0xff] %v499
  %532 = vst [vmem:[%s2 + $0x28] sm:$0xff] %v500
  %533 = vst [vmem:[%s2 + $0x30] sm:$0xff] %v501
  %534 = vst [vmem:[%s2 + $0x38] sm:$0xff] %v502
  %535 = vst [vmem:[%s2 + $0x40] sm:$0xff] %v503
  %536 = vst [vmem:[%s2 + $0x48] sm:$0xff] %v504
  %537 = vst [vmem:[%s2 + $0x50] sm:$0xff] %v505
  %538 = vst [vmem:[%s2 + $0x58] sm:$0xff] %v506
  %539 = vst [vmem:[%s2 + $0x60] sm:$0xff] %v507
  %540 = vst [vmem:[%s2 + $0x68] sm:$0xff] %v508
  %541 = vst [vmem:[%s2 + $0x70] sm:$0xff] %v509
  %542 = vst [vmem:[%s2 + $0x78] sm:$0xff] %v510
  // Predicated region
  $region10: #{encoder_forward.10} parent=0 // pred_check
    _
  $region11: #{encoder_forward.10} parent=0 // pred_check_branch
    %544 = sbr.rel (0) target = $region13
  $region12: #{encoder_forward.10} parent=0 // pred_region
    _
  $region13: #{encoder_forward.10} parent=0 // pred_fallthru
    _
  // Predicated region
  $region14: #{encoder_forward.10} parent=0 // pred_check
    _
  $region15: #{encoder_forward.10} parent=0 // pred_check_branch
    %546 = sbr.rel (0) target = $region17
  $region16: #{encoder_forward.10} parent=0 // pred_region
    _
  $region17: #{encoder_forward.10} parent=0 // pred_fallthru
    _

// kernel: encoder_forward.11
$region0: #{encoder_forward.11}
  #allocation0 [shape = 'u32[]', space=smem, size = 0x4, offset = 0x4, fixed_abs, tag = 'smem constant byte address 0x4 - core index']
  #allocation1 [shape = 'u32[144,128]{1,0:T(1,128)}', space=vmem, size = 0x12000, scoped, tag = 'internal scratch']
  #allocation2 [shape = 'f32[16,128]{1,0:T(8,128)}', space=vmem, size = 0x2000, scoped, tag = 'scratch operand']
  #allocation3 [shape = 'f32[16,128]{1,0:T(8,128)}', space=vmem, size = 0x2000, scoped, tag = 'scratch operand']
  %s0 = inlined_call_operand.vmem [shape: bf16[64,512], index: 0, kind: input, shape index: {}]
  %s1 = inlined_call_operand.vmem [shape: bf16[64,144], index: 1, kind: input, shape index: {}]
  %s2 = inlined_call_operand.vmem [shape: f32[9,128], index: 2, kind: input, shape index: {}]
  %s3 = inlined_call_operand.vmem [shape: f32[64,1], index: 3, kind: input, shape index: {}]
  %s4 = inlined_call_operand.vmem [shape: f32[4,16,128], index: 4, kind: output, shape index: {}]
  %s5 = sld [smem:[#allocation0]]
  $region94: #{encoder_forward.11} parent=0
    _
  %s7 = ssub.s32 1, %s5
  %s8 = scalar_select 0, %s7, %s5
  $region1: #{encoder_forward.11} parent=0
    #allocation4 [shape = 'u8[32768]{0}', space=vmem, size = 0x8000, scoped, tag = 'input window, operand 0']
    loop: start=0, step=1, limit=6
    $region2: #{encoder_forward.11} parent=1 // loop_pre_header
      _
    $region3: #{encoder_forward.11} parent=1 // loop_header
      %s10 = sphi 0, %s14
      %p11 = scmp.ge.s32.totalorder %s10, 6
      %s20 = sphi 0, %s22
      %s23 = sphi 0, %s20
      %s24 = sphi 0, %s23
      %s40 = sphi 0, %s24
      %s44 = sphi 0, %s44
      %s46 = sphi 0, %s44
      %s47 = sphi 0, %s46
      %s61 = sphi 0, %s47
      %s65 = sphi 0, %s65
      %s67 = sphi 0, %s65
      %s68 = sphi 0, %s67
      %s82 = sphi 0, %s68
      %s86 = sphi 0, %s86
      %s88 = sphi 0, %s86
      %s89 = sphi 0, %s88
      %s103 = sphi 0, %s89
      %s109 = sphi 0, %s111
      %s112 = sphi 0, %s109
      %s113 = sphi 0, %s112
      %s129 = sphi 0, %s113
    $region4: #{encoder_forward.11} parent=1 // loop_header_branch
      %13 = sbr.rel (%p11) target = $region8
    $region5: #{encoder_forward.11} parent=1 // loop_body
      %s15 = ssub.s32 %s10, 1
      %s16 = ssub.s32 %s10, 2
      %s17 = sadd.s32 %s10, 1
      %s18 = ssub.s32 %s10, %s17
      %p19 = scmp.eq.s32.totalorder %s18, 0
      %s21 = sadd.s32 %s20, 1
      %s22 = scalar_select %p19, %s20, %s21
      %p25 = pneg %p19
      %p26 = scmp.eq.s32.totalorder %s10, 3
      %p27 = por %p25, %p26
      %p28 = scmp.ne.s32.totalorder %s20, %s23
      %p29 = scmp.eq.s32.totalorder %s10, 0
      %p30 = por %p28, %p29
      %p31 = scmp.ne.s32.totalorder %s20, %s23
      %p32 = scmp.eq.s32.totalorder %s15, 3
      %p33 = por %p31, %p32
      %p34 = scmp.ne.s32.totalorder %s23, %s24
      %p35 = scmp.eq.s32.totalorder %s15, 0
      %p36 = por %p34, %p35
      %p37 = scmp.ne.s32.totalorder %s23, %s24
      %p38 = scmp.eq.s32.totalorder %s16, 3
      %p39 = por %p37, %p38
      %p41 = scmp.ne.s32.totalorder %s24, %s40
      %p42 = scmp.eq.s32.totalorder %s16, 0
      %p43 = por %p41, %p42
      %s45 = sadd.s32 %s44, 1
      %p48 = scmp.eq.s32.totalorder %s10, 3
      %p49 = scmp.ne.s32.totalorder %s44, %s46
      %p50 = scmp.eq.s32.totalorder %s10, 0
      %p51 = por %p49, %p50
      %p52 = scmp.ne.s32.totalorder %s44, %s46
      %p53 = scmp.eq.s32.totalorder %s15, 3
      %p54 = por %p52, %p53
      %p55 = scmp.ne.s32.totalorder %s46, %s47
      %p56 = scmp.eq.s32.totalorder %s15, 0
      %p57 = por %p55, %p56
      %p58 = scmp.ne.s32.totalorder %s46, %s47
      %p59 = scmp.eq.s32.totalorder %s16, 3
      %p60 = por %p58, %p59
      %p62 = scmp.ne.s32.totalorder %s47, %s61
      %p63 = scmp.eq.s32.totalorder %s16, 0
      %p64 = por %p62, %p63
      %s66 = sadd.s32 %s65, 1
      %p69 = scmp.eq.s32.totalorder %s10, 3
      %p70 = scmp.ne.s32.totalorder %s65, %s67
      %p71 = scmp.eq.s32.totalorder %s10, 0
      %p72 = por %p70, %p71
      %p73 = scmp.ne.s32.totalorder %s65, %s67
      %p74 = scmp.eq.s32.totalorder %s15, 3
      %p75 = por %p73, %p74
      %p76 = scmp.ne.s32.totalorder %s67, %s68
      %p77 = scmp.eq.s32.totalorder %s15, 0
      %p78 = por %p76, %p77
      %p79 = scmp.ne.s32.totalorder %s67, %s68
      %p80 = scmp.eq.s32.totalorder %s16, 3
      %p81 = por %p79, %p80
      %p83 = scmp.ne.s32.totalorder %s68, %s82
      %p84 = scmp.eq.s32.totalorder %s16, 0
      %p85 = por %p83, %p84
      %s87 = sadd.s32 %s86, 1
      %p90 = scmp.eq.s32.totalorder %s10, 3
      %p91 = scmp.ne.s32.totalorder %s86, %s88
      %p92 = scmp.eq.s32.totalorder %s10, 0
      %p93 = por %p91, %p92
      %p94 = scmp.ne.s32.totalorder %s86, %s88
      %p95 = scmp.eq.s32.totalorder %s15, 3
      %p96 = por %p94, %p95
      %p97 = scmp.ne.s32.totalorder %s88, %s89
      %p98 = scmp.eq.s32.totalorder %s15, 0
      %p99 = por %p97, %p98
      %p100 = scmp.ne.s32.totalorder %s88, %s89
      %p101 = scmp.eq.s32.totalorder %s16, 3
      %p102 = por %p100, %p101
      %p104 = scmp.ne.s32.totalorder %s89, %s103
      %p105 = scmp.eq.s32.totalorder %s16, 0
      %p106 = por %p104, %p105
      %s107 = ssub.s32 %s10, %s17
      %p108 = scmp.eq.s32.totalorder %s107, 0
      %s110 = sadd.s32 %s109, 1
      %s111 = scalar_select %p108, %s109, %s110
      %p114 = pneg %p108
      %p115 = scmp.eq.s32.totalorder %s10, 3
      %p116 = por %p114, %p115
      %p117 = scmp.ne.s32.totalorder %s109, %s112
      %p118 = scmp.eq.s32.totalorder %s10, 0
      %p119 = por %p117, %p118
      %p120 = scmp.ne.s32.totalorder %s109, %s112
      %p121 = scmp.eq.s32.totalorder %s15, 3
      %p122 = por %p120, %p121
      %p123 = scmp.ne.s32.totalorder %s112, %s113
      %p124 = scmp.eq.s32.totalorder %s15, 0
      %p125 = por %p123, %p124
      %p126 = scmp.ne.s32.totalorder %s112, %s113
      %p127 = scmp.eq.s32.totalorder %s16, 3
      %p128 = por %p126, %p127
      %p130 = scmp.ne.s32.totalorder %s113, %s129
      %p131 = scmp.eq.s32.totalorder %s16, 0
      %p132 = por %p130, %p131
      %p133 = scmp.le.s32.totalorder 1, %s10
      %p134 = scmp.lt.s32.totalorder %s10, 5
      %p135 = pnand %p133, %p134
      %p136 = pneg %p135
      // Predicated region
      $region9: #{encoder_forward.11} parent=5 // pred_check
        _
      $region10: #{encoder_forward.11} parent=5 // pred_check_branch
        %138 = sbr.rel (%p135) target = $region12
      $region11: #{encoder_forward.11} parent=5 // pred_region
        %s139 = ssub.s32 %s10, 1
        // Predicated region
        $region13: #{encoder_forward.11} parent=11 // pred_check
          %p140 = pneg %p57
        $region14: #{encoder_forward.11} parent=11 // pred_check_branch
          %142 = sbr.rel (%p140) target = $region16
        $region15: #{encoder_forward.11} parent=11 // pred_region
          _
        $region16: #{encoder_forward.11} parent=11 // pred_fallthru
          _
        // Predicated region
        $region17: #{encoder_forward.11} parent=11 // pred_check
          %p143 = pneg %p78
        $region18: #{encoder_forward.11} parent=11 // pred_check_branch
          %145 = sbr.rel (%p143) target = $region20
        $region19: #{encoder_forward.11} parent=11 // pred_region
          _
        $region20: #{encoder_forward.11} parent=11 // pred_fallthru
          _
        // Predicated region
        $region21: #{encoder_forward.11} parent=11 // pred_check
          %p146 = pneg %p99
        $region22: #{encoder_forward.11} parent=11 // pred_check_branch
          %148 = sbr.rel (%p146) target = $region24
        $region23: #{encoder_forward.11} parent=11 // pred_region
          _
        $region24: #{encoder_forward.11} parent=11 // pred_fallthru
          _
      $region12: #{encoder_forward.11} parent=5 // pred_fallthru
        _
      %p149 = scmp.lt.s32.totalorder %s10, 4
      // Predicated region
      $region25: #{encoder_forward.11} parent=5 // pred_check
        %p150 = pneg %p149
      $region26: #{encoder_forward.11} parent=5 // pred_check_branch
        %152 = sbr.rel (%p150) target = $region28
      $region27: #{encoder_forward.11} parent=5 // pred_region
        // Predicated region
        $region29: #{encoder_forward.11} parent=27 // pred_check
          %p153 = pneg %p30
        $region30: #{encoder_forward.11} parent=27 // pred_check_branch
          %155 = sbr.rel (%p153) target = $region32
        $region31: #{encoder_forward.11} parent=27 // pred_region
          %s156 = sand.u32 %s20, 1
          %s157 = sand.u32 %s20, 1
          %s158 = smul.addr %s157, 32
          %s159 = scalar_lea.vmem [#allocation4], %s158
          %s160 = smul.addr %s10, 4
          %s161 = scalar_lea.vmem %s0, %s160
          // Predicated region
          $region33: #{encoder_forward.11} parent=31 // pred_check
            _
          $region34: #{encoder_forward.11} parent=31 // pred_check_branch
            %163 = sbr.rel (0) target = $region36
          $region35: #{encoder_forward.11} parent=31 // pred_region
            // Predicated region
            $region37: #{encoder_forward.11} parent=35 // pred_check
              _
            $region38: #{encoder_forward.11} parent=35 // pred_check_branch
              %165 = sbr.rel target = $region40
            $region39: #{encoder_forward.11} parent=35 // pred_region
              // Predicated region
              $region52: #{encoder_forward.11} parent=39 // pred_check
                _
              $region53: #{encoder_forward.11} parent=39 // pred_check_branch
                %194 = sbr.rel (0) target = $region55
              $region54: #{encoder_forward.11} parent=39 // pred_region
                loop: start=0, step=1, limit=1
                $region56: #{encoder_forward.11} parent=54 // loop_pre_header
                  _
                $region57: #{encoder_forward.11} parent=54 // loop_header
                  %s196 = sphi 0, %s200
                  %p197 = scmp.ge.s32.totalorder %s196, 1
                  %s201 = sphi %s161, %s161
                  %s202 = sphi %s159, %s159
                $region58: #{encoder_forward.11} parent=54 // loop_header_branch
                  %199 = sbr.rel (%p197) target = $region62
                $region59: #{encoder_forward.11} parent=54 // loop_body
                  _
                $region60: #{encoder_forward.11} parent=54 // loop_footer
                  %s200 = sadd.s32 1, %s196
                $region61: #{encoder_forward.11} parent=54 // loop_footer_branch
                  %195 = sbr.rel target = $region57
                $region62: #{encoder_forward.11} parent=54 // loop_exit
                  _
                loop: start=0, step=1, limit=1
                $region63: #{encoder_forward.11} parent=54 // loop_pre_header
                  _
                $region64: #{encoder_forward.11} parent=54 // loop_header
                  %s205 = sphi 0, %s209
                  %p206 = scmp.ge.s32.totalorder %s205, 1
                  %s210 = sphi %s161, %s161
                  %s211 = sphi %s159, %s159
                $region65: #{encoder_forward.11} parent=54 // loop_header_branch
                  %208 = sbr.rel (%p206) target = $region69
                $region66: #{encoder_forward.11} parent=54 // loop_body
                  %v212 = vld [vmem:[%s210] sm:$0xf]
                  %213 = vst [vmem:[%s211] sm:$0xf] %v212
                  %v214 = vld [vmem:[%s210 + $0x10] sm:$0xf]
                  %215 = vst [vmem:[%s211 + $0x4] sm:$0xf] %v214
                  %v216 = vld [vmem:[%s210 + $0x20] sm:$0xf]
                  %217 = vst [vmem:[%s211 + $0x8] sm:$0xf] %v216
                  %v218 = vld [vmem:[%s210 + $0x30] sm:$0xf]
                  %219 = vst [vmem:[%s211 + $0xc] sm:$0xf] %v218
                  %v220 = vld [vmem:[%s210 + $0x40] sm:$0xf]
                  %221 = vst [vmem:[%s211 + $0x10] sm:$0xf] %v220
                  %v222 = vld [vmem:[%s210 + $0x50] sm:$0xf]
                  %223 = vst [vmem:[%s211 + $0x14] sm:$0xf] %v222
                  %v224 = vld [vmem:[%s210 + $0x60] sm:$0xf]
                  %225 = vst [vmem:[%s211 + $0x18] sm:$0xf] %v224
                  %v226 = vld [vmem:[%s210 + $0x70] sm:$0xf]
                  %227 = vst [vmem:[%s211 + $0x1c] sm:$0xf] %v226
                $region67: #{encoder_forward.11} parent=54 // loop_footer
                  %s209 = sadd.s32 1, %s205
                $region68: #{encoder_forward.11} parent=54 // loop_footer_branch
                  %204 = sbr.rel target = $region64
                $region69: #{encoder_forward.11} parent=54 // loop_exit
                  _
              $region55: #{encoder_forward.11} parent=39 // pred_fallthru
                _
            $region40: #{encoder_forward.11} parent=35 // pred_fallthru
              _
            // Predicated region
            $region41: #{encoder_forward.11} parent=35 // pred_check
              _
            $region42: #{encoder_forward.11} parent=35 // pred_check_branch
              %167 = sbr.rel (0) target = $region44
            $region43: #{encoder_forward.11} parent=35 // pred_region
              loop: start=0, step=1, limit=1
              $region45: #{encoder_forward.11} parent=43 // loop_pre_header
                _
              $region46: #{encoder_forward.11} parent=43 // loop_header
                %s170 = sphi 0, %s174
                %p171 = scmp.ge.s32.totalorder %s170, 1
                %s175 = sphi %s161, %s161
                %s176 = sphi %s159, %s159
              $region47: #{encoder_forward.11} parent=43 // loop_header_branch
                %173 = sbr.rel (%p171) target = $region51
              $region48: #{encoder_forward.11} parent=43 // loop_body
                %v177 = vld [vmem:[%s175] sm:$0xf]
                %178 = vst [vmem:[%s176] sm:$0xf] %v177
                %v179 = vld [vmem:[%s175 + $0x10] sm:$0xf]
                %180 = vst [vmem:[%s176 + $0x4] sm:$0xf] %v179
                %v181 = vld [vmem:[%s175 + $0x20] sm:$0xf]
                %182 = vst [vmem:[%s176 + $0x8] sm:$0xf] %v181
                %v183 = vld [vmem:[%s175 + $0x30] sm:$0xf]
                %184 = vst [vmem:[%s176 + $0xc] sm:$0xf] %v183
                %v185 = vld [vmem:[%s175 + $0x40] sm:$0xf]
                %186 = vst [vmem:[%s176 + $0x10] sm:$0xf] %v185
                %v187 = vld [vmem:[%s175 + $0x50] sm:$0xf]
                %188 = vst [vmem:[%s176 + $0x14] sm:$0xf] %v187
                %v189 = vld [vmem:[%s175 + $0x60] sm:$0xf]
                %190 = vst [vmem:[%s176 + $0x18] sm:$0xf] %v189
                %v191 = vld [vmem:[%s175 + $0x70] sm:$0xf]
                %192 = vst [vmem:[%s176 + $0x1c] sm:$0xf] %v191
              $region49: #{encoder_forward.11} parent=43 // loop_footer
                %s174 = sadd.s32 1, %s170
              $region50: #{encoder_forward.11} parent=43 // loop_footer_branch
                %169 = sbr.rel target = $region46
              $region51: #{encoder_forward.11} parent=43 // loop_exit
                _
            $region44: #{encoder_forward.11} parent=35 // pred_fallthru
              _
          $region36: #{encoder_forward.11} parent=31 // pred_fallthru
            _
          %228 = vnop
        $region32: #{encoder_forward.11} parent=27 // pred_fallthru
          _
      $region28: #{encoder_forward.11} parent=5 // pred_fallthru
        _
      %p229 = scmp.le.s32.totalorder 1, %s10
      %p230 = scmp.lt.s32.totalorder %s10, 5
      %p231 = pnand %p229, %p230
      %p232 = pneg %p231
      // Predicated region
      $region70: #{encoder_forward.11} parent=5 // pred_check
        _
      $region71: #{encoder_forward.11} parent=5 // pred_check_branch
        %234 = sbr.rel (%p231) target = $region73
      $region72: #{encoder_forward.11} parent=5 // pred_region
        %s235 = ssub.s32 %s10, 1
        %s236 = sand.u32 %s23, 1
        %s237 = sand.u32 %s23, 1
        %s238 = smul.addr %s237, 32
        %s239 = scalar_lea.vmem [#allocation4], %s238
        // Predicated region
        $region74: #{encoder_forward.11} parent=72 // pred_check
          %p240 = pneg %p36
        $region75: #{encoder_forward.11} parent=72 // pred_check_branch
          %242 = sbr.rel (%p240) target = $region77
        $region76: #{encoder_forward.11} parent=72 // pred_region
          _
        $region77: #{encoder_forward.11} parent=72 // pred_fallthru
          _
        %s243 = sand.u32 %s23, 1
        %s244 = sand.u32 %s23, 1
        %s245 = smul.addr %s244, 32
        %s246 = scalar_lea.vmem [#allocation4], %s245
        %p247 = pneg %p36
        %p248 = pneg %p33
        %p249 = pneg %p57
        %p250 = pneg %p54
        %p251 = pneg %p78
        %p252 = pneg %p75
        %p253 = pneg %p99
        %p254 = pneg %p96
        %p255 = pneg %p125
        %p256 = pneg %p122
        %p257 = scmp.lt.s32.totalorder %s15, 3
        %s258 = scalar_select %p257, %s15, 3
        %s259 = smul.addr %s258, 2
        %s260 = smul.addr %s259, 8
        %s261 = scalar_lea.vmem %s4, %s260
        %p262 = scmp.lt.s32.totalorder %s15, 3
        %s263 = scalar_select %p262, %s15, 3
        %s264 = smul.addr %s263, 2
        %s265 = smul.addr %s264, 8
        %s266 = scalar_lea.vmem %s4, %s265
        %p268 = scmp.eq.s32.totalorder %s15, 0
        // Predicated region
        $region78: #{encoder_forward.11} parent=72 // pred_check
          %p269 = pneg %p268
        $region79: #{encoder_forward.11} parent=72 // pred_check_branch
          %271 = sbr.rel (%p269) target = $region81
        $region80: #{encoder_forward.11} parent=72 // pred_region
          %272 = vst [vmem:[#allocation2] sm:$0xff] 0.0
          %273 = vst [vmem:[#allocation2 + $0x8] sm:$0xff] 0.0
          %274 = vst [vmem:[#allocation3] sm:$0xff] 0.0
          %275 = vst [vmem:[#allocation3 + $0x8] sm:$0xff] 0.0
        $region81: #{encoder_forward.11} parent=72 // pred_fallthru
          _
        %v276 = vld [vmem:[#allocation2] sm:$0xff]
        %v277 = vld [vmem:[#allocation2 + $0x8] sm:$0xff]
        %278 = vrot.lane.b32.xlu0 %v276, 5
        %v279 = vpop.permute.xlu0 %278
        %280 = vrot.lane.b32.xlu0 %v277, 5
        %v281 = vpop.permute.xlu0 %280
        %v282 = vld [vmem:[%s2] sm:$0x1]
        %v283 = vlaneseq
        %v284 = vshrl.u32 %v283, 7
        %v285 = vsub.s32 0, %v284
        %v286 = vrot.slane %v282, %v285
        %v287 = vmul.f32 %v279, %v286
        %v288 = vmul.f32 %v281, %v286
        %289 = vrot.lane.b32.xlu0 %v276, 4
        %v290 = vpop.permute.xlu0 %289
        %291 = vrot.lane.b32.xlu0 %v277, 4
        %v292 = vpop.permute.xlu0 %291
        %v293 = vld [vmem:[%s2 + $0x1] sm:$0x1]
        %v294 = vlaneseq
        %v295 = vshrl.u32 %v294, 7
        %v296 = vsub.s32 0, %v295
        %v297 = vrot.slane %v293, %v296
        %v298 = vmul.f32 %v290, %v297
        %v299 = vmul.f32 %v292, %v297
        %300 = vrot.lane.b32.xlu0 %v276, 3
        %v301 = vpop.permute.xlu0 %300
        %302 = vrot.lane.b32.xlu0 %v277, 3
        %v303 = vpop.permute.xlu0 %302
        %v304 = vld [vmem:[%s2 + $0x2] sm:$0x1]
        %v305 = vlaneseq
        %v306 = vshrl.u32 %v305, 7
        %v307 = vsub.s32 0, %v306
        %v308 = vrot.slane %v304, %v307
        %v309 = vmul.f32 %v301, %v308
        %v310 = vmul.f32 %v303, %v308
        %311 = vrot.lane.b32.xlu0 %v276, 1
        %v312 = vpop.permute.xlu0 %311
        %313 = vrot.lane.b32.xlu0 %v277, 1
        %v314 = vpop.permute.xlu0 %313
        %v315 = vld [vmem:[%s2 + $0x3] sm:$0x1]
        %v316 = vlaneseq
        %v317 = vshrl.u32 %v316, 7
        %v318 = vsub.s32 0, %v317
        %v319 = vrot.slane %v315, %v318
        %v320 = vmul.f32 %v312, %v319
        %v321 = vmul.f32 %v314, %v319
        %v322 = vld [vmem:[%s2 + $0x4] sm:$0x1]
        %v323 = vlaneseq
        %v324 = vshrl.u32 %v323, 7
        %v325 = vsub.s32 0, %v324
        %v326 = vrot.slane %v322, %v325
        %v327 = vmul.f32 %v276, %v326
        %v328 = vmul.f32 %v277, %v326
        %329 = vrot.lane.b32.xlu0 %v276, 127
        %v330 = vpop.permute.xlu0 %329
        %331 = vrot.lane.b32.xlu0 %v277, 127
        %v332 = vpop.permute.xlu0 %331
        %v333 = vld [vmem:[%s2 + $0x5] sm:$0x1]
        %v334 = vlaneseq
        %v335 = vshrl.u32 %v334, 7
        %v336 = vsub.s32 0, %v335
        %v337 = vrot.slane %v333, %v336
        %v338 = vmul.f32 %v330, %v337
        %v339 = vmul.f32 %v332, %v337
        %340 = vrot.lane.b32.xlu0 %v276, 125
        %v341 = vpop.permute.xlu0 %340
        %342 = vrot.lane.b32.xlu0 %v277, 125
        %v343 = vpop.permute.xlu0 %342
        %v344 = vld [vmem:[%s2 + $0x6] sm:$0x1]
        %v345 = vlaneseq
        %v346 = vshrl.u32 %v345, 7
        %v347 = vsub.s32 0, %v346
        %v348 = vrot.slane %v344, %v347
        %v349 = vmul.f32 %v341, %v348
        %v350 = vmul.f32 %v343, %v348
        %351 = vrot.lane.b32.xlu0 %v276, 124
        %v352 = vpop.permute.xlu0 %351
        %353 = vrot.lane.b32.xlu0 %v277, 124
        %v354 = vpop.permute.xlu0 %353
        %v355 = vld [vmem:[%s2 + $0x7] sm:$0x1]
        %v356 = vlaneseq
        %v357 = vshrl.u32 %v356, 7
        %v358 = vsub.s32 0, %v357
        %v359 = vrot.slane %v355, %v358
        %v360 = vmul.f32 %v352, %v359
        %v361 = vmul.f32 %v354, %v359
        %362 = vrot.lane.b32.xlu0 %v276, 123
        %v363 = vpop.permute.xlu0 %362
        %364 = vrot.lane.b32.xlu0 %v277, 123
        %v365 = vpop.permute.xlu0 %364
        %v366 = vld [vmem:[%s2 + $0x8] sm:$0x1]
        %v367 = vlaneseq
        %v368 = vshrl.u32 %v367, 7
        %v369 = vsub.s32 0, %v368
        %v370 = vrot.slane %v366, %v369
        %v371 = vmul.f32 %v363, %v370
        %v372 = vmul.f32 %v365, %v370
        %v373 = vpack.c.bf16 %v288, %v287
        %v374 = vpack.c.bf16 %v299, %v298
        %v375 = vpack.c.bf16 %v310, %v309
        %v376 = vpack.c.bf16 %v321, %v320
        %v377 = vpack.c.bf16 %v328, %v327
        %v378 = vpack.c.bf16 %v339, %v338
        %v379 = vpack.c.bf16 %v350, %v349
        %v380 = vpack.c.bf16 %v361, %v360
        %v381 = vpack.c.bf16 %v372, %v371
        %v382 = vld [vmem:[%s239] sm:$0xf]
        %v383 = vld [vmem:[%s239 + $0x4] sm:$0xf]
        %v384 = vld [vmem:[%s239 + $0x8] sm:$0xf]
        %v385 = vld [vmem:[%s239 + $0xc] sm:$0xf]
        %v386 = vld [vmem:[%s239 + $0x10] sm:$0xf]
        %v387 = vld [vmem:[%s239 + $0x14] sm:$0xf]
        %v388 = vld [vmem:[%s239 + $0x18] sm:$0xf]
        %v389 = vld [vmem:[%s239 + $0x1c] sm:$0xf]
        %v390 = vunpack.c.l.bf16 %v382
        %v391 = vunpack.c.l.bf16 %v383
        %v392 = vunpack.c.l.bf16 %v384
        %v393 = vunpack.c.l.bf16 %v385
        %v394 = vunpack.c.l.bf16 %v386
        %v395 = vunpack.c.l.bf16 %v387
        %v396 = vunpack.c.l.bf16 %v388
        %v397 = vunpack.c.l.bf16 %v389
        %v398 = vld [vmem:[%s3] sm:$0xff]
        %v399 = vld [vmem:[%s3 + $0x8] sm:$0xff]
        %v400 = vld [vmem:[%s3 + $0x10] sm:$0xff]
        %v401 = vld [vmem:[%s3 + $0x18] sm:$0xff]
        %v402 = vld [vmem:[%s3 + $0x20] sm:$0xff]
        %v403 = vld [vmem:[%s3 + $0x28] sm:$0xff]
        %v404 = vld [vmem:[%s3 + $0x30] sm:$0xff]
        %v405 = vld [vmem:[%s3 + $0x38] sm:$0xff]
        %407 = vset.pattern.permute.xlu0 0
        %408 = vperm.xlu0 %407, %v398
        %v409 = vpop.permute.xlu0 %408
        %412 = vset.pattern.permute.xlu0 0
        %413 = vperm.xlu0 %412, %v399
        %v414 = vpop.permute.xlu0 %413
        %417 = vset.pattern.permute.xlu0 0
        %418 = vperm.xlu0 %417, %v400
        %v419 = vpop.permute.xlu0 %418
        %422 = vset.pattern.permute.xlu0 0
        %423 = vperm.xlu0 %422, %v401
        %v424 = vpop.permute.xlu0 %423
        %427 = vset.pattern.permute.xlu0 0
        %428 = vperm.xlu0 %427, %v402
        %v429 = vpop.permute.xlu0 %428
        %432 = vset.pattern.permute.xlu0 0
        %433 = vperm.xlu0 %432, %v403
        %v434 = vpop.permute.xlu0 %433
        %437 = vset.pattern.permute.xlu0 0
        %438 = vperm.xlu0 %437, %v404
        %v439 = vpop.permute.xlu0 %438
        %442 = vset.pattern.permute.xlu0 0
        %443 = vperm.xlu0 %442, %v405
        %v444 = vpop.permute.xlu0 %443
        %v446 = vadd.f32 %v390, %v409
        %v447 = vadd.f32 %v391, %v414
        %v448 = vadd.f32 %v392, %v419
        %v449 = vadd.f32 %v393, %v424
        %v450 = vadd.f32 %v394, %v429
        %v451 = vadd.f32 %v395, %v434
        %v452 = vadd.f32 %v396, %v439
        %v453 = vadd.f32 %v397, %v444
        %v454 = vld [vmem:[%s1] sm:$0xff]
        %v455 = vld [vmem:[%s1 + $0x8] sm:$0xff]
        %v456 = vld [vmem:[%s1 + $0x10] sm:$0xff]
        %v457 = vld [vmem:[%s1 + $0x18] sm:$0xff]
        %v458 = vld [vmem:[%s1 + $0x20] sm:$0xff]
        %v459 = vld [vmem:[%s1 + $0x28] sm:$0xff]
        %v460 = vld [vmem:[%s1 + $0x30] sm:$0xff]
        %v461 = vld [vmem:[%s1 + $0x38] sm:$0xff]
        %v470 = vunpack.c.l.b16 %v454
        %v471 = vunpack.c.h.b16 %v454
        %v472 = vunpack.c.l.b16 %v455
        %v473 = vunpack.c.h.b16 %v455
        %v474 = vunpack.c.l.b16 %v456
        %v475 = vunpack.c.h.b16 %v456
        %v476 = vunpack.c.l.b16 %v457
        %v477 = vunpack.c.h.b16 %v457
        %v478 = vunpack.c.l.b16 %v458
        %v479 = vunpack.c.h.b16 %v458
        %v480 = vunpack.c.l.b16 %v459
        %v481 = vunpack.c.h.b16 %v459
        %v482 = vunpack.c.l.b16 %v460
        %v483 = vunpack.c.h.b16 %v460
        %v484 = vunpack.c.l.b16 %v461
        %v485 = vunpack.c.h.b16 %v461
        %v486 = vpack.c.b16 %v472, %v470
        %v487 = vpack.c.b16 %v473, %v471
        %v488 = vpack.c.b16 %v476, %v474
        %v489 = vpack.c.b16 %v477, %v475
        %v490 = vpack.c.b16 %v480, %v478
        %v491 = vpack.c.b16 %v481, %v479
        %v492 = vpack.c.b16 %v484, %v482
        %v493 = vpack.c.b16 %v485, %v483
        %vm498 = vcmask 130048
        %v500 = vsel %vm498, %v487, 0
        %v503 = vsel %vm498, %v489, 0
        %v506 = vsel %vm498, %v491, 0
        %v509 = vsel %vm498, %v493, 0
        %511 = vmatprep.subr.bf16.mxu0 0
        %512 = vmatpush1.bf16.msra.mxu0 %v373
        %513 = vmatprep.subr.bf16.mxu0 0
        %514 = vmatpush1.bf16.msra.mxu0 %v374
        %515 = vmatprep.subr.bf16.mxu0 0
        %516 = vmatpush1.bf16.msra.mxu0 %v375
        %517 = vmatprep.subr.bf16.mxu0 0
        %518 = vmatpush1.bf16.msra.mxu0 %v376
        %519 = vmatprep.subr.bf16.mxu0 0
        %520 = vmatpush1.bf16.msra.mxu0 %v377
        %521 = vmatprep.subr.bf16.mxu0 0
        %522 = vmatpush1.bf16.msra.mxu0 %v378
        %523 = vmatprep.subr.bf16.mxu0 0
        %524 = vmatpush1.bf16.msra.mxu0 %v379
        %525 = vmatprep.subr.bf16.mxu0 0
        %526 = vmatpush1.bf16.msra.mxu0 %v380
        %527 = vmatprep.subr.bf16.mxu0 0
        %528 = vmatpush1.bf16.msra.mxu0 %v381
        %529 = vmatprep.subr.bf16.mxu0 0
        %530 = vmatpush1.bf16.msra.mxu0 0
        %531 = vmatprep.subr.bf16.mxu0 0
        %532 = vmatpush1.bf16.msra.mxu0 0
        %533 = vmatprep.subr.bf16.mxu0 0
        %534 = vmatpush1.bf16.msra.mxu0 0
        %535 = vmatprep.subr.bf16.mxu0 0
        %536 = vmatpush1.bf16.msra.mxu0 0
        %537 = vmatprep.subr.bf16.mxu0 0
        %538 = vmatpush1.bf16.msra.mxu0 0
        %539 = vmatprep.subr.bf16.mxu0 0
        %540 = vmatpush1.bf16.msra.mxu0 0
        %541 = vmatprep.subr.bf16.mxu0 0
        %542 = vmatpush1.bf16.msra.mxu0 0
        %543 = vmatprep.mubr.bf16.mxu0 %v500
        %544 = vmatmul.mubr.bf16.gmra.mrb[0].mxu0 %v486
        %v545 = vpop.f32.mrb[0].mxu0
        %v546 = vadd.f32 0.0, %v545
        %v547 = vpop.f32.mrb[0].mxu0
        %v548 = vpop.f32.mrb[0].mxu0
        %v549 = vadd.f32 0.0, %v548
        %v550 = vpop.f32.mrb[0].mxu0
        %551 = vmatprep.mubr.bf16.mxu0 %v503
        %552 = vmatmul.mubr.bf16.gmra.mrb[0].mxu0 %v488
        %v553 = vpop.f32.mrb[0].mxu0
        %v554 = vadd.f32 0.0, %v553
        %v555 = vpop.f32.mrb[0].mxu0
        %v556 = vpop.f32.mrb[0].mxu0
        %v557 = vadd.f32 0.0, %v556
        %v558 = vpop.f32.mrb[0].mxu0
        %559 = vmatprep.mubr.bf16.mxu0 %v506
        %560 = vmatmul.mubr.bf16.gmra.mrb[0].mxu0 %v490
        %v561 = vpop.f32.mrb[0].mxu0
        %v562 = vadd.f32 0.0, %v561
        %v563 = vpop.f32.mrb[0].mxu0
        %v564 = vpop.f32.mrb[0].mxu0
        %v565 = vadd.f32 0.0, %v564
        %v566 = vpop.f32.mrb[0].mxu0
        %567 = vmatprep.mubr.bf16.mxu0 %v509
        %568 = vmatmul.mubr.bf16.gmra.mrb[0].mxu0 %v492
        %v569 = vpop.f32.mrb[0].mxu0
        %v570 = vadd.f32 0.0, %v569
        %v571 = vpop.f32.mrb[0].mxu0
        %v572 = vpop.f32.mrb[0].mxu0
        %v573 = vadd.f32 0.0, %v572
        %v574 = vpop.f32.mrb[0].mxu0
        %575 = vdwg.mxu0
        %v576 = vadd.f32 %v446, %v546
        %v577 = vadd.f32 %v447, %v549
        %v578 = vadd.f32 %v448, %v554
        %v579 = vadd.f32 %v449, %v557
        %v580 = vadd.f32 %v450, %v562
        %v581 = vadd.f32 %v451, %v565
        %v582 = vadd.f32 %v452, %v570
        %v583 = vadd.f32 %v453, %v573
        %v584 = vxor.u32 %v576, 2147483648
        %v585 = vxor.u32 %v577, 2147483648
        %v586 = vmul.f32 %v584, 1.442695
        %v587 = vpow.pop %v586
        %v588 = vmul.f32 %v585, 1.442695
        %v589 = vpow.pop %v588
        %v590 = vadd.f32 %v587, 1.0
        %v591 = vadd.f32 %v589, 1.0
        %v592 = vrcp.pop %v590
        %v593 = vmul.f32 1.0, %v592
        %v594 = vrcp.pop %v591
        %v595 = vmul.f32 1.0, %v594
        %v596 = vxor.u32 %v578, 2147483648
        %v597 = vxor.u32 %v579, 2147483648
        %v598 = vmul.f32 %v596, 1.442695
        %v599 = vpow.pop %v598
        %v600 = vmul.f32 %v597, 1.442695
        %v601 = vpow.pop %v600
        %v602 = vadd.f32 %v599, 1.0
        %v603 = vadd.f32 %v601, 1.0
        %v604 = vrcp.pop %v602
        %v605 = vmul.f32 1.0, %v604
        %v606 = vrcp.pop %v603
        %v607 = vmul.f32 1.0, %v606
        %v608 = vxor.u32 %v580, 2147483648
        %v609 = vxor.u32 %v581, 2147483648
        %v610 = vmul.f32 %v608, 1.442695
        %v611 = vpow.pop %v610
        %v612 = vmul.f32 %v609, 1.442695
        %v613 = vpow.pop %v612
        %v614 = vadd.f32 %v611, 1.0
        %v615 = vadd.f32 %v613, 1.0
        %v616 = vrcp.pop %v614
        %v617 = vmul.f32 1.0, %v616
        %v618 = vrcp.pop %v615
        %v619 = vmul.f32 1.0, %v618
        %v620 = vtanh.pop %v582
        %v621 = vtanh.pop %v583
        %v622 = vld [vmem:[#allocation3] sm:$0xff]
        %v623 = vld [vmem:[#allocation3 + $0x8] sm:$0xff]
        %v624 = vmul.f32 %v605, %v622
        %v625 = vmul.f32 %v607, %v623
        %v626 = vmul.f32 %v593, %v620
        %v627 = vmul.f32 %v595, %v621
        %v628 = vadd.f32 %v624, %v626
        %v629 = vadd.f32 %v625, %v627
        %v630 = vtanh.pop %v628
        %v631 = vtanh.pop %v629
        %v632 = vmul.f32 %v617, %v630
        %v633 = vmul.f32 %v619, %v631
        %634 = vst [vmem:[#allocation3] sm:$0xff] %v628
        %635 = vst [vmem:[#allocation3 + $0x8] sm:$0xff] %v629
        %636 = vst [vmem:[#allocation2] sm:$0xff] %v632
        %637 = vst [vmem:[#allocation2 + $0x8] sm:$0xff] %v633
        %638 = vst [vmem:[%s266] sm:$0xff] %v632
        %639 = vst [vmem:[%s266 + $0x8] sm:$0xff] %v633
        %p640 = scmp.lt.s32.totalorder %s15, 3
        %s641 = scalar_select %p640, %s15, 3
        %s642 = smul.addr %s641, 2
        %s643 = smul.addr %s642, 8
        %s644 = scalar_lea.vmem %s4, %s643
        // Predicated region
        $region82: #{encoder_forward.11} parent=72 // pred_check
          %p645 = pneg %p122
        $region83: #{encoder_forward.11} parent=72 // pred_check_branch
          %647 = sbr.rel (%p645) target = $region85
        $region84: #{encoder_forward.11} parent=72 // pred_region
          _
        $region85: #{encoder_forward.11} parent=72 // pred_fallthru
          _
      $region73: #{encoder_forward.11} parent=5 // pred_fallthru
        _
      %p648 = scmp.le.s32.totalorder 2, %s10
      // Predicated region
      $region86: #{encoder_forward.11} parent=5 // pred_check
        %p649 = pneg %p648
      $region87: #{encoder_forward.11} parent=5 // pred_check_branch
        %651 = sbr.rel (%p649) target = $region89
      $region88: #{encoder_forward.11} parent=5 // pred_region
        %s652 = ssub.s32 %s10, 2
        // Predicated region
        $region90: #{encoder_forward.11} parent=88 // pred_check
          %p653 = pneg %p128
        $region91: #{encoder_forward.11} parent=88 // pred_check_branch
          %655 = sbr.rel (%p653) target = $region93
        $region92: #{encoder_forward.11} parent=88 // pred_region
          %p656 = scmp.lt.s32.totalorder %s16, 3
          %s657 = scalar_select %p656, %s16, 3
          %s658 = smul.addr %s657, 2
          %s659 = smul.addr %s658, 8
          %s660 = scalar_lea.vmem %s4, %s659
        $region93: #{encoder_forward.11} parent=88 // pred_fallthru
          _
      $region89: #{encoder_forward.11} parent=5 // pred_fallthru
        _
    $region6: #{encoder_forward.11} parent=1 // loop_footer
      %s14 = sadd.s32 1, %s10
    $region7: #{encoder_forward.11} parent=1 // loop_footer_branch
      %9 = sbr.rel target = $region3
    $region8: #{encoder_forward.11} parent=1 // loop_exit
      _

</llo_original>
